<compile_context>
chip_gen: v7x
topology: tpu7x:2x2x1
jax: 0.10.0
libtpu: 0.0.40
codegen_flags: <defaults>
</compile_context>

<pallas_src>
import numpy as np
import jax
import jax.numpy as jnp
from jax.experimental import pallas as pl
from jax.experimental.pallas import tpu as pltpu

THRESHOLDS = [0.48970118, 0.34025221, 0.17722994, 0.32379692, 0.1723266,
              0.33252252, 0.26682911, 0.26431107, 0.2005045, 0.22233647,
              0.50928269, 0.35311607]


def _make_damic_kernel(T, B, H):
    """Kernel closure over the static problem sizes."""

    def kernel(c_ref, thr_ref, wi0_ref, b0_ref,
               bwh0_ref, bW1_ref, bb1_ref,       # self.rnn   (backward in time)
               fwh0_ref, fW1_ref, fb1_ref,       # self.rnn_r (forward  in time)
               how_ref, hob_ref,                 # self.h2o (Linear 2H -> D)
               out_ref,
               pre_ref,                          # (T*B, 8H) VMEM scratch: layer-0 precompute
               h_ref):                           # (T*B, 2H) VMEM scratch: cat(bwd, fwd) hidden
        f32 = jnp.float32
        H4 = 4 * H

        # ---- 1. threshold + hoisted layer-0 input-to-hidden matmul (both dirs) ----
        # NOTE: g-gate columns of wi0/b0 (and of wh0/W1/b1 below) were pre-doubled
        # in the wrapper so tanh(g) can be recovered from the single sigmoid pass.
        r = (c_ref[...] > thr_ref[...]).astype(f32)                               # (T*B, D)
        pre_ref[...] = jnp.dot(r, wi0_ref[...], preferred_element_type=f32) + b0_ref[...]

        # ---- 2. hoist loop-invariant recurrent weights / biases --------------------
        bwh0 = bwh0_ref[...]; bW1 = bW1_ref[...]; bb1 = bb1_ref[...]
        fwh0 = fwh0_ref[...]; fW1 = fW1_ref[...]; fb1 = fb1_ref[...]

        def cell(gates, c):
            # `gates` arrives with the g-quarter preactivation already doubled, so a
            # single sigmoid over (B, 4H) covers all four gates; tanh(g) is then
            # exactly 2*sigmoid(2g) - 1 (one VPU fma on H lanes).  One EUP op per
            # cell instead of two shortens the EUP serialization on the critical path.
            sg = jax.nn.sigmoid(gates)
            i = sg[:, 0 * H:1 * H]
            f = sg[:, 1 * H:2 * H]
            g = 2.0 * sg[:, 2 * H:3 * H] - 1.0
            o = sg[:, 3 * H:4 * H]
            c_new = f * c + i * g
            return o * jnp.tanh(c_new), c_new

        zeros = jnp.zeros((B, H), f32)
        hb0 = cb0 = hb1 = cb1 = zeros      # backward-in-time LSTM state (self.rnn)
        hf0 = cf0 = hf1 = cf1 = zeros      # forward-in-time  LSTM state (self.rnn_r)

        # ---- 3. single fully-unrolled time loop, both directions interleaved -------
        for i in range(T):
            tb = T - 1 - i                 # backward direction time index
            tf = i                         # forward  direction time index

            # backward direction, layer 0 then fused layer 1
            g = (pre_ref[tb * B:(tb + 1) * B, 0:H4]
                 + jnp.dot(hb0, bwh0, preferred_element_type=f32))
            hb0, cb0 = cell(g, cb0)
            g = (jnp.dot(jnp.concatenate([hb0, hb1], axis=1), bW1,
                         preferred_element_type=f32) + bb1)
            hb1, cb1 = cell(g, cb1)
            h_ref[tb * B:(tb + 1) * B, 0:H] = hb1          # static-slice store, off critical path

            # forward direction, layer 0 then fused layer 1
            g = (pre_ref[tf * B:(tf + 1) * B, H4:2 * H4]
                 + jnp.dot(hf0, fwh0, preferred_element_type=f32))
            hf0, cf0 = cell(g, cf0)
            g = (jnp.dot(jnp.concatenate([hf0, hf1], axis=1), fW1,
                         preferred_element_type=f32) + fb1)
            hf1, cf1 = cell(g, cf1)
            h_ref[tf * B:(tf + 1) * B, H:2 * H] = hf1

        # ---- 4. batched output head: cat(bwd, fwd) @ W + b, sigmoid, single store --
        hcat = h_ref[...]                                                   # (T*B, 2H)
        logits = jnp.dot(hcat, how_ref[...], preferred_element_type=f32) + hob_ref[...]
        out_ref[...] = jax.nn.sigmoid(logits)

    return kernel


def _double_g_cols(w):
    """Scale the g-gate quarter (columns 2H:3H of a (..., 4H) tensor) by 2.

    Lets the kernel recover tanh(g) from a single full-width sigmoid via
    tanh(x) = 2*sigmoid(2x) - 1 with no in-kernel masked multiply.
    """
    Hq = w.shape[-1] // 4
    return jnp.concatenate(
        [w[..., :2 * Hq], 2.0 * w[..., 2 * Hq:3 * Hq], w[..., 3 * Hq:]], axis=-1)


def damic_forward(c_out, params):
    """c_out: (B, T, D) float32 output of the base model (pre-threshold)."""
    B, T, D = c_out.shape
    H = params["b_wh0"].shape[0]

    # time-major, flattened to (T*B, D); row index = t*B + b
    c_tm = jnp.transpose(c_out, (1, 0, 2)).reshape(T * B, D)

    # Wrapper-side weight plumbing (all one-time, off the kernel critical path):
    #  * both directions' layer-0 input weights/biases folded into one hoisted matmul,
    #  * layer-1 input & recurrent weights fused into a single (2H, 4H) matrix,
    #  * g-gate columns doubled everywhere (see _double_g_cols),
    #  * both halves of the h2o weight stacked into one (2H, D) matrix.
    wi0 = jnp.concatenate([_double_g_cols(params["b_wi0"]),
                           _double_g_cols(params["f_wi0"])], axis=1)          # (D, 8H)
    b0 = jnp.concatenate([_double_g_cols(params["b_b0"]),
                          _double_g_cols(params["f_b0"])], axis=1)            # (1, 8H)
    bwh0 = _double_g_cols(params["b_wh0"])                                    # (H, 4H)
    fwh0 = _double_g_cols(params["f_wh0"])                                    # (H, 4H)
    bW1 = _double_g_cols(jnp.concatenate([params["b_wi1"], params["b_wh1"]],
                                         axis=0))                            # (2H, 4H)
    fW1 = _double_g_cols(jnp.concatenate([params["f_wi1"], params["f_wh1"]],
                                         axis=0))                            # (2H, 4H)
    bb1 = _double_g_cols(params["b_b1"])                                      # (1, 4H)
    fb1 = _double_g_cols(params["f_b1"])                                      # (1, 4H)
    ho_w = jnp.concatenate([params["ho_w_b"], params["ho_w_f"]], axis=0)      # (2H, D)

    in_arrays = [
        c_tm, params["thr"], wi0, b0,
        bwh0, bW1, bb1,
        fwh0, fW1, fb1,
        ho_w, params["ho_b"],
    ]

    def full(shape):
        nd = len(shape)
        return pl.BlockSpec(shape, lambda i, _nd=nd: (0,) * _nd)

    out = pl.pallas_call(
        _make_damic_kernel(T, B, H),
        out_shape=jax.ShapeDtypeStruct((T * B, D), jnp.float32),
        grid_spec=pltpu.PrefetchScalarGridSpec(
            num_scalar_prefetch=0,
            grid=(1,),
            in_specs=[full(a.shape) for a in in_arrays],
            out_specs=full((T * B, D)),
            scratch_shapes=[
                pltpu.VMEM((T * B, 8 * H), jnp.float32),   # layer-0 precompute
                pltpu.VMEM((T * B, 2 * H), jnp.float32),   # cat(bwd, fwd) hidden states
            ],
        ),
        compiler_params=pltpu.CompilerParams(dimension_semantics=("arbitrary",)),
    )(*in_arrays)

    return jnp.transpose(out.reshape(T, B, D), (1, 0, 2))  # back to (B, T, D)


def init_params(key, D, H, Dout):
    """Deterministic PyTorch-style uniform init (no checkpoint available)."""
    bound = 1.0 / (H ** 0.5)
    keys = iter(jax.random.split(key, 64))

    def u(shape, b):
        return jax.random.uniform(next(keys), shape, jnp.float32, -b, b)

    def lstm_layer(in_dim):
        wi = u((4 * H, in_dim), bound)
        wh = u((4 * H, H), bound)
        bih = u((4 * H,), bound)
        bhh = u((4 * H,), bound)
        return wi.T, wh.T, (bih + bhh)[None, :]   # transposed weights, combined bias

    b_wi0, b_wh0, b_b0 = lstm_layer(D)
    b_wi1, b_wh1, b_b1 = lstm_layer(H)
    f_wi0, f_wh0, f_b0 = lstm_layer(D)
    f_wi1, f_wh1, f_b1 = lstm_layer(H)

    hb = 1.0 / ((2 * H) ** 0.5)
    ho_w = u((Dout, 2 * H), hb).T          # (2H, Dout)
    ho_b = u((Dout,), hb)[None, :]

    return dict(
        thr=jnp.asarray(THRESHOLDS, jnp.float32)[None, :D],
        b_wi0=b_wi0, b_wh0=b_wh0, b_b0=b_b0, b_wi1=b_wi1, b_wh1=b_wh1, b_b1=b_b1,
        f_wi0=f_wi0, f_wh0=f_wh0, f_b0=f_b0, f_wi1=f_wi1, f_wh1=f_wh1, f_b1=f_b1,
        ho_w_b=ho_w[:H], ho_w_f=ho_w[H:], ho_b=ho_b,
    )


def damic_reference(c_out, params):
    """Pure-JAX reference of the same forward pass (for correctness check)."""
    B, T, D = c_out.shape
    H = params["b_wh0"].shape[0]
    r_in = (c_out > params["thr"]).astype(jnp.float32)

    def cell(x, h, c, wi, wh, b):
        g = x @ wi + h @ wh + b
        i = jax.nn.sigmoid(g[:, :H]); f = jax.nn.sigmoid(g[:, H:2 * H])
        gg = jnp.tanh(g[:, 2 * H:3 * H]); o = jax.nn.sigmoid(g[:, 3 * H:])
        c2 = f * c + i * gg
        return o * jnp.tanh(c2), c2

    zeros = jnp.zeros((B, H), jnp.float32)
    rbwd = [None] * T
    h0 = c0 = h1 = c1 = zeros
    for i in range(T):
        t = T - 1 - i
        h0, c0 = cell(r_in[:, t], h0, c0, params["b_wi0"], params["b_wh0"], params["b_b0"])
        h1, c1 = cell(h0, h1, c1, params["b_wi1"], params["b_wh1"], params["b_b1"])
        rbwd[t] = h1
    outs = []
    h0 = c0 = h1 = c1 = zeros
    for i in range(T):
        h0, c0 = cell(r_in[:, i], h0, c0, params["f_wi0"], params["f_wh0"], params["f_b0"])
        h1, c1 = cell(h0, h1, c1, params["f_wi1"], params["f_wh1"], params["f_b1"])
        logits = rbwd[i] @ params["ho_w_b"] + h1 @ params["ho_w_f"] + params["ho_b"]
        outs.append(jax.nn.sigmoid(logits))
    return jnp.stack(outs, axis=1)


if __name__ == "__main__":
    B, T, sent_len = 2, 8, 16     # dialogue would be (B, T, sent_len) int tokens
    D = 12                        # output_size (matches the 12 thresholds)
    H = 32                        # hidden_size

    key = jax.random.PRNGKey(0)
    kp, kc = jax.random.split(key)
    params = init_params(kp, D, H, D)

    # Stand-in for the untranslatable pretrained base model's per-utterance output.
    c_out = jax.random.uniform(kc, (B, T, D), jnp.float32)

    preds = damic_forward(c_out, params)
    preds = jax.block_until_ready(preds)
    assert preds.shape == (B, T, D)

    ref = damic_reference(c_out, params)
    np.testing.assert_allclose(np.asarray(preds), np.asarray(ref), rtol=1e-3, atol=1e-3)

    print("KERNEL_OK")
</pallas_src>

<mosaic_0001>
module attributes {stable_mosaic.version = 11 : i64} {
  func.func @kernel(%arg0: i32, %arg1: memref<16x12xf32, #tpu.memory_space<vmem>>, %arg2: memref<1x12xf32, #tpu.memory_space<vmem>>, %arg3: memref<12x256xf32, #tpu.memory_space<vmem>>, %arg4: memref<1x256xf32, #tpu.memory_space<vmem>>, %arg5: memref<32x128xf32, #tpu.memory_space<vmem>>, %arg6: memref<64x128xf32, #tpu.memory_space<vmem>>, %arg7: memref<1x128xf32, #tpu.memory_space<vmem>>, %arg8: memref<32x128xf32, #tpu.memory_space<vmem>>, %arg9: memref<64x128xf32, #tpu.memory_space<vmem>>, %arg10: memref<1x128xf32, #tpu.memory_space<vmem>>, %arg11: memref<64x12xf32, #tpu.memory_space<vmem>>, %arg12: memref<1x12xf32, #tpu.memory_space<vmem>>, %arg13: memref<16x12xf32, #tpu.memory_space<vmem>>, %arg14: memref<16x256xf32, #tpu.memory_space<vmem>>, %arg15: memref<16x64xf32, #tpu.memory_space<vmem>>) attributes {dimension_semantics = [#tpu.dimension_semantics<arbitrary>], iteration_bounds = array<i64: 1>, scalar_prefetch = 0 : i64, scratch_operands = 2 : i64, tpu.core_type = #tpu.core_type<tc>, window_params = [{pipeline_mode = #tpu.pipeline_mode<synchronous>, transform_indices = @transform_0, window_bounds = array<i64: 16, 12>}, {pipeline_mode = #tpu.pipeline_mode<synchronous>, transform_indices = @transform_1, window_bounds = array<i64: 1, 12>}, {pipeline_mode = #tpu.pipeline_mode<synchronous>, transform_indices = @transform_2, window_bounds = array<i64: 12, 256>}, {pipeline_mode = #tpu.pipeline_mode<synchronous>, transform_indices = @transform_3, window_bounds = array<i64: 1, 256>}, {pipeline_mode = #tpu.pipeline_mode<synchronous>, transform_indices = @transform_4, window_bounds = array<i64: 32, 128>}, {pipeline_mode = #tpu.pipeline_mode<synchronous>, transform_indices = @transform_5, window_bounds = array<i64: 64, 128>}, {pipeline_mode = #tpu.pipeline_mode<synchronous>, transform_indices = @transform_6, window_bounds = array<i64: 1, 128>}, {pipeline_mode = #tpu.pipeline_mode<synchronous>, transform_indices = @transform_7, window_bounds = array<i64: 32, 128>}, {pipeline_mode = #tpu.pipeline_mode<synchronous>, transform_indices = @transform_8, window_bounds = array<i64: 64, 128>}, {pipeline_mode = #tpu.pipeline_mode<synchronous>, transform_indices = @transform_9, window_bounds = array<i64: 1, 128>}, {pipeline_mode = #tpu.pipeline_mode<synchronous>, transform_indices = @transform_10, window_bounds = array<i64: 64, 12>}, {pipeline_mode = #tpu.pipeline_mode<synchronous>, transform_indices = @transform_11, window_bounds = array<i64: 1, 12>}, {pipeline_mode = #tpu.pipeline_mode<synchronous>, transform_indices = @transform_12, window_bounds = array<i64: 16, 12>}]} {
    %c0 = arith.constant 0 : index
    %c0_0 = arith.constant 0 : index
    %0 = vector.load %arg1[%c0, %c0_0] : memref<16x12xf32, #tpu.memory_space<vmem>>, vector<16x12xf32>
    %c0_1 = arith.constant 0 : index
    %c0_2 = arith.constant 0 : index
    %1 = vector.load %arg2[%c0_1, %c0_2] : memref<1x12xf32, #tpu.memory_space<vmem>>, vector<1x12xf32>
    %2 = vector.broadcast %1 : vector<1x12xf32> to vector<16x12xf32>
    %3 = arith.cmpf ogt, %0, %2 : vector<16x12xf32>
    %4 = arith.extui %3 : vector<16x12xi1> to vector<16x12xi32>
    %5 = arith.sitofp %4 : vector<16x12xi32> to vector<16x12xf32>
    %c0_3 = arith.constant 0 : index
    %c0_4 = arith.constant 0 : index
    %6 = vector.load %arg3[%c0_3, %c0_4] : memref<12x256xf32, #tpu.memory_space<vmem>>, vector<12x256xf32>
    %cst = arith.constant dense<0.000000e+00> : vector<16x256xf32>
    %7 = tpu.matmul %5, %6, %cst {dimension_numbers = #tpu.dot_dimension_numbers<[1], [0], [0], [1], [0, 0, 1, 1], [], []>} : vector<16x12xf32>, vector<12x256xf32>, vector<16x256xf32> -> vector<16x256xf32>
    %c0_5 = arith.constant 0 : index
    %c0_6 = arith.constant 0 : index
    %8 = vector.load %arg4[%c0_5, %c0_6] : memref<1x256xf32, #tpu.memory_space<vmem>>, vector<1x256xf32>
    %9 = vector.broadcast %8 : vector<1x256xf32> to vector<16x256xf32>
    %10 = arith.addf %7, %9 : vector<16x256xf32>
    %c0_7 = arith.constant 0 : index
    %c0_8 = arith.constant 0 : index
    %11 = vector.load %arg14[%c0_7, %c0_8] : memref<16x256xf32, #tpu.memory_space<vmem>>, vector<16x256xf32>
    tpu.vector_store %arg14[%c0_7, %c0_8], %10 {strides = array<i32>} : memref<16x256xf32, #tpu.memory_space<vmem>>, vector<16x256xf32>,
    %c0_9 = arith.constant 0 : index
    %c0_10 = arith.constant 0 : index
    %12 = vector.load %arg5[%c0_9, %c0_10] : memref<32x128xf32, #tpu.memory_space<vmem>>, vector<32x128xf32>
    %c0_11 = arith.constant 0 : index
    %c0_12 = arith.constant 0 : index
    %13 = vector.load %arg6[%c0_11, %c0_12] : memref<64x128xf32, #tpu.memory_space<vmem>>, vector<64x128xf32>
    %c0_13 = arith.constant 0 : index
    %c0_14 = arith.constant 0 : index
    %14 = vector.load %arg7[%c0_13, %c0_14] : memref<1x128xf32, #tpu.memory_space<vmem>>, vector<1x128xf32>
    %c0_15 = arith.constant 0 : index
    %c0_16 = arith.constant 0 : index
    %15 = vector.load %arg8[%c0_15, %c0_16] : memref<32x128xf32, #tpu.memory_space<vmem>>, vector<32x128xf32>
    %c0_17 = arith.constant 0 : index
    %c0_18 = arith.constant 0 : index
    %16 = vector.load %arg9[%c0_17, %c0_18] : memref<64x128xf32, #tpu.memory_space<vmem>>, vector<64x128xf32>
    %c0_19 = arith.constant 0 : index
    %c0_20 = arith.constant 0 : index
    %17 = vector.load %arg10[%c0_19, %c0_20] : memref<1x128xf32, #tpu.memory_space<vmem>>, vector<1x128xf32>
    %cst_21 = arith.constant 0.000000e+00 : f32
    %18 = vector.broadcast %cst_21 : f32 to vector<2x32xf32>
    %c14 = arith.constant 14 : index
    %c0_22 = arith.constant 0 : index
    %19 = vector.load %arg14[%c14, %c0_22] : memref<16x256xf32, #tpu.memory_space<vmem>>, vector<2x128xf32>
    %cst_23 = arith.constant dense<0.000000e+00> : vector<2x128xf32>
    %20 = tpu.matmul %18, %12, %cst_23 {dimension_numbers = #tpu.dot_dimension_numbers<[1], [0], [0], [1], [0, 0, 1, 1], [], []>} : vector<2x32xf32>, vector<32x128xf32>, vector<2x128xf32> -> vector<2x128xf32>
    %21 = arith.addf %19, %20 : vector<2x128xf32>
    %22 = arith.negf %21 : vector<2x128xf32>
    %23 = math.exp %22 : vector<2x128xf32>
    %cst_24 = arith.constant 1.000000e+00 : f32
    %24 = vector.broadcast %cst_24 : f32 to vector<2x128xf32>
    %25 = arith.addf %24, %23 : vector<2x128xf32>
    %26 = arith.divf %24, %25 : vector<2x128xf32>
    %27 = vector.extract_strided_slice %26 {offsets = [0, 0], sizes = [2, 32], strides = [1, 1]} : vector<2x128xf32> to vector<2x32xf32>
    %28 = vector.extract_strided_slice %26 {offsets = [0, 32], sizes = [2, 32], strides = [1, 1]} : vector<2x128xf32> to vector<2x32xf32>
    %29 = vector.extract_strided_slice %26 {offsets = [0, 64], sizes = [2, 32], strides = [1, 1]} : vector<2x128xf32> to vector<2x32xf32>
    %cst_25 = arith.constant 2.000000e+00 : f32
    %30 = vector.broadcast %cst_25 : f32 to vector<2x32xf32>
    %31 = arith.mulf %30, %29 : vector<2x32xf32>
    %cst_26 = arith.constant 1.000000e+00 : f32
    %32 = vector.broadcast %cst_26 : f32 to vector<2x32xf32>
    %33 = arith.subf %31, %32 : vector<2x32xf32>
    %34 = vector.extract_strided_slice %26 {offsets = [0, 96], sizes = [2, 32], strides = [1, 1]} : vector<2x128xf32> to vector<2x32xf32>
    %35 = arith.mulf %28, %18 : vector<2x32xf32>
    %36 = arith.mulf %27, %33 : vector<2x32xf32>
    %37 = arith.addf %35, %36 : vector<2x32xf32>
    %38 = math.tanh %37 : vector<2x32xf32>
    %39 = arith.mulf %34, %38 : vector<2x32xf32>
    %40 = tpu.concatenate %39, %18 in 1 : vector<2x32xf32>, vector<2x32xf32> -> vector<2x64xf32>
    %cst_27 = arith.constant dense<0.000000e+00> : vector<2x128xf32>
    %41 = tpu.matmul %40, %13, %cst_27 {dimension_numbers = #tpu.dot_dimension_numbers<[1], [0], [0], [1], [0, 0, 1, 1], [], []>} : vector<2x64xf32>, vector<64x128xf32>, vector<2x128xf32> -> vector<2x128xf32>
    %42 = vector.broadcast %14 : vector<1x128xf32> to vector<2x128xf32>
    %43 = arith.addf %41, %42 : vector<2x128xf32>
    %44 = arith.negf %43 : vector<2x128xf32>
    %45 = math.exp %44 : vector<2x128xf32>
    %cst_28 = arith.constant 1.000000e+00 : f32
    %46 = vector.broadcast %cst_28 : f32 to vector<2x128xf32>
    %47 = arith.addf %46, %45 : vector<2x128xf32>
    %48 = arith.divf %46, %47 : vector<2x128xf32>
    %49 = vector.extract_strided_slice %48 {offsets = [0, 0], sizes = [2, 32], strides = [1, 1]} : vector<2x128xf32> to vector<2x32xf32>
    %50 = vector.extract_strided_slice %48 {offsets = [0, 32], sizes = [2, 32], strides = [1, 1]} : vector<2x128xf32> to vector<2x32xf32>
    %51 = vector.extract_strided_slice %48 {offsets = [0, 64], sizes = [2, 32], strides = [1, 1]} : vector<2x128xf32> to vector<2x32xf32>
    %cst_29 = arith.constant 2.000000e+00 : f32
    %52 = vector.broadcast %cst_29 : f32 to vector<2x32xf32>
    %53 = arith.mulf %52, %51 : vector<2x32xf32>
    %cst_30 = arith.constant 1.000000e+00 : f32
    %54 = vector.broadcast %cst_30 : f32 to vector<2x32xf32>
    %55 = arith.subf %53, %54 : vector<2x32xf32>
    %56 = vector.extract_strided_slice %48 {offsets = [0, 96], sizes = [2, 32], strides = [1, 1]} : vector<2x128xf32> to vector<2x32xf32>
    %57 = arith.mulf %50, %18 : vector<2x32xf32>
    %58 = arith.mulf %49, %55 : vector<2x32xf32>
    %59 = arith.addf %57, %58 : vector<2x32xf32>
    %60 = math.tanh %59 : vector<2x32xf32>
    %61 = arith.mulf %56, %60 : vector<2x32xf32>
    %c14_31 = arith.constant 14 : index
    %c0_32 = arith.constant 0 : index
    %62 = vector.load %arg15[%c14_31, %c0_32] : memref<16x64xf32, #tpu.memory_space<vmem>>, vector<2x32xf32>
    tpu.vector_store %arg15[%c14_31, %c0_32], %61 {strides = array<i32>} : memref<16x64xf32, #tpu.memory_space<vmem>>, vector<2x32xf32>,
    %c0_33 = arith.constant 0 : index
    %c128 = arith.constant 128 : index
    %63 = vector.load %arg14[%c0_33, %c128] : memref<16x256xf32, #tpu.memory_space<vmem>>, vector<2x128xf32>
    %cst_34 = arith.constant dense<0.000000e+00> : vector<2x128xf32>
    %64 = tpu.matmul %18, %15, %cst_34 {dimension_numbers = #tpu.dot_dimension_numbers<[1], [0], [0], [1], [0, 0, 1, 1], [], []>} : vector<2x32xf32>, vector<32x128xf32>, vector<2x128xf32> -> vector<2x128xf32>
    %65 = arith.addf %63, %64 : vector<2x128xf32>
    %66 = arith.negf %65 : vector<2x128xf32>
    %67 = math.exp %66 : vector<2x128xf32>
    %cst_35 = arith.constant 1.000000e+00 : f32
    %68 = vector.broadcast %cst_35 : f32 to vector<2x128xf32>
    %69 = arith.addf %68, %67 : vector<2x128xf32>
    %70 = arith.divf %68, %69 : vector<2x128xf32>
    %71 = vector.extract_strided_slice %70 {offsets = [0, 0], sizes = [2, 32], strides = [1, 1]} : vector<2x128xf32> to vector<2x32xf32>
    %72 = vector.extract_strided_slice %70 {offsets = [0, 32], sizes = [2, 32], strides = [1, 1]} : vector<2x128xf32> to vector<2x32xf32>
    %73 = vector.extract_strided_slice %70 {offsets = [0, 64], sizes = [2, 32], strides = [1, 1]} : vector<2x128xf32> to vector<2x32xf32>
    %cst_36 = arith.constant 2.000000e+00 : f32
    %74 = vector.broadcast %cst_36 : f32 to vector<2x32xf32>
    %75 = arith.mulf %74, %73 : vector<2x32xf32>
    %cst_37 = arith.constant 1.000000e+00 : f32
    %76 = vector.broadcast %cst_37 : f32 to vector<2x32xf32>
    %77 = arith.subf %75, %76 : vector<2x32xf32>
    %78 = vector.extract_strided_slice %70 {offsets = [0, 96], sizes = [2, 32], strides = [1, 1]} : vector<2x128xf32> to vector<2x32xf32>
    %79 = arith.mulf %72, %18 : vector<2x32xf32>
    %80 = arith.mulf %71, %77 : vector<2x32xf32>
    %81 = arith.addf %79, %80 : vector<2x32xf32>
    %82 = math.tanh %81 : vector<2x32xf32>
    %83 = arith.mulf %78, %82 : vector<2x32xf32>
    %84 = tpu.concatenate %83, %18 in 1 : vector<2x32xf32>, vector<2x32xf32> -> vector<2x64xf32>
    %cst_38 = arith.constant dense<0.000000e+00> : vector<2x128xf32>
    %85 = tpu.matmul %84, %16, %cst_38 {dimension_numbers = #tpu.dot_dimension_numbers<[1], [0], [0], [1], [0, 0, 1, 1], [], []>} : vector<2x64xf32>, vector<64x128xf32>, vector<2x128xf32> -> vector<2x128xf32>
    %86 = vector.broadcast %17 : vector<1x128xf32> to vector<2x128xf32>
    %87 = arith.addf %85, %86 : vector<2x128xf32>
    %88 = arith.negf %87 : vector<2x128xf32>
    %89 = math.exp %88 : vector<2x128xf32>
    %cst_39 = arith.constant 1.000000e+00 : f32
    %90 = vector.broadcast %cst_39 : f32 to vector<2x128xf32>
    %91 = arith.addf %90, %89 : vector<2x128xf32>
    %92 = arith.divf %90, %91 : vector<2x128xf32>
    %93 = vector.extract_strided_slice %92 {offsets = [0, 0], sizes = [2, 32], strides = [1, 1]} : vector<2x128xf32> to vector<2x32xf32>
    %94 = vector.extract_strided_slice %92 {offsets = [0, 32], sizes = [2, 32], strides = [1, 1]} : vector<2x128xf32> to vector<2x32xf32>
    %95 = vector.extract_strided_slice %92 {offsets = [0, 64], sizes = [2, 32], strides = [1, 1]} : vector<2x128xf32> to vector<2x32xf32>
    %cst_40 = arith.constant 2.000000e+00 : f32
    %96 = vector.broadcast %cst_40 : f32 to vector<2x32xf32>
    %97 = arith.mulf %96, %95 : vector<2x32xf32>
    %cst_41 = arith.constant 1.000000e+00 : f32
    %98 = vector.broadcast %cst_41 : f32 to vector<2x32xf32>
    %99 = arith.subf %97, %98 : vector<2x32xf32>
    %100 = vector.extract_strided_slice %92 {offsets = [0, 96], sizes = [2, 32], strides = [1, 1]} : vector<2x128xf32> to vector<2x32xf32>
    %101 = arith.mulf %94, %18 : vector<2x32xf32>
    %102 = arith.mulf %93, %99 : vector<2x32xf32>
    %103 = arith.addf %101, %102 : vector<2x32xf32>
    %104 = math.tanh %103 : vector<2x32xf32>
    %105 = arith.mulf %100, %104 : vector<2x32xf32>
    %c0_42 = arith.constant 0 : index
    %c32 = arith.constant 32 : index
    %106 = vector.load %arg15[%c0_42, %c32] : memref<16x64xf32, #tpu.memory_space<vmem>>, vector<2x32xf32>
    tpu.vector_store %arg15[%c0_42, %c32], %105 {strides = array<i32>} : memref<16x64xf32, #tpu.memory_space<vmem>>, vector<2x32xf32>,
    %c12 = arith.constant 12 : index
    %c0_43 = arith.constant 0 : index
    %107 = vector.load %arg14[%c12, %c0_43] : memref<16x256xf32, #tpu.memory_space<vmem>>, vector<2x128xf32>
    %cst_44 = arith.constant dense<0.000000e+00> : vector<2x128xf32>
    %108 = tpu.matmul %39, %12, %cst_44 {dimension_numbers = #tpu.dot_dimension_numbers<[1], [0], [0], [1], [0, 0, 1, 1], [], []>} : vector<2x32xf32>, vector<32x128xf32>, vector<2x128xf32> -> vector<2x128xf32>
    %109 = arith.addf %107, %108 : vector<2x128xf32>
    %110 = arith.negf %109 : vector<2x128xf32>
    %111 = math.exp %110 : vector<2x128xf32>
    %cst_45 = arith.constant 1.000000e+00 : f32
    %112 = vector.broadcast %cst_45 : f32 to vector<2x128xf32>
    %113 = arith.addf %112, %111 : vector<2x128xf32>
    %114 = arith.divf %112, %113 : vector<2x128xf32>
    %115 = vector.extract_strided_slice %114 {offsets = [0, 0], sizes = [2, 32], strides = [1, 1]} : vector<2x128xf32> to vector<2x32xf32>
    %116 = vector.extract_strided_slice %114 {offsets = [0, 32], sizes = [2, 32], strides = [1, 1]} : vector<2x128xf32> to vector<2x32xf32>
    %117 = vector.extract_strided_slice %114 {offsets = [0, 64], sizes = [2, 32], strides = [1, 1]} : vector<2x128xf32> to vector<2x32xf32>
    %cst_46 = arith.constant 2.000000e+00 : f32
    %118 = vector.broadcast %cst_46 : f32 to vector<2x32xf32>
    %119 = arith.mulf %118, %117 : vector<2x32xf32>
    %cst_47 = arith.constant 1.000000e+00 : f32
    %120 = vector.broadcast %cst_47 : f32 to vector<2x32xf32>
    %121 = arith.subf %119, %120 : vector<2x32xf32>
    %122 = vector.extract_strided_slice %114 {offsets = [0, 96], sizes = [2, 32], strides = [1, 1]} : vector<2x128xf32> to vector<2x32xf32>
    %123 = arith.mulf %116, %37 : vector<2x32xf32>
    %124 = arith.mulf %115, %121 : vector<2x32xf32>
    %125 = arith.addf %123, %124 : vector<2x32xf32>
    %126 = math.tanh %125 : vector<2x32xf32>
    %127 = arith.mulf %122, %126 : vector<2x32xf32>
    %128 = tpu.concatenate %127, %61 in 1 : vector<2x32xf32>, vector<2x32xf32> -> vector<2x64xf32>
    %cst_48 = arith.constant dense<0.000000e+00> : vector<2x128xf32>
    %129 = tpu.matmul %128, %13, %cst_48 {dimension_numbers = #tpu.dot_dimension_numbers<[1], [0], [0], [1], [0, 0, 1, 1], [], []>} : vector<2x64xf32>, vector<64x128xf32>, vector<2x128xf32> -> vector<2x128xf32>
    %130 = vector.broadcast %14 : vector<1x128xf32> to vector<2x128xf32>
    %131 = arith.addf %129, %130 : vector<2x128xf32>
    %132 = arith.negf %131 : vector<2x128xf32>
    %133 = math.exp %132 : vector<2x128xf32>
    %cst_49 = arith.constant 1.000000e+00 : f32
    %134 = vector.broadcast %cst_49 : f32 to vector<2x128xf32>
    %135 = arith.addf %134, %133 : vector<2x128xf32>
    %136 = arith.divf %134, %135 : vector<2x128xf32>
    %137 = vector.extract_strided_slice %136 {offsets = [0, 0], sizes = [2, 32], strides = [1, 1]} : vector<2x128xf32> to vector<2x32xf32>
    %138 = vector.extract_strided_slice %136 {offsets = [0, 32], sizes = [2, 32], strides = [1, 1]} : vector<2x128xf32> to vector<2x32xf32>
    %139 = vector.extract_strided_slice %136 {offsets = [0, 64], sizes = [2, 32], strides = [1, 1]} : vector<2x128xf32> to vector<2x32xf32>
    %cst_50 = arith.constant 2.000000e+00 : f32
    %140 = vector.broadcast %cst_50 : f32 to vector<2x32xf32>
    %141 = arith.mulf %140, %139 : vector<2x32xf32>
    %cst_51 = arith.constant 1.000000e+00 : f32
    %142 = vector.broadcast %cst_51 : f32 to vector<2x32xf32>
    %143 = arith.subf %141, %142 : vector<2x32xf32>
    %144 = vector.extract_strided_slice %136 {offsets = [0, 96], sizes = [2, 32], strides = [1, 1]} : vector<2x128xf32> to vector<2x32xf32>
    %145 = arith.mulf %138, %59 : vector<2x32xf32>
    %146 = arith.mulf %137, %143 : vector<2x32xf32>
    %147 = arith.addf %145, %146 : vector<2x32xf32>
    %148 = math.tanh %147 : vector<2x32xf32>
    %149 = arith.mulf %144, %148 : vector<2x32xf32>
    %c12_52 = arith.constant 12 : index
    %c0_53 = arith.constant 0 : index
    %150 = vector.load %arg15[%c12_52, %c0_53] : memref<16x64xf32, #tpu.memory_space<vmem>>, vector<2x32xf32>
    tpu.vector_store %arg15[%c12_52, %c0_53], %149 {strides = array<i32>} : memref<16x64xf32, #tpu.memory_space<vmem>>, vector<2x32xf32>,
    %c2 = arith.constant 2 : index
    %c128_54 = arith.constant 128 : index
    %151 = vector.load %arg14[%c2, %c128_54] : memref<16x256xf32, #tpu.memory_space<vmem>>, vector<2x128xf32>
    %cst_55 = arith.constant dense<0.000000e+00> : vector<2x128xf32>
    %152 = tpu.matmul %83, %15, %cst_55 {dimension_numbers = #tpu.dot_dimension_numbers<[1], [0], [0], [1], [0, 0, 1, 1], [], []>} : vector<2x32xf32>, vector<32x128xf32>, vector<2x128xf32> -> vector<2x128xf32>
    %153 = arith.addf %151, %152 : vector<2x128xf32>
    %154 = arith.negf %153 : vector<2x128xf32>
    %155 = math.exp %154 : vector<2x128xf32>
    %cst_56 = arith.constant 1.000000e+00 : f32
    %156 = vector.broadcast %cst_56 : f32 to vector<2x128xf32>
    %157 = arith.addf %156, %155 : vector<2x128xf32>
    %158 = arith.divf %156, %157 : vector<2x128xf32>
    %159 = vector.extract_strided_slice %158 {offsets = [0, 0], sizes = [2, 32], strides = [1, 1]} : vector<2x128xf32> to vector<2x32xf32>
    %160 = vector.extract_strided_slice %158 {offsets = [0, 32], sizes = [2, 32], strides = [1, 1]} : vector<2x128xf32> to vector<2x32xf32>
    %161 = vector.extract_strided_slice %158 {offsets = [0, 64], sizes = [2, 32], strides = [1, 1]} : vector<2x128xf32> to vector<2x32xf32>
    %cst_57 = arith.constant 2.000000e+00 : f32
    %162 = vector.broadcast %cst_57 : f32 to vector<2x32xf32>
    %163 = arith.mulf %162, %161 : vector<2x32xf32>
    %cst_58 = arith.constant 1.000000e+00 : f32
    %164 = vector.broadcast %cst_58 : f32 to vector<2x32xf32>
    %165 = arith.subf %163, %164 : vector<2x32xf32>
    %166 = vector.extract_strided_slice %158 {offsets = [0, 96], sizes = [2, 32], strides = [1, 1]} : vector<2x128xf32> to vector<2x32xf32>
    %167 = arith.mulf %160, %81 : vector<2x32xf32>
    %168 = arith.mulf %159, %165 : vector<2x32xf32>
    %169 = arith.addf %167, %168 : vector<2x32xf32>
    %170 = math.tanh %169 : vector<2x32xf32>
    %171 = arith.mulf %166, %170 : vector<2x32xf32>
    %172 = tpu.concatenate %171, %105 in 1 : vector<2x32xf32>, vector<2x32xf32> -> vector<2x64xf32>
    %cst_59 = arith.constant dense<0.000000e+00> : vector<2x128xf32>
    %173 = tpu.matmul %172, %16, %cst_59 {dimension_numbers = #tpu.dot_dimension_numbers<[1], [0], [0], [1], [0, 0, 1, 1], [], []>} : vector<2x64xf32>, vector<64x128xf32>, vector<2x128xf32> -> vector<2x128xf32>
    %174 = vector.broadcast %17 : vector<1x128xf32> to vector<2x128xf32>
    %175 = arith.addf %173, %174 : vector<2x128xf32>
    %176 = arith.negf %175 : vector<2x128xf32>
    %177 = math.exp %176 : vector<2x128xf32>
    %cst_60 = arith.constant 1.000000e+00 : f32
    %178 = vector.broadcast %cst_60 : f32 to vector<2x128xf32>
    %179 = arith.addf %178, %177 : vector<2x128xf32>
    %180 = arith.divf %178, %179 : vector<2x128xf32>
    %181 = vector.extract_strided_slice %180 {offsets = [0, 0], sizes = [2, 32], strides = [1, 1]} : vector<2x128xf32> to vector<2x32xf32>
    %182 = vector.extract_strided_slice %180 {offsets = [0, 32], sizes = [2, 32], strides = [1, 1]} : vector<2x128xf32> to vector<2x32xf32>
    %183 = vector.extract_strided_slice %180 {offsets = [0, 64], sizes = [2, 32], strides = [1, 1]} : vector<2x128xf32> to vector<2x32xf32>
    %cst_61 = arith.constant 2.000000e+00 : f32
    %184 = vector.broadcast %cst_61 : f32 to vector<2x32xf32>
    %185 = arith.mulf %184, %183 : vector<2x32xf32>
    %cst_62 = arith.constant 1.000000e+00 : f32
    %186 = vector.broadcast %cst_62 : f32 to vector<2x32xf32>
    %187 = arith.subf %185, %186 : vector<2x32xf32>
    %188 = vector.extract_strided_slice %180 {offsets = [0, 96], sizes = [2, 32], strides = [1, 1]} : vector<2x128xf32> to vector<2x32xf32>
    %189 = arith.mulf %182, %103 : vector<2x32xf32>
    %190 = arith.mulf %181, %187 : vector<2x32xf32>
    %191 = arith.addf %189, %190 : vector<2x32xf32>
    %192 = math.tanh %191 : vector<2x32xf32>
    %193 = arith.mulf %188, %192 : vector<2x32xf32>
    %c2_63 = arith.constant 2 : index
    %c32_64 = arith.constant 32 : index
    %194 = vector.load %arg15[%c2_63, %c32_64] : memref<16x64xf32, #tpu.memory_space<vmem>>, vector<2x32xf32>
    tpu.vector_store %arg15[%c2_63, %c32_64], %193 {strides = array<i32>} : memref<16x64xf32, #tpu.memory_space<vmem>>, vector<2x32xf32>,
    %c10 = arith.constant 10 : index
    %c0_65 = arith.constant 0 : index
    %195 = vector.load %arg14[%c10, %c0_65] : memref<16x256xf32, #tpu.memory_space<vmem>>, vector<2x128xf32>
    %cst_66 = arith.constant dense<0.000000e+00> : vector<2x128xf32>
    %196 = tpu.matmul %127, %12, %cst_66 {dimension_numbers = #tpu.dot_dimension_numbers<[1], [0], [0], [1], [0, 0, 1, 1], [], []>} : vector<2x32xf32>, vector<32x128xf32>, vector<2x128xf32> -> vector<2x128xf32>
    %197 = arith.addf %195, %196 : vector<2x128xf32>
    %198 = arith.negf %197 : vector<2x128xf32>
    %199 = math.exp %198 : vector<2x128xf32>
    %cst_67 = arith.constant 1.000000e+00 : f32
    %200 = vector.broadcast %cst_67 : f32 to vector<2x128xf32>
    %201 = arith.addf %200, %199 : vector<2x128xf32>
    %202 = arith.divf %200, %201 : vector<2x128xf32>
    %203 = vector.extract_strided_slice %202 {offsets = [0, 0], sizes = [2, 32], strides = [1, 1]} : vector<2x128xf32> to vector<2x32xf32>
    %204 = vector.extract_strided_slice %202 {offsets = [0, 32], sizes = [2, 32], strides = [1, 1]} : vector<2x128xf32> to vector<2x32xf32>
    %205 = vector.extract_strided_slice %202 {offsets = [0, 64], sizes = [2, 32], strides = [1, 1]} : vector<2x128xf32> to vector<2x32xf32>
    %cst_68 = arith.constant 2.000000e+00 : f32
    %206 = vector.broadcast %cst_68 : f32 to vector<2x32xf32>
    %207 = arith.mulf %206, %205 : vector<2x32xf32>
    %cst_69 = arith.constant 1.000000e+00 : f32
    %208 = vector.broadcast %cst_69 : f32 to vector<2x32xf32>
    %209 = arith.subf %207, %208 : vector<2x32xf32>
    %210 = vector.extract_strided_slice %202 {offsets = [0, 96], sizes = [2, 32], strides = [1, 1]} : vector<2x128xf32> to vector<2x32xf32>
    %211 = arith.mulf %204, %125 : vector<2x32xf32>
    %212 = arith.mulf %203, %209 : vector<2x32xf32>
    %213 = arith.addf %211, %212 : vector<2x32xf32>
    %214 = math.tanh %213 : vector<2x32xf32>
    %215 = arith.mulf %210, %214 : vector<2x32xf32>
    %216 = tpu.concatenate %215, %149 in 1 : vector<2x32xf32>, vector<2x32xf32> -> vector<2x64xf32>
    %cst_70 = arith.constant dense<0.000000e+00> : vector<2x128xf32>
    %217 = tpu.matmul %216, %13, %cst_70 {dimension_numbers = #tpu.dot_dimension_numbers<[1], [0], [0], [1], [0, 0, 1, 1], [], []>} : vector<2x64xf32>, vector<64x128xf32>, vector<2x128xf32> -> vector<2x128xf32>
    %218 = vector.broadcast %14 : vector<1x128xf32> to vector<2x128xf32>
    %219 = arith.addf %217, %218 : vector<2x128xf32>
    %220 = arith.negf %219 : vector<2x128xf32>
    %221 = math.exp %220 : vector<2x128xf32>
    %cst_71 = arith.constant 1.000000e+00 : f32
    %222 = vector.broadcast %cst_71 : f32 to vector<2x128xf32>
    %223 = arith.addf %222, %221 : vector<2x128xf32>
    %224 = arith.divf %222, %223 : vector<2x128xf32>
    %225 = vector.extract_strided_slice %224 {offsets = [0, 0], sizes = [2, 32], strides = [1, 1]} : vector<2x128xf32> to vector<2x32xf32>
    %226 = vector.extract_strided_slice %224 {offsets = [0, 32], sizes = [2, 32], strides = [1, 1]} : vector<2x128xf32> to vector<2x32xf32>
    %227 = vector.extract_strided_slice %224 {offsets = [0, 64], sizes = [2, 32], strides = [1, 1]} : vector<2x128xf32> to vector<2x32xf32>
    %cst_72 = arith.constant 2.000000e+00 : f32
    %228 = vector.broadcast %cst_72 : f32 to vector<2x32xf32>
    %229 = arith.mulf %228, %227 : vector<2x32xf32>
    %cst_73 = arith.constant 1.000000e+00 : f32
    %230 = vector.broadcast %cst_73 : f32 to vector<2x32xf32>
    %231 = arith.subf %229, %230 : vector<2x32xf32>
    %232 = vector.extract_strided_slice %224 {offsets = [0, 96], sizes = [2, 32], strides = [1, 1]} : vector<2x128xf32> to vector<2x32xf32>
    %233 = arith.mulf %226, %147 : vector<2x32xf32>
    %234 = arith.mulf %225, %231 : vector<2x32xf32>
    %235 = arith.addf %233, %234 : vector<2x32xf32>
    %236 = math.tanh %235 : vector<2x32xf32>
    %237 = arith.mulf %232, %236 : vector<2x32xf32>
    %c10_74 = arith.constant 10 : index
    %c0_75 = arith.constant 0 : index
    %238 = vector.load %arg15[%c10_74, %c0_75] : memref<16x64xf32, #tpu.memory_space<vmem>>, vector<2x32xf32>
    tpu.vector_store %arg15[%c10_74, %c0_75], %237 {strides = array<i32>} : memref<16x64xf32, #tpu.memory_space<vmem>>, vector<2x32xf32>,
    %c4 = arith.constant 4 : index
    %c128_76 = arith.constant 128 : index
    %239 = vector.load %arg14[%c4, %c128_76] : memref<16x256xf32, #tpu.memory_space<vmem>>, vector<2x128xf32>
    %cst_77 = arith.constant dense<0.000000e+00> : vector<2x128xf32>
    %240 = tpu.matmul %171, %15, %cst_77 {dimension_numbers = #tpu.dot_dimension_numbers<[1], [0], [0], [1], [0, 0, 1, 1], [], []>} : vector<2x32xf32>, vector<32x128xf32>, vector<2x128xf32> -> vector<2x128xf32>
    %241 = arith.addf %239, %240 : vector<2x128xf32>
    %242 = arith.negf %241 : vector<2x128xf32>
    %243 = math.exp %242 : vector<2x128xf32>
    %cst_78 = arith.constant 1.000000e+00 : f32
    %244 = vector.broadcast %cst_78 : f32 to vector<2x128xf32>
    %245 = arith.addf %244, %243 : vector<2x128xf32>
    %246 = arith.divf %244, %245 : vector<2x128xf32>
    %247 = vector.extract_strided_slice %246 {offsets = [0, 0], sizes = [2, 32], strides = [1, 1]} : vector<2x128xf32> to vector<2x32xf32>
    %248 = vector.extract_strided_slice %246 {offsets = [0, 32], sizes = [2, 32], strides = [1, 1]} : vector<2x128xf32> to vector<2x32xf32>
    %249 = vector.extract_strided_slice %246 {offsets = [0, 64], sizes = [2, 32], strides = [1, 1]} : vector<2x128xf32> to vector<2x32xf32>
    %cst_79 = arith.constant 2.000000e+00 : f32
    %250 = vector.broadcast %cst_79 : f32 to vector<2x32xf32>
    %251 = arith.mulf %250, %249 : vector<2x32xf32>
    %cst_80 = arith.constant 1.000000e+00 : f32
    %252 = vector.broadcast %cst_80 : f32 to vector<2x32xf32>
    %253 = arith.subf %251, %252 : vector<2x32xf32>
    %254 = vector.extract_strided_slice %246 {offsets = [0, 96], sizes = [2, 32], strides = [1, 1]} : vector<2x128xf32> to vector<2x32xf32>
    %255 = arith.mulf %248, %169 : vector<2x32xf32>
    %256 = arith.mulf %247, %253 : vector<2x32xf32>
    %257 = arith.addf %255, %256 : vector<2x32xf32>
    %258 = math.tanh %257 : vector<2x32xf32>
    %259 = arith.mulf %254, %258 : vector<2x32xf32>
    %260 = tpu.concatenate %259, %193 in 1 : vector<2x32xf32>, vector<2x32xf32> -> vector<2x64xf32>
    %cst_81 = arith.constant dense<0.000000e+00> : vector<2x128xf32>
    %261 = tpu.matmul %260, %16, %cst_81 {dimension_numbers = #tpu.dot_dimension_numbers<[1], [0], [0], [1], [0, 0, 1, 1], [], []>} : vector<2x64xf32>, vector<64x128xf32>, vector<2x128xf32> -> vector<2x128xf32>
    %262 = vector.broadcast %17 : vector<1x128xf32> to vector<2x128xf32>
    %263 = arith.addf %261, %262 : vector<2x128xf32>
    %264 = arith.negf %263 : vector<2x128xf32>
    %265 = math.exp %264 : vector<2x128xf32>
    %cst_82 = arith.constant 1.000000e+00 : f32
    %266 = vector.broadcast %cst_82 : f32 to vector<2x128xf32>
    %267 = arith.addf %266, %265 : vector<2x128xf32>
    %268 = arith.divf %266, %267 : vector<2x128xf32>
    %269 = vector.extract_strided_slice %268 {offsets = [0, 0], sizes = [2, 32], strides = [1, 1]} : vector<2x128xf32> to vector<2x32xf32>
    %270 = vector.extract_strided_slice %268 {offsets = [0, 32], sizes = [2, 32], strides = [1, 1]} : vector<2x128xf32> to vector<2x32xf32>
    %271 = vector.extract_strided_slice %268 {offsets = [0, 64], sizes = [2, 32], strides = [1, 1]} : vector<2x128xf32> to vector<2x32xf32>
    %cst_83 = arith.constant 2.000000e+00 : f32
    %272 = vector.broadcast %cst_83 : f32 to vector<2x32xf32>
    %273 = arith.mulf %272, %271 : vector<2x32xf32>
    %cst_84 = arith.constant 1.000000e+00 : f32
    %274 = vector.broadcast %cst_84 : f32 to vector<2x32xf32>
    %275 = arith.subf %273, %274 : vector<2x32xf32>
    %276 = vector.extract_strided_slice %268 {offsets = [0, 96], sizes = [2, 32], strides = [1, 1]} : vector<2x128xf32> to vector<2x32xf32>
    %277 = arith.mulf %270, %191 : vector<2x32xf32>
    %278 = arith.mulf %269, %275 : vector<2x32xf32>
    %279 = arith.addf %277, %278 : vector<2x32xf32>
    %280 = math.tanh %279 : vector<2x32xf32>
    %281 = arith.mulf %276, %280 : vector<2x32xf32>
    %c4_85 = arith.constant 4 : index
    %c32_86 = arith.constant 32 : index
    %282 = vector.load %arg15[%c4_85, %c32_86] : memref<16x64xf32, #tpu.memory_space<vmem>>, vector<2x32xf32>
    tpu.vector_store %arg15[%c4_85, %c32_86], %281 {strides = array<i32>} : memref<16x64xf32, #tpu.memory_space<vmem>>, vector<2x32xf32>,
    %c8 = arith.constant 8 : index
    %c0_87 = arith.constant 0 : index
    %283 = vector.load %arg14[%c8, %c0_87] : memref<16x256xf32, #tpu.memory_space<vmem>>, vector<2x128xf32>
    %cst_88 = arith.constant dense<0.000000e+00> : vector<2x128xf32>
    %284 = tpu.matmul %215, %12, %cst_88 {dimension_numbers = #tpu.dot_dimension_numbers<[1], [0], [0], [1], [0, 0, 1, 1], [], []>} : vector<2x32xf32>, vector<32x128xf32>, vector<2x128xf32> -> vector<2x128xf32>
    %285 = arith.addf %283, %284 : vector<2x128xf32>
    %286 = arith.negf %285 : vector<2x128xf32>
    %287 = math.exp %286 : vector<2x128xf32>
    %cst_89 = arith.constant 1.000000e+00 : f32
    %288 = vector.broadcast %cst_89 : f32 to vector<2x128xf32>
    %289 = arith.addf %288, %287 : vector<2x128xf32>
    %290 = arith.divf %288, %289 : vector<2x128xf32>
    %291 = vector.extract_strided_slice %290 {offsets = [0, 0], sizes = [2, 32], strides = [1, 1]} : vector<2x128xf32> to vector<2x32xf32>
    %292 = vector.extract_strided_slice %290 {offsets = [0, 32], sizes = [2, 32], strides = [1, 1]} : vector<2x128xf32> to vector<2x32xf32>
    %293 = vector.extract_strided_slice %290 {offsets = [0, 64], sizes = [2, 32], strides = [1, 1]} : vector<2x128xf32> to vector<2x32xf32>
    %cst_90 = arith.constant 2.000000e+00 : f32
    %294 = vector.broadcast %cst_90 : f32 to vector<2x32xf32>
    %295 = arith.mulf %294, %293 : vector<2x32xf32>
    %cst_91 = arith.constant 1.000000e+00 : f32
    %296 = vector.broadcast %cst_91 : f32 to vector<2x32xf32>
    %297 = arith.subf %295, %296 : vector<2x32xf32>
    %298 = vector.extract_strided_slice %290 {offsets = [0, 96], sizes = [2, 32], strides = [1, 1]} : vector<2x128xf32> to vector<2x32xf32>
    %299 = arith.mulf %292, %213 : vector<2x32xf32>
    %300 = arith.mulf %291, %297 : vector<2x32xf32>
    %301 = arith.addf %299, %300 : vector<2x32xf32>
    %302 = math.tanh %301 : vector<2x32xf32>
    %303 = arith.mulf %298, %302 : vector<2x32xf32>
    %304 = tpu.concatenate %303, %237 in 1 : vector<2x32xf32>, vector<2x32xf32> -> vector<2x64xf32>
    %cst_92 = arith.constant dense<0.000000e+00> : vector<2x128xf32>
    %305 = tpu.matmul %304, %13, %cst_92 {dimension_numbers = #tpu.dot_dimension_numbers<[1], [0], [0], [1], [0, 0, 1, 1], [], []>} : vector<2x64xf32>, vector<64x128xf32>, vector<2x128xf32> -> vector<2x128xf32>
    %306 = vector.broadcast %14 : vector<1x128xf32> to vector<2x128xf32>
    %307 = arith.addf %305, %306 : vector<2x128xf32>
    %308 = arith.negf %307 : vector<2x128xf32>
    %309 = math.exp %308 : vector<2x128xf32>
    %cst_93 = arith.constant 1.000000e+00 : f32
    %310 = vector.broadcast %cst_93 : f32 to vector<2x128xf32>
    %311 = arith.addf %310, %309 : vector<2x128xf32>
    %312 = arith.divf %310, %311 : vector<2x128xf32>
    %313 = vector.extract_strided_slice %312 {offsets = [0, 0], sizes = [2, 32], strides = [1, 1]} : vector<2x128xf32> to vector<2x32xf32>
    %314 = vector.extract_strided_slice %312 {offsets = [0, 32], sizes = [2, 32], strides = [1, 1]} : vector<2x128xf32> to vector<2x32xf32>
    %315 = vector.extract_strided_slice %312 {offsets = [0, 64], sizes = [2, 32], strides = [1, 1]} : vector<2x128xf32> to vector<2x32xf32>
    %cst_94 = arith.constant 2.000000e+00 : f32
    %316 = vector.broadcast %cst_94 : f32 to vector<2x32xf32>
    %317 = arith.mulf %316, %315 : vector<2x32xf32>
    %cst_95 = arith.constant 1.000000e+00 : f32
    %318 = vector.broadcast %cst_95 : f32 to vector<2x32xf32>
    %319 = arith.subf %317, %318 : vector<2x32xf32>
    %320 = vector.extract_strided_slice %312 {offsets = [0, 96], sizes = [2, 32], strides = [1, 1]} : vector<2x128xf32> to vector<2x32xf32>
    %321 = arith.mulf %314, %235 : vector<2x32xf32>
    %322 = arith.mulf %313, %319 : vector<2x32xf32>
    %323 = arith.addf %321, %322 : vector<2x32xf32>
    %324 = math.tanh %323 : vector<2x32xf32>
    %325 = arith.mulf %320, %324 : vector<2x32xf32>
    %c8_96 = arith.constant 8 : index
    %c0_97 = arith.constant 0 : index
    %326 = vector.load %arg15[%c8_96, %c0_97] : memref<16x64xf32, #tpu.memory_space<vmem>>, vector<2x32xf32>
    tpu.vector_store %arg15[%c8_96, %c0_97], %325 {strides = array<i32>} : memref<16x64xf32, #tpu.memory_space<vmem>>, vector<2x32xf32>,
    %c6 = arith.constant 6 : index
    %c128_98 = arith.constant 128 : index
    %327 = vector.load %arg14[%c6, %c128_98] : memref<16x256xf32, #tpu.memory_space<vmem>>, vector<2x128xf32>
    %cst_99 = arith.constant dense<0.000000e+00> : vector<2x128xf32>
    %328 = tpu.matmul %259, %15, %cst_99 {dimension_numbers = #tpu.dot_dimension_numbers<[1], [0], [0], [1], [0, 0, 1, 1], [], []>} : vector<2x32xf32>, vector<32x128xf32>, vector<2x128xf32> -> vector<2x128xf32>
    %329 = arith.addf %327, %328 : vector<2x128xf32>
    %330 = arith.negf %329 : vector<2x128xf32>
    %331 = math.exp %330 : vector<2x128xf32>
    %cst_100 = arith.constant 1.000000e+00 : f32
    %332 = vector.broadcast %cst_100 : f32 to vector<2x128xf32>
    %333 = arith.addf %332, %331 : vector<2x128xf32>
    %334 = arith.divf %332, %333 : vector<2x128xf32>
    %335 = vector.extract_strided_slice %334 {offsets = [0, 0], sizes = [2, 32], strides = [1, 1]} : vector<2x128xf32> to vector<2x32xf32>
    %336 = vector.extract_strided_slice %334 {offsets = [0, 32], sizes = [2, 32], strides = [1, 1]} : vector<2x128xf32> to vector<2x32xf32>
    %337 = vector.extract_strided_slice %334 {offsets = [0, 64], sizes = [2, 32], strides = [1, 1]} : vector<2x128xf32> to vector<2x32xf32>
    %cst_101 = arith.constant 2.000000e+00 : f32
    %338 = vector.broadcast %cst_101 : f32 to vector<2x32xf32>
    %339 = arith.mulf %338, %337 : vector<2x32xf32>
    %cst_102 = arith.constant 1.000000e+00 : f32
    %340 = vector.broadcast %cst_102 : f32 to vector<2x32xf32>
    %341 = arith.subf %339, %340 : vector<2x32xf32>
    %342 = vector.extract_strided_slice %334 {offsets = [0, 96], sizes = [2, 32], strides = [1, 1]} : vector<2x128xf32> to vector<2x32xf32>
    %343 = arith.mulf %336, %257 : vector<2x32xf32>
    %344 = arith.mulf %335, %341 : vector<2x32xf32>
    %345 = arith.addf %343, %344 : vector<2x32xf32>
    %346 = math.tanh %345 : vector<2x32xf32>
    %347 = arith.mulf %342, %346 : vector<2x32xf32>
    %348 = tpu.concatenate %347, %281 in 1 : vector<2x32xf32>, vector<2x32xf32> -> vector<2x64xf32>
    %cst_103 = arith.constant dense<0.000000e+00> : vector<2x128xf32>
    %349 = tpu.matmul %348, %16, %cst_103 {dimension_numbers = #tpu.dot_dimension_numbers<[1], [0], [0], [1], [0, 0, 1, 1], [], []>} : vector<2x64xf32>, vector<64x128xf32>, vector<2x128xf32> -> vector<2x128xf32>
    %350 = vector.broadcast %17 : vector<1x128xf32> to vector<2x128xf32>
    %351 = arith.addf %349, %350 : vector<2x128xf32>
    %352 = arith.negf %351 : vector<2x128xf32>
    %353 = math.exp %352 : vector<2x128xf32>
    %cst_104 = arith.constant 1.000000e+00 : f32
    %354 = vector.broadcast %cst_104 : f32 to vector<2x128xf32>
    %355 = arith.addf %354, %353 : vector<2x128xf32>
    %356 = arith.divf %354, %355 : vector<2x128xf32>
    %357 = vector.extract_strided_slice %356 {offsets = [0, 0], sizes = [2, 32], strides = [1, 1]} : vector<2x128xf32> to vector<2x32xf32>
    %358 = vector.extract_strided_slice %356 {offsets = [0, 32], sizes = [2, 32], strides = [1, 1]} : vector<2x128xf32> to vector<2x32xf32>
    %359 = vector.extract_strided_slice %356 {offsets = [0, 64], sizes = [2, 32], strides = [1, 1]} : vector<2x128xf32> to vector<2x32xf32>
    %cst_105 = arith.constant 2.000000e+00 : f32
    %360 = vector.broadcast %cst_105 : f32 to vector<2x32xf32>
    %361 = arith.mulf %360, %359 : vector<2x32xf32>
    %cst_106 = arith.constant 1.000000e+00 : f32
    %362 = vector.broadcast %cst_106 : f32 to vector<2x32xf32>
    %363 = arith.subf %361, %362 : vector<2x32xf32>
    %364 = vector.extract_strided_slice %356 {offsets = [0, 96], sizes = [2, 32], strides = [1, 1]} : vector<2x128xf32> to vector<2x32xf32>
    %365 = arith.mulf %358, %279 : vector<2x32xf32>
    %366 = arith.mulf %357, %363 : vector<2x32xf32>
    %367 = arith.addf %365, %366 : vector<2x32xf32>
    %368 = math.tanh %367 : vector<2x32xf32>
    %369 = arith.mulf %364, %368 : vector<2x32xf32>
    %c6_107 = arith.constant 6 : index
    %c32_108 = arith.constant 32 : index
    %370 = vector.load %arg15[%c6_107, %c32_108] : memref<16x64xf32, #tpu.memory_space<vmem>>, vector<2x32xf32>
    tpu.vector_store %arg15[%c6_107, %c32_108], %369 {strides = array<i32>} : memref<16x64xf32, #tpu.memory_space<vmem>>, vector<2x32xf32>,
    %c6_109 = arith.constant 6 : index
    %c0_110 = arith.constant 0 : index
    %371 = vector.load %arg14[%c6_109, %c0_110] : memref<16x256xf32, #tpu.memory_space<vmem>>, vector<2x128xf32>
    %cst_111 = arith.constant dense<0.000000e+00> : vector<2x128xf32>
    %372 = tpu.matmul %303, %12, %cst_111 {dimension_numbers = #tpu.dot_dimension_numbers<[1], [0], [0], [1], [0, 0, 1, 1], [], []>} : vector<2x32xf32>, vector<32x128xf32>, vector<2x128xf32> -> vector<2x128xf32>
    %373 = arith.addf %371, %372 : vector<2x128xf32>
    %374 = arith.negf %373 : vector<2x128xf32>
    %375 = math.exp %374 : vector<2x128xf32>
    %cst_112 = arith.constant 1.000000e+00 : f32
    %376 = vector.broadcast %cst_112 : f32 to vector<2x128xf32>
    %377 = arith.addf %376, %375 : vector<2x128xf32>
    %378 = arith.divf %376, %377 : vector<2x128xf32>
    %379 = vector.extract_strided_slice %378 {offsets = [0, 0], sizes = [2, 32], strides = [1, 1]} : vector<2x128xf32> to vector<2x32xf32>
    %380 = vector.extract_strided_slice %378 {offsets = [0, 32], sizes = [2, 32], strides = [1, 1]} : vector<2x128xf32> to vector<2x32xf32>
    %381 = vector.extract_strided_slice %378 {offsets = [0, 64], sizes = [2, 32], strides = [1, 1]} : vector<2x128xf32> to vector<2x32xf32>
    %cst_113 = arith.constant 2.000000e+00 : f32
    %382 = vector.broadcast %cst_113 : f32 to vector<2x32xf32>
    %383 = arith.mulf %382, %381 : vector<2x32xf32>
    %cst_114 = arith.constant 1.000000e+00 : f32
    %384 = vector.broadcast %cst_114 : f32 to vector<2x32xf32>
    %385 = arith.subf %383, %384 : vector<2x32xf32>
    %386 = vector.extract_strided_slice %378 {offsets = [0, 96], sizes = [2, 32], strides = [1, 1]} : vector<2x128xf32> to vector<2x32xf32>
    %387 = arith.mulf %380, %301 : vector<2x32xf32>
    %388 = arith.mulf %379, %385 : vector<2x32xf32>
    %389 = arith.addf %387, %388 : vector<2x32xf32>
    %390 = math.tanh %389 : vector<2x32xf32>
    %391 = arith.mulf %386, %390 : vector<2x32xf32>
    %392 = tpu.concatenate %391, %325 in 1 : vector<2x32xf32>, vector<2x32xf32> -> vector<2x64xf32>
    %cst_115 = arith.constant dense<0.000000e+00> : vector<2x128xf32>
    %393 = tpu.matmul %392, %13, %cst_115 {dimension_numbers = #tpu.dot_dimension_numbers<[1], [0], [0], [1], [0, 0, 1, 1], [], []>} : vector<2x64xf32>, vector<64x128xf32>, vector<2x128xf32> -> vector<2x128xf32>
    %394 = vector.broadcast %14 : vector<1x128xf32> to vector<2x128xf32>
    %395 = arith.addf %393, %394 : vector<2x128xf32>
    %396 = arith.negf %395 : vector<2x128xf32>
    %397 = math.exp %396 : vector<2x128xf32>
    %cst_116 = arith.constant 1.000000e+00 : f32
    %398 = vector.broadcast %cst_116 : f32 to vector<2x128xf32>
    %399 = arith.addf %398, %397 : vector<2x128xf32>
    %400 = arith.divf %398, %399 : vector<2x128xf32>
    %401 = vector.extract_strided_slice %400 {offsets = [0, 0], sizes = [2, 32], strides = [1, 1]} : vector<2x128xf32> to vector<2x32xf32>
    %402 = vector.extract_strided_slice %400 {offsets = [0, 32], sizes = [2, 32], strides = [1, 1]} : vector<2x128xf32> to vector<2x32xf32>
    %403 = vector.extract_strided_slice %400 {offsets = [0, 64], sizes = [2, 32], strides = [1, 1]} : vector<2x128xf32> to vector<2x32xf32>
    %cst_117 = arith.constant 2.000000e+00 : f32
    %404 = vector.broadcast %cst_117 : f32 to vector<2x32xf32>
    %405 = arith.mulf %404, %403 : vector<2x32xf32>
    %cst_118 = arith.constant 1.000000e+00 : f32
    %406 = vector.broadcast %cst_118 : f32 to vector<2x32xf32>
    %407 = arith.subf %405, %406 : vector<2x32xf32>
    %408 = vector.extract_strided_slice %400 {offsets = [0, 96], sizes = [2, 32], strides = [1, 1]} : vector<2x128xf32> to vector<2x32xf32>
    %409 = arith.mulf %402, %323 : vector<2x32xf32>
    %410 = arith.mulf %401, %407 : vector<2x32xf32>
    %411 = arith.addf %409, %410 : vector<2x32xf32>
    %412 = math.tanh %411 : vector<2x32xf32>
    %413 = arith.mulf %408, %412 : vector<2x32xf32>
    %c6_119 = arith.constant 6 : index
    %c0_120 = arith.constant 0 : index
    %414 = vector.load %arg15[%c6_119, %c0_120] : memref<16x64xf32, #tpu.memory_space<vmem>>, vector<2x32xf32>
    tpu.vector_store %arg15[%c6_119, %c0_120], %413 {strides = array<i32>} : memref<16x64xf32, #tpu.memory_space<vmem>>, vector<2x32xf32>,
    %c8_121 = arith.constant 8 : index
    %c128_122 = arith.constant 128 : index
    %415 = vector.load %arg14[%c8_121, %c128_122] : memref<16x256xf32, #tpu.memory_space<vmem>>, vector<2x128xf32>
    %cst_123 = arith.constant dense<0.000000e+00> : vector<2x128xf32>
    %416 = tpu.matmul %347, %15, %cst_123 {dimension_numbers = #tpu.dot_dimension_numbers<[1], [0], [0], [1], [0, 0, 1, 1], [], []>} : vector<2x32xf32>, vector<32x128xf32>, vector<2x128xf32> -> vector<2x128xf32>
    %417 = arith.addf %415, %416 : vector<2x128xf32>
    %418 = arith.negf %417 : vector<2x128xf32>
    %419 = math.exp %418 : vector<2x128xf32>
    %cst_124 = arith.constant 1.000000e+00 : f32
    %420 = vector.broadcast %cst_124 : f32 to vector<2x128xf32>
    %421 = arith.addf %420, %419 : vector<2x128xf32>
    %422 = arith.divf %420, %421 : vector<2x128xf32>
    %423 = vector.extract_strided_slice %422 {offsets = [0, 0], sizes = [2, 32], strides = [1, 1]} : vector<2x128xf32> to vector<2x32xf32>
    %424 = vector.extract_strided_slice %422 {offsets = [0, 32], sizes = [2, 32], strides = [1, 1]} : vector<2x128xf32> to vector<2x32xf32>
    %425 = vector.extract_strided_slice %422 {offsets = [0, 64], sizes = [2, 32], strides = [1, 1]} : vector<2x128xf32> to vector<2x32xf32>
    %cst_125 = arith.constant 2.000000e+00 : f32
    %426 = vector.broadcast %cst_125 : f32 to vector<2x32xf32>
    %427 = arith.mulf %426, %425 : vector<2x32xf32>
    %cst_126 = arith.constant 1.000000e+00 : f32
    %428 = vector.broadcast %cst_126 : f32 to vector<2x32xf32>
    %429 = arith.subf %427, %428 : vector<2x32xf32>
    %430 = vector.extract_strided_slice %422 {offsets = [0, 96], sizes = [2, 32], strides = [1, 1]} : vector<2x128xf32> to vector<2x32xf32>
    %431 = arith.mulf %424, %345 : vector<2x32xf32>
    %432 = arith.mulf %423, %429 : vector<2x32xf32>
    %433 = arith.addf %431, %432 : vector<2x32xf32>
    %434 = math.tanh %433 : vector<2x32xf32>
    %435 = arith.mulf %430, %434 : vector<2x32xf32>
    %436 = tpu.concatenate %435, %369 in 1 : vector<2x32xf32>, vector<2x32xf32> -> vector<2x64xf32>
    %cst_127 = arith.constant dense<0.000000e+00> : vector<2x128xf32>
    %437 = tpu.matmul %436, %16, %cst_127 {dimension_numbers = #tpu.dot_dimension_numbers<[1], [0], [0], [1], [0, 0, 1, 1], [], []>} : vector<2x64xf32>, vector<64x128xf32>, vector<2x128xf32> -> vector<2x128xf32>
    %438 = vector.broadcast %17 : vector<1x128xf32> to vector<2x128xf32>
    %439 = arith.addf %437, %438 : vector<2x128xf32>
    %440 = arith.negf %439 : vector<2x128xf32>
    %441 = math.exp %440 : vector<2x128xf32>
    %cst_128 = arith.constant 1.000000e+00 : f32
    %442 = vector.broadcast %cst_128 : f32 to vector<2x128xf32>
    %443 = arith.addf %442, %441 : vector<2x128xf32>
    %444 = arith.divf %442, %443 : vector<2x128xf32>
    %445 = vector.extract_strided_slice %444 {offsets = [0, 0], sizes = [2, 32], strides = [1, 1]} : vector<2x128xf32> to vector<2x32xf32>
    %446 = vector.extract_strided_slice %444 {offsets = [0, 32], sizes = [2, 32], strides = [1, 1]} : vector<2x128xf32> to vector<2x32xf32>
    %447 = vector.extract_strided_slice %444 {offsets = [0, 64], sizes = [2, 32], strides = [1, 1]} : vector<2x128xf32> to vector<2x32xf32>
    %cst_129 = arith.constant 2.000000e+00 : f32
    %448 = vector.broadcast %cst_129 : f32 to vector<2x32xf32>
    %449 = arith.mulf %448, %447 : vector<2x32xf32>
    %cst_130 = arith.constant 1.000000e+00 : f32
    %450 = vector.broadcast %cst_130 : f32 to vector<2x32xf32>
    %451 = arith.subf %449, %450 : vector<2x32xf32>
    %452 = vector.extract_strided_slice %444 {offsets = [0, 96], sizes = [2, 32], strides = [1, 1]} : vector<2x128xf32> to vector<2x32xf32>
    %453 = arith.mulf %446, %367 : vector<2x32xf32>
    %454 = arith.mulf %445, %451 : vector<2x32xf32>
    %455 = arith.addf %453, %454 : vector<2x32xf32>
    %456 = math.tanh %455 : vector<2x32xf32>
    %457 = arith.mulf %452, %456 : vector<2x32xf32>
    %c8_131 = arith.constant 8 : index
    %c32_132 = arith.constant 32 : index
    %458 = vector.load %arg15[%c8_131, %c32_132] : memref<16x64xf32, #tpu.memory_space<vmem>>, vector<2x32xf32>
    tpu.vector_store %arg15[%c8_131, %c32_132], %457 {strides = array<i32>} : memref<16x64xf32, #tpu.memory_space<vmem>>, vector<2x32xf32>,
    %c4_133 = arith.constant 4 : index
    %c0_134 = arith.constant 0 : index
    %459 = vector.load %arg14[%c4_133, %c0_134] : memref<16x256xf32, #tpu.memory_space<vmem>>, vector<2x128xf32>
    %cst_135 = arith.constant dense<0.000000e+00> : vector<2x128xf32>
    %460 = tpu.matmul %391, %12, %cst_135 {dimension_numbers = #tpu.dot_dimension_numbers<[1], [0], [0], [1], [0, 0, 1, 1], [], []>} : vector<2x32xf32>, vector<32x128xf32>, vector<2x128xf32> -> vector<2x128xf32>
    %461 = arith.addf %459, %460 : vector<2x128xf32>
    %462 = arith.negf %461 : vector<2x128xf32>
    %463 = math.exp %462 : vector<2x128xf32>
    %cst_136 = arith.constant 1.000000e+00 : f32
    %464 = vector.broadcast %cst_136 : f32 to vector<2x128xf32>
    %465 = arith.addf %464, %463 : vector<2x128xf32>
    %466 = arith.divf %464, %465 : vector<2x128xf32>
    %467 = vector.extract_strided_slice %466 {offsets = [0, 0], sizes = [2, 32], strides = [1, 1]} : vector<2x128xf32> to vector<2x32xf32>
    %468 = vector.extract_strided_slice %466 {offsets = [0, 32], sizes = [2, 32], strides = [1, 1]} : vector<2x128xf32> to vector<2x32xf32>
    %469 = vector.extract_strided_slice %466 {offsets = [0, 64], sizes = [2, 32], strides = [1, 1]} : vector<2x128xf32> to vector<2x32xf32>
    %cst_137 = arith.constant 2.000000e+00 : f32
    %470 = vector.broadcast %cst_137 : f32 to vector<2x32xf32>
    %471 = arith.mulf %470, %469 : vector<2x32xf32>
    %cst_138 = arith.constant 1.000000e+00 : f32
    %472 = vector.broadcast %cst_138 : f32 to vector<2x32xf32>
    %473 = arith.subf %471, %472 : vector<2x32xf32>
    %474 = vector.extract_strided_slice %466 {offsets = [0, 96], sizes = [2, 32], strides = [1, 1]} : vector<2x128xf32> to vector<2x32xf32>
    %475 = arith.mulf %468, %389 : vector<2x32xf32>
    %476 = arith.mulf %467, %473 : vector<2x32xf32>
    %477 = arith.addf %475, %476 : vector<2x32xf32>
    %478 = math.tanh %477 : vector<2x32xf32>
    %479 = arith.mulf %474, %478 : vector<2x32xf32>
    %480 = tpu.concatenate %479, %413 in 1 : vector<2x32xf32>, vector<2x32xf32> -> vector<2x64xf32>
    %cst_139 = arith.constant dense<0.000000e+00> : vector<2x128xf32>
    %481 = tpu.matmul %480, %13, %cst_139 {dimension_numbers = #tpu.dot_dimension_numbers<[1], [0], [0], [1], [0, 0, 1, 1], [], []>} : vector<2x64xf32>, vector<64x128xf32>, vector<2x128xf32> -> vector<2x128xf32>
    %482 = vector.broadcast %14 : vector<1x128xf32> to vector<2x128xf32>
    %483 = arith.addf %481, %482 : vector<2x128xf32>
    %484 = arith.negf %483 : vector<2x128xf32>
    %485 = math.exp %484 : vector<2x128xf32>
    %cst_140 = arith.constant 1.000000e+00 : f32
    %486 = vector.broadcast %cst_140 : f32 to vector<2x128xf32>
    %487 = arith.addf %486, %485 : vector<2x128xf32>
    %488 = arith.divf %486, %487 : vector<2x128xf32>
    %489 = vector.extract_strided_slice %488 {offsets = [0, 0], sizes = [2, 32], strides = [1, 1]} : vector<2x128xf32> to vector<2x32xf32>
    %490 = vector.extract_strided_slice %488 {offsets = [0, 32], sizes = [2, 32], strides = [1, 1]} : vector<2x128xf32> to vector<2x32xf32>
    %491 = vector.extract_strided_slice %488 {offsets = [0, 64], sizes = [2, 32], strides = [1, 1]} : vector<2x128xf32> to vector<2x32xf32>
    %cst_141 = arith.constant 2.000000e+00 : f32
    %492 = vector.broadcast %cst_141 : f32 to vector<2x32xf32>
    %493 = arith.mulf %492, %491 : vector<2x32xf32>
    %cst_142 = arith.constant 1.000000e+00 : f32
    %494 = vector.broadcast %cst_142 : f32 to vector<2x32xf32>
    %495 = arith.subf %493, %494 : vector<2x32xf32>
    %496 = vector.extract_strided_slice %488 {offsets = [0, 96], sizes = [2, 32], strides = [1, 1]} : vector<2x128xf32> to vector<2x32xf32>
    %497 = arith.mulf %490, %411 : vector<2x32xf32>
    %498 = arith.mulf %489, %495 : vector<2x32xf32>
    %499 = arith.addf %497, %498 : vector<2x32xf32>
    %500 = math.tanh %499 : vector<2x32xf32>
    %501 = arith.mulf %496, %500 : vector<2x32xf32>
    %c4_143 = arith.constant 4 : index
    %c0_144 = arith.constant 0 : index
    %502 = vector.load %arg15[%c4_143, %c0_144] : memref<16x64xf32, #tpu.memory_space<vmem>>, vector<2x32xf32>
    tpu.vector_store %arg15[%c4_143, %c0_144], %501 {strides = array<i32>} : memref<16x64xf32, #tpu.memory_space<vmem>>, vector<2x32xf32>,
    %c10_145 = arith.constant 10 : index
    %c128_146 = arith.constant 128 : index
    %503 = vector.load %arg14[%c10_145, %c128_146] : memref<16x256xf32, #tpu.memory_space<vmem>>, vector<2x128xf32>
    %cst_147 = arith.constant dense<0.000000e+00> : vector<2x128xf32>
    %504 = tpu.matmul %435, %15, %cst_147 {dimension_numbers = #tpu.dot_dimension_numbers<[1], [0], [0], [1], [0, 0, 1, 1], [], []>} : vector<2x32xf32>, vector<32x128xf32>, vector<2x128xf32> -> vector<2x128xf32>
    %505 = arith.addf %503, %504 : vector<2x128xf32>
    %506 = arith.negf %505 : vector<2x128xf32>
    %507 = math.exp %506 : vector<2x128xf32>
    %cst_148 = arith.constant 1.000000e+00 : f32
    %508 = vector.broadcast %cst_148 : f32 to vector<2x128xf32>
    %509 = arith.addf %508, %507 : vector<2x128xf32>
    %510 = arith.divf %508, %509 : vector<2x128xf32>
    %511 = vector.extract_strided_slice %510 {offsets = [0, 0], sizes = [2, 32], strides = [1, 1]} : vector<2x128xf32> to vector<2x32xf32>
    %512 = vector.extract_strided_slice %510 {offsets = [0, 32], sizes = [2, 32], strides = [1, 1]} : vector<2x128xf32> to vector<2x32xf32>
    %513 = vector.extract_strided_slice %510 {offsets = [0, 64], sizes = [2, 32], strides = [1, 1]} : vector<2x128xf32> to vector<2x32xf32>
    %cst_149 = arith.constant 2.000000e+00 : f32
    %514 = vector.broadcast %cst_149 : f32 to vector<2x32xf32>
    %515 = arith.mulf %514, %513 : vector<2x32xf32>
    %cst_150 = arith.constant 1.000000e+00 : f32
    %516 = vector.broadcast %cst_150 : f32 to vector<2x32xf32>
    %517 = arith.subf %515, %516 : vector<2x32xf32>
    %518 = vector.extract_strided_slice %510 {offsets = [0, 96], sizes = [2, 32], strides = [1, 1]} : vector<2x128xf32> to vector<2x32xf32>
    %519 = arith.mulf %512, %433 : vector<2x32xf32>
    %520 = arith.mulf %511, %517 : vector<2x32xf32>
    %521 = arith.addf %519, %520 : vector<2x32xf32>
    %522 = math.tanh %521 : vector<2x32xf32>
    %523 = arith.mulf %518, %522 : vector<2x32xf32>
    %524 = tpu.concatenate %523, %457 in 1 : vector<2x32xf32>, vector<2x32xf32> -> vector<2x64xf32>
    %cst_151 = arith.constant dense<0.000000e+00> : vector<2x128xf32>
    %525 = tpu.matmul %524, %16, %cst_151 {dimension_numbers = #tpu.dot_dimension_numbers<[1], [0], [0], [1], [0, 0, 1, 1], [], []>} : vector<2x64xf32>, vector<64x128xf32>, vector<2x128xf32> -> vector<2x128xf32>
    %526 = vector.broadcast %17 : vector<1x128xf32> to vector<2x128xf32>
    %527 = arith.addf %525, %526 : vector<2x128xf32>
    %528 = arith.negf %527 : vector<2x128xf32>
    %529 = math.exp %528 : vector<2x128xf32>
    %cst_152 = arith.constant 1.000000e+00 : f32
    %530 = vector.broadcast %cst_152 : f32 to vector<2x128xf32>
    %531 = arith.addf %530, %529 : vector<2x128xf32>
    %532 = arith.divf %530, %531 : vector<2x128xf32>
    %533 = vector.extract_strided_slice %532 {offsets = [0, 0], sizes = [2, 32], strides = [1, 1]} : vector<2x128xf32> to vector<2x32xf32>
    %534 = vector.extract_strided_slice %532 {offsets = [0, 32], sizes = [2, 32], strides = [1, 1]} : vector<2x128xf32> to vector<2x32xf32>
    %535 = vector.extract_strided_slice %532 {offsets = [0, 64], sizes = [2, 32], strides = [1, 1]} : vector<2x128xf32> to vector<2x32xf32>
    %cst_153 = arith.constant 2.000000e+00 : f32
    %536 = vector.broadcast %cst_153 : f32 to vector<2x32xf32>
    %537 = arith.mulf %536, %535 : vector<2x32xf32>
    %cst_154 = arith.constant 1.000000e+00 : f32
    %538 = vector.broadcast %cst_154 : f32 to vector<2x32xf32>
    %539 = arith.subf %537, %538 : vector<2x32xf32>
    %540 = vector.extract_strided_slice %532 {offsets = [0, 96], sizes = [2, 32], strides = [1, 1]} : vector<2x128xf32> to vector<2x32xf32>
    %541 = arith.mulf %534, %455 : vector<2x32xf32>
    %542 = arith.mulf %533, %539 : vector<2x32xf32>
    %543 = arith.addf %541, %542 : vector<2x32xf32>
    %544 = math.tanh %543 : vector<2x32xf32>
    %545 = arith.mulf %540, %544 : vector<2x32xf32>
    %c10_155 = arith.constant 10 : index
    %c32_156 = arith.constant 32 : index
    %546 = vector.load %arg15[%c10_155, %c32_156] : memref<16x64xf32, #tpu.memory_space<vmem>>, vector<2x32xf32>
    tpu.vector_store %arg15[%c10_155, %c32_156], %545 {strides = array<i32>} : memref<16x64xf32, #tpu.memory_space<vmem>>, vector<2x32xf32>,
    %c2_157 = arith.constant 2 : index
    %c0_158 = arith.constant 0 : index
    %547 = vector.load %arg14[%c2_157, %c0_158] : memref<16x256xf32, #tpu.memory_space<vmem>>, vector<2x128xf32>
    %cst_159 = arith.constant dense<0.000000e+00> : vector<2x128xf32>
    %548 = tpu.matmul %479, %12, %cst_159 {dimension_numbers = #tpu.dot_dimension_numbers<[1], [0], [0], [1], [0, 0, 1, 1], [], []>} : vector<2x32xf32>, vector<32x128xf32>, vector<2x128xf32> -> vector<2x128xf32>
    %549 = arith.addf %547, %548 : vector<2x128xf32>
    %550 = arith.negf %549 : vector<2x128xf32>
    %551 = math.exp %550 : vector<2x128xf32>
    %cst_160 = arith.constant 1.000000e+00 : f32
    %552 = vector.broadcast %cst_160 : f32 to vector<2x128xf32>
    %553 = arith.addf %552, %551 : vector<2x128xf32>
    %554 = arith.divf %552, %553 : vector<2x128xf32>
    %555 = vector.extract_strided_slice %554 {offsets = [0, 0], sizes = [2, 32], strides = [1, 1]} : vector<2x128xf32> to vector<2x32xf32>
    %556 = vector.extract_strided_slice %554 {offsets = [0, 32], sizes = [2, 32], strides = [1, 1]} : vector<2x128xf32> to vector<2x32xf32>
    %557 = vector.extract_strided_slice %554 {offsets = [0, 64], sizes = [2, 32], strides = [1, 1]} : vector<2x128xf32> to vector<2x32xf32>
    %cst_161 = arith.constant 2.000000e+00 : f32
    %558 = vector.broadcast %cst_161 : f32 to vector<2x32xf32>
    %559 = arith.mulf %558, %557 : vector<2x32xf32>
    %cst_162 = arith.constant 1.000000e+00 : f32
    %560 = vector.broadcast %cst_162 : f32 to vector<2x32xf32>
    %561 = arith.subf %559, %560 : vector<2x32xf32>
    %562 = vector.extract_strided_slice %554 {offsets = [0, 96], sizes = [2, 32], strides = [1, 1]} : vector<2x128xf32> to vector<2x32xf32>
    %563 = arith.mulf %556, %477 : vector<2x32xf32>
    %564 = arith.mulf %555, %561 : vector<2x32xf32>
    %565 = arith.addf %563, %564 : vector<2x32xf32>
    %566 = math.tanh %565 : vector<2x32xf32>
    %567 = arith.mulf %562, %566 : vector<2x32xf32>
    %568 = tpu.concatenate %567, %501 in 1 : vector<2x32xf32>, vector<2x32xf32> -> vector<2x64xf32>
    %cst_163 = arith.constant dense<0.000000e+00> : vector<2x128xf32>
    %569 = tpu.matmul %568, %13, %cst_163 {dimension_numbers = #tpu.dot_dimension_numbers<[1], [0], [0], [1], [0, 0, 1, 1], [], []>} : vector<2x64xf32>, vector<64x128xf32>, vector<2x128xf32> -> vector<2x128xf32>
    %570 = vector.broadcast %14 : vector<1x128xf32> to vector<2x128xf32>
    %571 = arith.addf %569, %570 : vector<2x128xf32>
    %572 = arith.negf %571 : vector<2x128xf32>
    %573 = math.exp %572 : vector<2x128xf32>
    %cst_164 = arith.constant 1.000000e+00 : f32
    %574 = vector.broadcast %cst_164 : f32 to vector<2x128xf32>
    %575 = arith.addf %574, %573 : vector<2x128xf32>
    %576 = arith.divf %574, %575 : vector<2x128xf32>
    %577 = vector.extract_strided_slice %576 {offsets = [0, 0], sizes = [2, 32], strides = [1, 1]} : vector<2x128xf32> to vector<2x32xf32>
    %578 = vector.extract_strided_slice %576 {offsets = [0, 32], sizes = [2, 32], strides = [1, 1]} : vector<2x128xf32> to vector<2x32xf32>
    %579 = vector.extract_strided_slice %576 {offsets = [0, 64], sizes = [2, 32], strides = [1, 1]} : vector<2x128xf32> to vector<2x32xf32>
    %cst_165 = arith.constant 2.000000e+00 : f32
    %580 = vector.broadcast %cst_165 : f32 to vector<2x32xf32>
    %581 = arith.mulf %580, %579 : vector<2x32xf32>
    %cst_166 = arith.constant 1.000000e+00 : f32
    %582 = vector.broadcast %cst_166 : f32 to vector<2x32xf32>
    %583 = arith.subf %581, %582 : vector<2x32xf32>
    %584 = vector.extract_strided_slice %576 {offsets = [0, 96], sizes = [2, 32], strides = [1, 1]} : vector<2x128xf32> to vector<2x32xf32>
    %585 = arith.mulf %578, %499 : vector<2x32xf32>
    %586 = arith.mulf %577, %583 : vector<2x32xf32>
    %587 = arith.addf %585, %586 : vector<2x32xf32>
    %588 = math.tanh %587 : vector<2x32xf32>
    %589 = arith.mulf %584, %588 : vector<2x32xf32>
    %c2_167 = arith.constant 2 : index
    %c0_168 = arith.constant 0 : index
    %590 = vector.load %arg15[%c2_167, %c0_168] : memref<16x64xf32, #tpu.memory_space<vmem>>, vector<2x32xf32>
    tpu.vector_store %arg15[%c2_167, %c0_168], %589 {strides = array<i32>} : memref<16x64xf32, #tpu.memory_space<vmem>>, vector<2x32xf32>,
    %c12_169 = arith.constant 12 : index
    %c128_170 = arith.constant 128 : index
    %591 = vector.load %arg14[%c12_169, %c128_170] : memref<16x256xf32, #tpu.memory_space<vmem>>, vector<2x128xf32>
    %cst_171 = arith.constant dense<0.000000e+00> : vector<2x128xf32>
    %592 = tpu.matmul %523, %15, %cst_171 {dimension_numbers = #tpu.dot_dimension_numbers<[1], [0], [0], [1], [0, 0, 1, 1], [], []>} : vector<2x32xf32>, vector<32x128xf32>, vector<2x128xf32> -> vector<2x128xf32>
    %593 = arith.addf %591, %592 : vector<2x128xf32>
    %594 = arith.negf %593 : vector<2x128xf32>
    %595 = math.exp %594 : vector<2x128xf32>
    %cst_172 = arith.constant 1.000000e+00 : f32
    %596 = vector.broadcast %cst_172 : f32 to vector<2x128xf32>
    %597 = arith.addf %596, %595 : vector<2x128xf32>
    %598 = arith.divf %596, %597 : vector<2x128xf32>
    %599 = vector.extract_strided_slice %598 {offsets = [0, 0], sizes = [2, 32], strides = [1, 1]} : vector<2x128xf32> to vector<2x32xf32>
    %600 = vector.extract_strided_slice %598 {offsets = [0, 32], sizes = [2, 32], strides = [1, 1]} : vector<2x128xf32> to vector<2x32xf32>
    %601 = vector.extract_strided_slice %598 {offsets = [0, 64], sizes = [2, 32], strides = [1, 1]} : vector<2x128xf32> to vector<2x32xf32>
    %cst_173 = arith.constant 2.000000e+00 : f32
    %602 = vector.broadcast %cst_173 : f32 to vector<2x32xf32>
    %603 = arith.mulf %602, %601 : vector<2x32xf32>
    %cst_174 = arith.constant 1.000000e+00 : f32
    %604 = vector.broadcast %cst_174 : f32 to vector<2x32xf32>
    %605 = arith.subf %603, %604 : vector<2x32xf32>
    %606 = vector.extract_strided_slice %598 {offsets = [0, 96], sizes = [2, 32], strides = [1, 1]} : vector<2x128xf32> to vector<2x32xf32>
    %607 = arith.mulf %600, %521 : vector<2x32xf32>
    %608 = arith.mulf %599, %605 : vector<2x32xf32>
    %609 = arith.addf %607, %608 : vector<2x32xf32>
    %610 = math.tanh %609 : vector<2x32xf32>
    %611 = arith.mulf %606, %610 : vector<2x32xf32>
    %612 = tpu.concatenate %611, %545 in 1 : vector<2x32xf32>, vector<2x32xf32> -> vector<2x64xf32>
    %cst_175 = arith.constant dense<0.000000e+00> : vector<2x128xf32>
    %613 = tpu.matmul %612, %16, %cst_175 {dimension_numbers = #tpu.dot_dimension_numbers<[1], [0], [0], [1], [0, 0, 1, 1], [], []>} : vector<2x64xf32>, vector<64x128xf32>, vector<2x128xf32> -> vector<2x128xf32>
    %614 = vector.broadcast %17 : vector<1x128xf32> to vector<2x128xf32>
    %615 = arith.addf %613, %614 : vector<2x128xf32>
    %616 = arith.negf %615 : vector<2x128xf32>
    %617 = math.exp %616 : vector<2x128xf32>
    %cst_176 = arith.constant 1.000000e+00 : f32
    %618 = vector.broadcast %cst_176 : f32 to vector<2x128xf32>
    %619 = arith.addf %618, %617 : vector<2x128xf32>
    %620 = arith.divf %618, %619 : vector<2x128xf32>
    %621 = vector.extract_strided_slice %620 {offsets = [0, 0], sizes = [2, 32], strides = [1, 1]} : vector<2x128xf32> to vector<2x32xf32>
    %622 = vector.extract_strided_slice %620 {offsets = [0, 32], sizes = [2, 32], strides = [1, 1]} : vector<2x128xf32> to vector<2x32xf32>
    %623 = vector.extract_strided_slice %620 {offsets = [0, 64], sizes = [2, 32], strides = [1, 1]} : vector<2x128xf32> to vector<2x32xf32>
    %cst_177 = arith.constant 2.000000e+00 : f32
    %624 = vector.broadcast %cst_177 : f32 to vector<2x32xf32>
    %625 = arith.mulf %624, %623 : vector<2x32xf32>
    %cst_178 = arith.constant 1.000000e+00 : f32
    %626 = vector.broadcast %cst_178 : f32 to vector<2x32xf32>
    %627 = arith.subf %625, %626 : vector<2x32xf32>
    %628 = vector.extract_strided_slice %620 {offsets = [0, 96], sizes = [2, 32], strides = [1, 1]} : vector<2x128xf32> to vector<2x32xf32>
    %629 = arith.mulf %622, %543 : vector<2x32xf32>
    %630 = arith.mulf %621, %627 : vector<2x32xf32>
    %631 = arith.addf %629, %630 : vector<2x32xf32>
    %632 = math.tanh %631 : vector<2x32xf32>
    %633 = arith.mulf %628, %632 : vector<2x32xf32>
    %c12_179 = arith.constant 12 : index
    %c32_180 = arith.constant 32 : index
    %634 = vector.load %arg15[%c12_179, %c32_180] : memref<16x64xf32, #tpu.memory_space<vmem>>, vector<2x32xf32>
    tpu.vector_store %arg15[%c12_179, %c32_180], %633 {strides = array<i32>} : memref<16x64xf32, #tpu.memory_space<vmem>>, vector<2x32xf32>,
    %c0_181 = arith.constant 0 : index
    %c0_182 = arith.constant 0 : index
    %635 = vector.load %arg14[%c0_181, %c0_182] : memref<16x256xf32, #tpu.memory_space<vmem>>, vector<2x128xf32>
    %cst_183 = arith.constant dense<0.000000e+00> : vector<2x128xf32>
    %636 = tpu.matmul %567, %12, %cst_183 {dimension_numbers = #tpu.dot_dimension_numbers<[1], [0], [0], [1], [0, 0, 1, 1], [], []>} : vector<2x32xf32>, vector<32x128xf32>, vector<2x128xf32> -> vector<2x128xf32>
    %637 = arith.addf %635, %636 : vector<2x128xf32>
    %638 = arith.negf %637 : vector<2x128xf32>
    %639 = math.exp %638 : vector<2x128xf32>
    %cst_184 = arith.constant 1.000000e+00 : f32
    %640 = vector.broadcast %cst_184 : f32 to vector<2x128xf32>
    %641 = arith.addf %640, %639 : vector<2x128xf32>
    %642 = arith.divf %640, %641 : vector<2x128xf32>
    %643 = vector.extract_strided_slice %642 {offsets = [0, 0], sizes = [2, 32], strides = [1, 1]} : vector<2x128xf32> to vector<2x32xf32>
    %644 = vector.extract_strided_slice %642 {offsets = [0, 32], sizes = [2, 32], strides = [1, 1]} : vector<2x128xf32> to vector<2x32xf32>
    %645 = vector.extract_strided_slice %642 {offsets = [0, 64], sizes = [2, 32], strides = [1, 1]} : vector<2x128xf32> to vector<2x32xf32>
    %cst_185 = arith.constant 2.000000e+00 : f32
    %646 = vector.broadcast %cst_185 : f32 to vector<2x32xf32>
    %647 = arith.mulf %646, %645 : vector<2x32xf32>
    %cst_186 = arith.constant 1.000000e+00 : f32
    %648 = vector.broadcast %cst_186 : f32 to vector<2x32xf32>
    %649 = arith.subf %647, %648 : vector<2x32xf32>
    %650 = vector.extract_strided_slice %642 {offsets = [0, 96], sizes = [2, 32], strides = [1, 1]} : vector<2x128xf32> to vector<2x32xf32>
    %651 = arith.mulf %644, %565 : vector<2x32xf32>
    %652 = arith.mulf %643, %649 : vector<2x32xf32>
    %653 = arith.addf %651, %652 : vector<2x32xf32>
    %654 = math.tanh %653 : vector<2x32xf32>
    %655 = arith.mulf %650, %654 : vector<2x32xf32>
    %656 = tpu.concatenate %655, %589 in 1 : vector<2x32xf32>, vector<2x32xf32> -> vector<2x64xf32>
    %cst_187 = arith.constant dense<0.000000e+00> : vector<2x128xf32>
    %657 = tpu.matmul %656, %13, %cst_187 {dimension_numbers = #tpu.dot_dimension_numbers<[1], [0], [0], [1], [0, 0, 1, 1], [], []>} : vector<2x64xf32>, vector<64x128xf32>, vector<2x128xf32> -> vector<2x128xf32>
    %658 = vector.broadcast %14 : vector<1x128xf32> to vector<2x128xf32>
    %659 = arith.addf %657, %658 : vector<2x128xf32>
    %660 = arith.negf %659 : vector<2x128xf32>
    %661 = math.exp %660 : vector<2x128xf32>
    %cst_188 = arith.constant 1.000000e+00 : f32
    %662 = vector.broadcast %cst_188 : f32 to vector<2x128xf32>
    %663 = arith.addf %662, %661 : vector<2x128xf32>
    %664 = arith.divf %662, %663 : vector<2x128xf32>
    %665 = vector.extract_strided_slice %664 {offsets = [0, 0], sizes = [2, 32], strides = [1, 1]} : vector<2x128xf32> to vector<2x32xf32>
    %666 = vector.extract_strided_slice %664 {offsets = [0, 32], sizes = [2, 32], strides = [1, 1]} : vector<2x128xf32> to vector<2x32xf32>
    %667 = vector.extract_strided_slice %664 {offsets = [0, 64], sizes = [2, 32], strides = [1, 1]} : vector<2x128xf32> to vector<2x32xf32>
    %cst_189 = arith.constant 2.000000e+00 : f32
    %668 = vector.broadcast %cst_189 : f32 to vector<2x32xf32>
    %669 = arith.mulf %668, %667 : vector<2x32xf32>
    %cst_190 = arith.constant 1.000000e+00 : f32
    %670 = vector.broadcast %cst_190 : f32 to vector<2x32xf32>
    %671 = arith.subf %669, %670 : vector<2x32xf32>
    %672 = vector.extract_strided_slice %664 {offsets = [0, 96], sizes = [2, 32], strides = [1, 1]} : vector<2x128xf32> to vector<2x32xf32>
    %673 = arith.mulf %666, %587 : vector<2x32xf32>
    %674 = arith.mulf %665, %671 : vector<2x32xf32>
    %675 = arith.addf %673, %674 : vector<2x32xf32>
    %676 = math.tanh %675 : vector<2x32xf32>
    %677 = arith.mulf %672, %676 : vector<2x32xf32>
    %c0_191 = arith.constant 0 : index
    %c0_192 = arith.constant 0 : index
    %678 = vector.load %arg15[%c0_191, %c0_192] : memref<16x64xf32, #tpu.memory_space<vmem>>, vector<2x32xf32>
    tpu.vector_store %arg15[%c0_191, %c0_192], %677 {strides = array<i32>} : memref<16x64xf32, #tpu.memory_space<vmem>>, vector<2x32xf32>,
    %c14_193 = arith.constant 14 : index
    %c128_194 = arith.constant 128 : index
    %679 = vector.load %arg14[%c14_193, %c128_194] : memref<16x256xf32, #tpu.memory_space<vmem>>, vector<2x128xf32>
    %cst_195 = arith.constant dense<0.000000e+00> : vector<2x128xf32>
    %680 = tpu.matmul %611, %15, %cst_195 {dimension_numbers = #tpu.dot_dimension_numbers<[1], [0], [0], [1], [0, 0, 1, 1], [], []>} : vector<2x32xf32>, vector<32x128xf32>, vector<2x128xf32> -> vector<2x128xf32>
    %681 = arith.addf %679, %680 : vector<2x128xf32>
    %682 = arith.negf %681 : vector<2x128xf32>
    %683 = math.exp %682 : vector<2x128xf32>
    %cst_196 = arith.constant 1.000000e+00 : f32
    %684 = vector.broadcast %cst_196 : f32 to vector<2x128xf32>
    %685 = arith.addf %684, %683 : vector<2x128xf32>
    %686 = arith.divf %684, %685 : vector<2x128xf32>
    %687 = vector.extract_strided_slice %686 {offsets = [0, 0], sizes = [2, 32], strides = [1, 1]} : vector<2x128xf32> to vector<2x32xf32>
    %688 = vector.extract_strided_slice %686 {offsets = [0, 32], sizes = [2, 32], strides = [1, 1]} : vector<2x128xf32> to vector<2x32xf32>
    %689 = vector.extract_strided_slice %686 {offsets = [0, 64], sizes = [2, 32], strides = [1, 1]} : vector<2x128xf32> to vector<2x32xf32>
    %cst_197 = arith.constant 2.000000e+00 : f32
    %690 = vector.broadcast %cst_197 : f32 to vector<2x32xf32>
    %691 = arith.mulf %690, %689 : vector<2x32xf32>
    %cst_198 = arith.constant 1.000000e+00 : f32
    %692 = vector.broadcast %cst_198 : f32 to vector<2x32xf32>
    %693 = arith.subf %691, %692 : vector<2x32xf32>
    %694 = vector.extract_strided_slice %686 {offsets = [0, 96], sizes = [2, 32], strides = [1, 1]} : vector<2x128xf32> to vector<2x32xf32>
    %695 = arith.mulf %688, %609 : vector<2x32xf32>
    %696 = arith.mulf %687, %693 : vector<2x32xf32>
    %697 = arith.addf %695, %696 : vector<2x32xf32>
    %698 = math.tanh %697 : vector<2x32xf32>
    %699 = arith.mulf %694, %698 : vector<2x32xf32>
    %700 = tpu.concatenate %699, %633 in 1 : vector<2x32xf32>, vector<2x32xf32> -> vector<2x64xf32>
    %cst_199 = arith.constant dense<0.000000e+00> : vector<2x128xf32>
    %701 = tpu.matmul %700, %16, %cst_199 {dimension_numbers = #tpu.dot_dimension_numbers<[1], [0], [0], [1], [0, 0, 1, 1], [], []>} : vector<2x64xf32>, vector<64x128xf32>, vector<2x128xf32> -> vector<2x128xf32>
    %702 = vector.broadcast %17 : vector<1x128xf32> to vector<2x128xf32>
    %703 = arith.addf %701, %702 : vector<2x128xf32>
    %704 = arith.negf %703 : vector<2x128xf32>
    %705 = math.exp %704 : vector<2x128xf32>
    %cst_200 = arith.constant 1.000000e+00 : f32
    %706 = vector.broadcast %cst_200 : f32 to vector<2x128xf32>
    %707 = arith.addf %706, %705 : vector<2x128xf32>
    %708 = arith.divf %706, %707 : vector<2x128xf32>
    %709 = vector.extract_strided_slice %708 {offsets = [0, 0], sizes = [2, 32], strides = [1, 1]} : vector<2x128xf32> to vector<2x32xf32>
    %710 = vector.extract_strided_slice %708 {offsets = [0, 32], sizes = [2, 32], strides = [1, 1]} : vector<2x128xf32> to vector<2x32xf32>
    %711 = vector.extract_strided_slice %708 {offsets = [0, 64], sizes = [2, 32], strides = [1, 1]} : vector<2x128xf32> to vector<2x32xf32>
    %cst_201 = arith.constant 2.000000e+00 : f32
    %712 = vector.broadcast %cst_201 : f32 to vector<2x32xf32>
    %713 = arith.mulf %712, %711 : vector<2x32xf32>
    %cst_202 = arith.constant 1.000000e+00 : f32
    %714 = vector.broadcast %cst_202 : f32 to vector<2x32xf32>
    %715 = arith.subf %713, %714 : vector<2x32xf32>
    %716 = vector.extract_strided_slice %708 {offsets = [0, 96], sizes = [2, 32], strides = [1, 1]} : vector<2x128xf32> to vector<2x32xf32>
    %717 = arith.mulf %710, %631 : vector<2x32xf32>
    %718 = arith.mulf %709, %715 : vector<2x32xf32>
    %719 = arith.addf %717, %718 : vector<2x32xf32>
    %720 = math.tanh %719 : vector<2x32xf32>
    %721 = arith.mulf %716, %720 : vector<2x32xf32>
    %c14_203 = arith.constant 14 : index
    %c32_204 = arith.constant 32 : index
    %722 = vector.load %arg15[%c14_203, %c32_204] : memref<16x64xf32, #tpu.memory_space<vmem>>, vector<2x32xf32>
    tpu.vector_store %arg15[%c14_203, %c32_204], %721 {strides = array<i32>} : memref<16x64xf32, #tpu.memory_space<vmem>>, vector<2x32xf32>,
    %c0_205 = arith.constant 0 : index
    %c0_206 = arith.constant 0 : index
    %723 = vector.load %arg15[%c0_205, %c0_206] : memref<16x64xf32, #tpu.memory_space<vmem>>, vector<16x64xf32>
    %c0_207 = arith.constant 0 : index
    %c0_208 = arith.constant 0 : index
    %724 = vector.load %arg11[%c0_207, %c0_208] : memref<64x12xf32, #tpu.memory_space<vmem>>, vector<64x12xf32>
    %cst_209 = arith.constant dense<0.000000e+00> : vector<16x12xf32>
    %725 = tpu.matmul %723, %724, %cst_209 {dimension_numbers = #tpu.dot_dimension_numbers<[1], [0], [0], [1], [0, 0, 1, 1], [], []>} : vector<16x64xf32>, vector<64x12xf32>, vector<16x12xf32> -> vector<16x12xf32>
    %c0_210 = arith.constant 0 : index
    %c0_211 = arith.constant 0 : index
    %726 = vector.load %arg12[%c0_210, %c0_211] : memref<1x12xf32, #tpu.memory_space<vmem>>, vector<1x12xf32>
    %727 = vector.broadcast %726 : vector<1x12xf32> to vector<16x12xf32>
    %728 = arith.addf %725, %727 : vector<16x12xf32>
    %729 = arith.negf %728 : vector<16x12xf32>
    %730 = math.exp %729 : vector<16x12xf32>
    %cst_212 = arith.constant 1.000000e+00 : f32
    %731 = vector.broadcast %cst_212 : f32 to vector<16x12xf32>
    %732 = arith.addf %731, %730 : vector<16x12xf32>
    %733 = arith.divf %731, %732 : vector<16x12xf32>
    %c0_213 = arith.constant 0 : index
    %c0_214 = arith.constant 0 : index
    %734 = vector.load %arg13[%c0_213, %c0_214] : memref<16x12xf32, #tpu.memory_space<vmem>>, vector<16x12xf32>
    tpu.vector_store %arg13[%c0_213, %c0_214], %733 {strides = array<i32>} : memref<16x12xf32, #tpu.memory_space<vmem>>, vector<16x12xf32>,
    return
  }
  func.func @transform_0(%arg0: i32) -> (i32, i32) {
    %c0_i32 = arith.constant 0 : i32
    %c0_i32_0 = arith.constant 0 : i32
    %c0_i32_1 = arith.constant 0 : i32
    return %c0_i32, %c0_i32_0 : i32, i32
  }
  func.func @transform_1(%arg0: i32) -> (i32, i32) {
    %c0_i32 = arith.constant 0 : i32
    %c0_i32_0 = arith.constant 0 : i32
    %c0_i32_1 = arith.constant 0 : i32
    return %c0_i32, %c0_i32_0 : i32, i32
  }
  func.func @transform_2(%arg0: i32) -> (i32, i32) {
    %c0_i32 = arith.constant 0 : i32
    %c0_i32_0 = arith.constant 0 : i32
    %c0_i32_1 = arith.constant 0 : i32
    return %c0_i32, %c0_i32_0 : i32, i32
  }
  func.func @transform_3(%arg0: i32) -> (i32, i32) {
    %c0_i32 = arith.constant 0 : i32
    %c0_i32_0 = arith.constant 0 : i32
    %c0_i32_1 = arith.constant 0 : i32
    return %c0_i32, %c0_i32_0 : i32, i32
  }
  func.func @transform_4(%arg0: i32) -> (i32, i32) {
    %c0_i32 = arith.constant 0 : i32
    %c0_i32_0 = arith.constant 0 : i32
    %c0_i32_1 = arith.constant 0 : i32
    return %c0_i32, %c0_i32_0 : i32, i32
  }
  func.func @transform_5(%arg0: i32) -> (i32, i32) {
    %c0_i32 = arith.constant 0 : i32
    %c0_i32_0 = arith.constant 0 : i32
    %c0_i32_1 = arith.constant 0 : i32
    return %c0_i32, %c0_i32_0 : i32, i32
  }
  func.func @transform_6(%arg0: i32) -> (i32, i32) {
    %c0_i32 = arith.constant 0 : i32
    %c0_i32_0 = arith.constant 0 : i32
    %c0_i32_1 = arith.constant 0 : i32
    return %c0_i32, %c0_i32_0 : i32, i32
  }
  func.func @transform_7(%arg0: i32) -> (i32, i32) {
    %c0_i32 = arith.constant 0 : i32
    %c0_i32_0 = arith.constant 0 : i32
    %c0_i32_1 = arith.constant 0 : i32
    return %c0_i32, %c0_i32_0 : i32, i32
  }
  func.func @transform_8(%arg0: i32) -> (i32, i32) {
    %c0_i32 = arith.constant 0 : i32
    %c0_i32_0 = arith.constant 0 : i32
    %c0_i32_1 = arith.constant 0 : i32
    return %c0_i32, %c0_i32_0 : i32, i32
  }
  func.func @transform_9(%arg0: i32) -> (i32, i32) {
    %c0_i32 = arith.constant 0 : i32
    %c0_i32_0 = arith.constant 0 : i32
    %c0_i32_1 = arith.constant 0 : i32
    return %c0_i32, %c0_i32_0 : i32, i32
  }
  func.func @transform_10(%arg0: i32) -> (i32, i32) {
    %c0_i32 = arith.constant 0 : i32
    %c0_i32_0 = arith.constant 0 : i32
    %c0_i32_1 = arith.constant 0 : i32
    return %c0_i32, %c0_i32_0 : i32, i32
  }
  func.func @transform_11(%arg0: i32) -> (i32, i32) {
    %c0_i32 = arith.constant 0 : i32
    %c0_i32_0 = arith.constant 0 : i32
    %c0_i32_1 = arith.constant 0 : i32
    return %c0_i32, %c0_i32_0 : i32, i32
  }
  func.func @transform_12(%arg0: i32) -> (i32, i32) {
    %c0_i32 = arith.constant 0 : i32
    %c0_i32_0 = arith.constant 0 : i32
    %c0_i32_1 = arith.constant 0 : i32
    return %c0_i32, %c0_i32_0 : i32, i32
  }
}

</mosaic_0001>

<llo_original>
// kernel: tpu_custom_call.1
$region0: #{tpu_custom_call.1}
  #allocation0 [shape = 'u32[]', space=smem, size = 0x4, offset = 0x4, fixed_abs, tag = 'smem constant byte address 0x4 - core index']
  #allocation1 [shape = 'u32[144,128]{1,0:T(1,128)}', space=vmem, size = 0x12000, scoped, tag = 'internal scratch']
  #allocation2 [shape = 'f32[16,256]{1,0:T(8,128)}', space=vmem, size = 0x4000, scoped, tag = 'scratch operand']
  #allocation3 [shape = 'f32[16,64]{1,0:T(8,128)}', space=vmem, size = 0x2000, scoped, tag = 'scratch operand']
  %s0 = inlined_call_operand.hbm [shape: f32[16,12], index: 0, kind: input, shape index: {}]
  %s1 = inlined_call_operand.hbm [shape: f32[1,12], index: 1, kind: input, shape index: {}]
  %s2 = inlined_call_operand.vmem [shape: f32[12,256], index: 2, kind: input, shape index: {}]
  %s3 = inlined_call_operand.vmem [shape: f32[1,256], index: 3, kind: input, shape index: {}]
  %s4 = inlined_call_operand.hbm [shape: f32[32,128], index: 4, kind: input, shape index: {}]
  %s5 = inlined_call_operand.vmem [shape: f32[64,128], index: 5, kind: input, shape index: {}]
  %s6 = inlined_call_operand.hbm [shape: f32[1,128], index: 6, kind: input, shape index: {}]
  %s7 = inlined_call_operand.hbm [shape: f32[32,128], index: 7, kind: input, shape index: {}]
  %s8 = inlined_call_operand.hbm [shape: f32[64,128], index: 8, kind: input, shape index: {}]
  %s9 = inlined_call_operand.hbm [shape: f32[1,128], index: 9, kind: input, shape index: {}]
  %s10 = inlined_call_operand.vmem [shape: f32[64,12], index: 10, kind: input, shape index: {}]
  %s11 = inlined_call_operand.vmem [shape: f32[1,12], index: 11, kind: input, shape index: {}]
  %s12 = inlined_call_operand.hbm [shape: f32[16,12], index: 12, kind: output, shape index: {}]
  %s13 = sld [smem:[#allocation0]]
  $region86: #{tpu_custom_call.1} parent=0
    _
  %s15 = ssub.s32 1, %s13
  %s16 = scalar_select 0, %s15, %s13
  $region1: #{tpu_custom_call.1} parent=0
    #allocation4 [shape = 'u8[8192]{0}', space=vmem, size = 0x2000, scoped, tag = 'input window, operand 0, single buffered']
    #allocation5 [shape = 's32[1]{0}', space=sflag, size = 0x4, scoped, tag = 'scoped memory for tpu_custom_call.1']
    #allocation6 [shape = 's32[1]{0}', space=sflag, size = 0x4, scoped, tag = 'scoped memory for tpu_custom_call.1']
    #allocation7 [shape = 'u8[512]{0}', space=vmem, size = 0x400, scoped, tag = 'input window, operand 1, single buffered']
    #allocation8 [shape = 's32[1]{0}', space=sflag, size = 0x4, scoped, tag = 'scoped memory for tpu_custom_call.1']
    #allocation9 [shape = 'u8[16384]{0}', space=vmem, size = 0x4000, scoped, tag = 'input window, operand 4, single buffered']
    #allocation10 [shape = 'u8[512]{0}', space=vmem, size = 0x400, scoped, tag = 'input window, operand 6, single buffered']
    #allocation11 [shape = 's32[1]{0}', space=sflag, size = 0x4, scoped, tag = 'scoped memory for tpu_custom_call.1']
    #allocation12 [shape = 'u8[16384]{0}', space=vmem, size = 0x4000, scoped, tag = 'input window, operand 7, single buffered']
    #allocation13 [shape = 'u8[32768]{0}', space=vmem, size = 0x8000, scoped, tag = 'input window, operand 8, single buffered']
    #allocation14 [shape = 's32[1]{0}', space=sflag, size = 0x4, scoped, tag = 'scoped memory for tpu_custom_call.1']
    #allocation15 [shape = 'u8[512]{0}', space=vmem, size = 0x400, scoped, tag = 'input window, operand 9, single buffered']
    #allocation16 [shape = 'u8[8192]{0}', space=vmem, size = 0x2000, scoped, tag = 'output window, operand 0, single buffered']
    %17 = vsyncpa [#allocation5], 0
    %18 = vsyncpa [#allocation8], 0
    %19 = vsyncpa [#allocation11], 0
    %20 = vsyncpa [#allocation14], 0
    %21 = vsyncpa [#allocation6], 0
    // Predicated region
    $region2: #{tpu_custom_call.1} parent=1 // pred_check
      _
    $region3: #{tpu_custom_call.1} parent=1 // pred_check_branch
      %23 = sbr.rel (0) target = $region5
    $region4: #{tpu_custom_call.1} parent=1 // pred_region
      %s25 = ssub.s32 256, 256
      %26 = vsyncadd [#allocation5], %s25
      %s27 = sshll.u32 [#allocation4], 4
      %s28 = int_to_ptr.vmem [resolvable:$true] %s27
      %33 = dma.hbm_to_vmem [thread:$0]  %s0, 256, %s28, [#allocation5], 128, 128, 8
    $region5: #{tpu_custom_call.1} parent=1 // pred_fallthru
      _
    // Predicated region
    $region6: #{tpu_custom_call.1} parent=1 // pred_check
      _
    $region7: #{tpu_custom_call.1} parent=1 // pred_check_branch
      %35 = sbr.rel (0) target = $region9
    $region8: #{tpu_custom_call.1} parent=1 // pred_region
      %s37 = ssub.s32 16, 16
      %38 = vsyncadd [#allocation8], %s37
      %s40 = sshll.u32 [#allocation7], 4
      %s41 = int_to_ptr.vmem [resolvable:$true] %s40
      %43 = dma.hbm_to_vmem [thread:$0]  %s1, 16, %s41, [#allocation8]
    $region9: #{tpu_custom_call.1} parent=1 // pred_fallthru
      _
    // Predicated region
    $region10: #{tpu_custom_call.1} parent=1 // pred_check
      _
    $region11: #{tpu_custom_call.1} parent=1 // pred_check_branch
      %45 = sbr.rel (0) target = $region13
    $region12: #{tpu_custom_call.1} parent=1 // pred_region
      _
    $region13: #{tpu_custom_call.1} parent=1 // pred_fallthru
      _
    // Predicated region
    $region14: #{tpu_custom_call.1} parent=1 // pred_check
      _
    $region15: #{tpu_custom_call.1} parent=1 // pred_check_branch
      %47 = sbr.rel (0) target = $region17
    $region16: #{tpu_custom_call.1} parent=1 // pred_region
      _
    $region17: #{tpu_custom_call.1} parent=1 // pred_fallthru
      _
    // Predicated region
    $region18: #{tpu_custom_call.1} parent=1 // pred_check
      _
    $region19: #{tpu_custom_call.1} parent=1 // pred_check_branch
      %49 = sbr.rel (0) target = $region21
    $region20: #{tpu_custom_call.1} parent=1 // pred_region
      %s51 = ssub.s32 512, 512
      %52 = vsyncadd [#allocation8], %s51
      %s53 = sshll.u32 [#allocation9], 4
      %s54 = int_to_ptr.vmem [resolvable:$true] %s53
      %59 = dma.hbm_to_vmem [thread:$0]  %s4, 512, %s54, [#allocation8], 128, 128, 8
    $region21: #{tpu_custom_call.1} parent=1 // pred_fallthru
      _
    // Predicated region
    $region22: #{tpu_custom_call.1} parent=1 // pred_check
      _
    $region23: #{tpu_custom_call.1} parent=1 // pred_check_branch
      %61 = sbr.rel (0) target = $region25
    $region24: #{tpu_custom_call.1} parent=1 // pred_region
      _
    $region25: #{tpu_custom_call.1} parent=1 // pred_fallthru
      _
    // Predicated region
    $region26: #{tpu_custom_call.1} parent=1 // pred_check
      _
    $region27: #{tpu_custom_call.1} parent=1 // pred_check_branch
      %63 = sbr.rel (0) target = $region29
    $region28: #{tpu_custom_call.1} parent=1 // pred_region
      %s65 = ssub.s32 16, 16
      %66 = vsyncadd [#allocation11], %s65
      %s68 = sshll.u32 [#allocation10], 4
      %s69 = int_to_ptr.vmem [resolvable:$true] %s68
      %71 = dma.hbm_to_vmem [thread:$0]  %s6, 16, %s69, [#allocation11]
    $region29: #{tpu_custom_call.1} parent=1 // pred_fallthru
      _
    // Predicated region
    $region30: #{tpu_custom_call.1} parent=1 // pred_check
      _
    $region31: #{tpu_custom_call.1} parent=1 // pred_check_branch
      %73 = sbr.rel (0) target = $region33
    $region32: #{tpu_custom_call.1} parent=1 // pred_region
      %s75 = ssub.s32 512, 512
      %76 = vsyncadd [#allocation11], %s75
      %s77 = sshll.u32 [#allocation12], 4
      %s78 = int_to_ptr.vmem [resolvable:$true] %s77
      %83 = dma.hbm_to_vmem [thread:$0]  %s7, 512, %s78, [#allocation11], 128, 128, 8
    $region33: #{tpu_custom_call.1} parent=1 // pred_fallthru
      _
    // Predicated region
    $region34: #{tpu_custom_call.1} parent=1 // pred_check
      _
    $region35: #{tpu_custom_call.1} parent=1 // pred_check_branch
      %85 = sbr.rel (0) target = $region37
    $region36: #{tpu_custom_call.1} parent=1 // pred_region
      %s87 = ssub.s32 1024, 1024
      %88 = vsyncadd [#allocation14], %s87
      %s89 = sshll.u32 [#allocation13], 4
      %s90 = int_to_ptr.vmem [resolvable:$true] %s89
      %95 = dma.hbm_to_vmem [thread:$0]  %s8, 1024, %s90, [#allocation14], 128, 128, 8
    $region37: #{tpu_custom_call.1} parent=1 // pred_fallthru
      _
    // Predicated region
    $region38: #{tpu_custom_call.1} parent=1 // pred_check
      _
    $region39: #{tpu_custom_call.1} parent=1 // pred_check_branch
      %97 = sbr.rel (0) target = $region41
    $region40: #{tpu_custom_call.1} parent=1 // pred_region
      %s99 = ssub.s32 16, 16
      %100 = vsyncadd [#allocation14], %s99
      %s102 = sshll.u32 [#allocation15], 4
      %s103 = int_to_ptr.vmem [resolvable:$true] %s102
      %105 = dma.hbm_to_vmem [thread:$0]  %s9, 16, %s103, [#allocation14]
    $region41: #{tpu_custom_call.1} parent=1 // pred_fallthru
      _
    // Predicated region
    $region42: #{tpu_custom_call.1} parent=1 // pred_check
      _
    $region43: #{tpu_custom_call.1} parent=1 // pred_check_branch
      %107 = sbr.rel (0) target = $region45
    $region44: #{tpu_custom_call.1} parent=1 // pred_region
      _
    $region45: #{tpu_custom_call.1} parent=1 // pred_fallthru
      _
    // Predicated region
    $region46: #{tpu_custom_call.1} parent=1 // pred_check
      _
    $region47: #{tpu_custom_call.1} parent=1 // pred_check_branch
      %109 = sbr.rel (0) target = $region49
    $region48: #{tpu_custom_call.1} parent=1 // pred_region
      _
    $region49: #{tpu_custom_call.1} parent=1 // pred_fallthru
      _
    // Predicated region
    $region50: #{tpu_custom_call.1} parent=1 // pred_check
      _
    $region51: #{tpu_custom_call.1} parent=1 // pred_check_branch
      %111 = sbr.rel (0) target = $region53
    $region52: #{tpu_custom_call.1} parent=1 // pred_region
      %112 = dma.done [#allocation5], 256
    $region53: #{tpu_custom_call.1} parent=1 // pred_fallthru
      _
    // Predicated region
    $region54: #{tpu_custom_call.1} parent=1 // pred_check
      _
    $region55: #{tpu_custom_call.1} parent=1 // pred_check_branch
      %114 = sbr.rel (0) target = $region57
    $region56: #{tpu_custom_call.1} parent=1 // pred_region
      %115 = dma.done [#allocation8], 16
    $region57: #{tpu_custom_call.1} parent=1 // pred_fallthru
      _
    // Predicated region
    $region58: #{tpu_custom_call.1} parent=1 // pred_check
      _
    $region59: #{tpu_custom_call.1} parent=1 // pred_check_branch
      %117 = sbr.rel (0) target = $region61
    $region60: #{tpu_custom_call.1} parent=1 // pred_region
      %118 = dma.done [#allocation8], 512
    $region61: #{tpu_custom_call.1} parent=1 // pred_fallthru
      _
    // Predicated region
    $region62: #{tpu_custom_call.1} parent=1 // pred_check
      _
    $region63: #{tpu_custom_call.1} parent=1 // pred_check_branch
      %120 = sbr.rel (0) target = $region65
    $region64: #{tpu_custom_call.1} parent=1 // pred_region
      %121 = dma.done [#allocation11], 16
    $region65: #{tpu_custom_call.1} parent=1 // pred_fallthru
      _
    // Predicated region
    $region66: #{tpu_custom_call.1} parent=1 // pred_check
      _
    $region67: #{tpu_custom_call.1} parent=1 // pred_check_branch
      %123 = sbr.rel (0) target = $region69
    $region68: #{tpu_custom_call.1} parent=1 // pred_region
      %124 = dma.done [#allocation11], 512
    $region69: #{tpu_custom_call.1} parent=1 // pred_fallthru
      _
    // Predicated region
    $region70: #{tpu_custom_call.1} parent=1 // pred_check
      _
    $region71: #{tpu_custom_call.1} parent=1 // pred_check_branch
      %126 = sbr.rel (0) target = $region73
    $region72: #{tpu_custom_call.1} parent=1 // pred_region
      %127 = dma.done [#allocation14], 1024
    $region73: #{tpu_custom_call.1} parent=1 // pred_fallthru
      _
    // Predicated region
    $region74: #{tpu_custom_call.1} parent=1 // pred_check
      _
    $region75: #{tpu_custom_call.1} parent=1 // pred_check_branch
      %129 = sbr.rel (0) target = $region77
    $region76: #{tpu_custom_call.1} parent=1 // pred_region
      %130 = dma.done [#allocation14], 16
    $region77: #{tpu_custom_call.1} parent=1 // pred_fallthru
      _
    %v131 = vld [vmem:[#allocation4] sm:$0xff]
    %v132 = vld [vmem:[#allocation4 + $0x8] sm:$0xff]
    %v133 = vld [vmem:[#allocation7] sm:$0x1]
    %v135 = vlaneseq
    %v136 = vshrl.u32 %v135, 7
    %v137 = vsub.s32 0, %v136
    %v138 = vrot.slane %v133, %v137
    %vm140 = vcmp.gt.f32.partialorder %v131, %v138
    %vm141 = vcmp.gt.f32.partialorder %v132, %v138
    %v142 = vsel %vm140, 1, 0
    %v143 = vsel %vm141, 1, 0
    %v144 = vcvt.s32.f32 %v142
    %v145 = vcvt.s32.f32 %v143
    %v146 = vld [vmem:[%s2] sm:$0xff]
    %v147 = vld [vmem:[%s2 + $0x8] sm:$0xff]
    %v148 = vld [vmem:[%s2 + $0x10] sm:$0xf]
    %v149 = vld [vmem:[%s2 + $0x18] sm:$0xf]
    %v150 = vld [vmem:[%s3] sm:$0x3]
    %v152 = vlaneseq
    %v153 = vshrl.u32 %v152, 7
    %v154 = vsub.s32 0, %v153
    %v155 = vrot.slane %v150, %v154
    %v156 = vlaneseq
    %v157 = vshrl.u32 %v156, 7
    %v158 = vsub.s32 1, %v157
    %v159 = vrot.slane %v150, %v158
    %vm162 = vcmask 97280
    %v164 = vsel %vm162, %v144, 0
    %v167 = vsel %vm162, %v145, 0
    %vm169 = vcmask 1043456
    %v171 = vsel %vm169, %v148, 0
    %v174 = vsel %vm169, %v149, 0
    %176 = vmatprep.subr.mxu0 %v147
    %177 = vmatpush1.msra.mxu0 %v146
    %178 = vmatprep.subr.mxu0 %v174
    %179 = vmatpush1.msra.mxu0 %v171
    %180 = vmatprep.subr.mxu0 0.0
    %181 = vmatpush1.msra.mxu0 0.0
    %182 = vmatprep.subr.mxu0 0.0
    %183 = vmatpush1.msra.mxu0 0.0
    %184 = vmatprep.subr.mxu0 0.0
    %185 = vmatpush1.msra.mxu0 0.0
    %186 = vmatprep.subr.mxu0 0.0
    %187 = vmatpush1.msra.mxu0 0.0
    %188 = vmatprep.subr.mxu0 0.0
    %189 = vmatpush1.msra.mxu0 0.0
    %190 = vmatprep.subr.mxu0 0.0
    %191 = vmatpush1.msra.mxu0 0.0
    %192 = vmatprep.subr.mxu0 0.0
    %193 = vmatpush1.msra.mxu0 0.0
    %194 = vmatprep.subr.mxu0 0.0
    %195 = vmatpush1.msra.mxu0 0.0
    %196 = vmatprep.subr.mxu0 0.0
    %197 = vmatpush1.msra.mxu0 0.0
    %198 = vmatprep.subr.mxu0 0.0
    %199 = vmatpush1.msra.mxu0 0.0
    %200 = vmatprep.subr.mxu0 0.0
    %201 = vmatpush1.msra.mxu0 0.0
    %202 = vmatprep.subr.mxu0 0.0
    %203 = vmatpush1.msra.mxu0 0.0
    %204 = vmatprep.subr.mxu0 0.0
    %205 = vmatpush1.msra.mxu0 0.0
    %206 = vmatprep.subr.mxu0 0.0
    %207 = vmatpush1.msra.mxu0 0.0
    %208 = vmatprep.subr.mxu0 0.0
    %209 = vmatpush1.msra.mxu0 0.0
    %210 = vmatprep.subr.mxu0 0.0
    %211 = vmatpush1.msra.mxu0 0.0
    %212 = vmatprep.subr.mxu0 0.0
    %213 = vmatpush1.msra.mxu0 0.0
    %214 = vmatprep.subr.mxu0 0.0
    %215 = vmatpush1.msra.mxu0 0.0
    %216 = vmatprep.subr.mxu0 0.0
    %217 = vmatpush1.msra.mxu0 0.0
    %218 = vmatprep.subr.mxu0 0.0
    %219 = vmatpush1.msra.mxu0 0.0
    %220 = vmatprep.subr.mxu0 0.0
    %221 = vmatpush1.msra.mxu0 0.0
    %222 = vmatprep.subr.mxu0 0.0
    %223 = vmatpush1.msra.mxu0 0.0
    %224 = vmatprep.subr.mxu0 0.0
    %225 = vmatpush1.msra.mxu0 0.0
    %226 = vmatprep.subr.mxu0 0.0
    %227 = vmatpush1.msra.mxu0 0.0
    %228 = vmatprep.subr.mxu0 0.0
    %229 = vmatpush1.msra.mxu0 0.0
    %230 = vmatprep.subr.mxu0 0.0
    %231 = vmatpush1.msra.mxu0 0.0
    %232 = vmatprep.subr.mxu0 0.0
    %233 = vmatpush1.msra.mxu0 0.0
    %234 = vmatprep.subr.mxu0 0.0
    %235 = vmatpush1.msra.mxu0 0.0
    %236 = vmatprep.subr.mxu0 0.0
    %237 = vmatpush1.msra.mxu0 0.0
    %238 = vmatprep.subr.mxu0 0.0
    %239 = vmatpush1.msra.mxu0 0.0
    %240 = vmatprep.mubr.f32.mxu0 0.0
    %241 = vmatmul.mubr.f32.gmra.mrb[0].mxu0 %v164
    %v242 = vpop.f32.mrb[0].mxu0
    %v243 = vadd.f32 %v155, %v242
    %v244 = vpop.f32.mrb[0].mxu0
    %v245 = vadd.f32 %v159, %v244
    %246 = vmatprep.mubr.f32.mxu0 0.0
    %247 = vmatmul.mubr.f32.gmra.mrb[0].mxu0 %v167
    %v248 = vpop.f32.mrb[0].mxu0
    %v249 = vadd.f32 %v155, %v248
    %v250 = vpop.f32.mrb[0].mxu0
    %v251 = vadd.f32 %v159, %v250
    %252 = vdwg.mxu0
    %253 = vst [vmem:[#allocation2] sm:$0xff] %v243
    %254 = vst [vmem:[#allocation2 + $0x8] sm:$0xff] %v245
    %255 = vst [vmem:[#allocation2 + $0x10] sm:$0xff] %v249
    %256 = vst [vmem:[#allocation2 + $0x18] sm:$0xff] %v251
    %v257 = vld [vmem:[#allocation9] sm:$0xff]
    %v258 = vld [vmem:[#allocation9 + $0x8] sm:$0xff]
    %v259 = vld [vmem:[#allocation9 + $0x10] sm:$0xff]
    %v260 = vld [vmem:[#allocation9 + $0x18] sm:$0xff]
    %v261 = vld [vmem:[%s5] sm:$0xff]
    %v262 = vld [vmem:[%s5 + $0x8] sm:$0xff]
    %v263 = vld [vmem:[%s5 + $0x10] sm:$0xff]
    %v264 = vld [vmem:[%s5 + $0x18] sm:$0xff]
    %v265 = vld [vmem:[%s5 + $0x20] sm:$0xff]
    %v266 = vld [vmem:[%s5 + $0x28] sm:$0xff]
    %v267 = vld [vmem:[%s5 + $0x30] sm:$0xff]
    %v268 = vld [vmem:[%s5 + $0x38] sm:$0xff]
    %v269 = vld [vmem:[#allocation10] sm:$0x1]
    %v270 = vld [vmem:[#allocation12] sm:$0xff]
    %v271 = vld [vmem:[#allocation12 + $0x8] sm:$0xff]
    %v272 = vld [vmem:[#allocation12 + $0x10] sm:$0xff]
    %v273 = vld [vmem:[#allocation12 + $0x18] sm:$0xff]
    %v274 = vld [vmem:[#allocation13] sm:$0xff]
    %v275 = vld [vmem:[#allocation13 + $0x8] sm:$0xff]
    %v276 = vld [vmem:[#allocation13 + $0x10] sm:$0xff]
    %v277 = vld [vmem:[#allocation13 + $0x18] sm:$0xff]
    %v278 = vld [vmem:[#allocation13 + $0x20] sm:$0xff]
    %v279 = vld [vmem:[#allocation13 + $0x28] sm:$0xff]
    %v280 = vld [vmem:[#allocation13 + $0x30] sm:$0xff]
    %v281 = vld [vmem:[#allocation13 + $0x38] sm:$0xff]
    %v282 = vld [vmem:[#allocation15] sm:$0x1]
    %v283 = vld [vmem:[#allocation2 + $0x10] sm:$0xc0]
    %vm284 = vcmask 261120
    %v286 = vsel %vm284, 0.0, 0
    %288 = vmatprep.subr.mxu0 0.0
    %289 = vmatpush1.msra.mxu0 %v257
    %290 = vmatprep.subr.mxu0 0.0
    %291 = vmatpush1.msra.mxu0 %v258
    %292 = vmatprep.subr.mxu0 0.0
    %293 = vmatpush1.msra.mxu0 %v259
    %294 = vmatprep.subr.mxu0 0.0
    %295 = vmatpush1.msra.mxu0 %v260
    %296 = vmatprep.subr.mxu0 0.0
    %297 = vmatpush1.msra.mxu0 0.0
    %298 = vmatprep.subr.mxu0 0.0
    %299 = vmatpush1.msra.mxu0 0.0
    %300 = vmatprep.subr.mxu0 0.0
    %301 = vmatpush1.msra.mxu0 0.0
    %302 = vmatprep.subr.mxu0 0.0
    %303 = vmatpush1.msra.mxu0 0.0
    %304 = vmatprep.subr.mxu0 0.0
    %305 = vmatpush1.msra.mxu0 0.0
    %306 = vmatprep.subr.mxu0 0.0
    %307 = vmatpush1.msra.mxu0 0.0
    %308 = vmatprep.subr.mxu0 0.0
    %309 = vmatpush1.msra.mxu0 0.0
    %310 = vmatprep.subr.mxu0 0.0
    %311 = vmatpush1.msra.mxu0 0.0
    %312 = vmatprep.subr.mxu0 0.0
    %313 = vmatpush1.msra.mxu0 0.0
    %314 = vmatprep.subr.mxu0 0.0
    %315 = vmatpush1.msra.mxu0 0.0
    %316 = vmatprep.subr.mxu0 0.0
    %317 = vmatpush1.msra.mxu0 0.0
    %318 = vmatprep.subr.mxu0 0.0
    %319 = vmatpush1.msra.mxu0 0.0
    %320 = vmatprep.subr.mxu0 0.0
    %321 = vmatpush1.msra.mxu0 0.0
    %322 = vmatprep.subr.mxu0 0.0
    %323 = vmatpush1.msra.mxu0 0.0
    %324 = vmatprep.subr.mxu0 0.0
    %325 = vmatpush1.msra.mxu0 0.0
    %326 = vmatprep.subr.mxu0 0.0
    %327 = vmatpush1.msra.mxu0 0.0
    %328 = vmatprep.subr.mxu0 0.0
    %329 = vmatpush1.msra.mxu0 0.0
    %330 = vmatprep.subr.mxu0 0.0
    %331 = vmatpush1.msra.mxu0 0.0
    %332 = vmatprep.subr.mxu0 0.0
    %333 = vmatpush1.msra.mxu0 0.0
    %334 = vmatprep.subr.mxu0 0.0
    %335 = vmatpush1.msra.mxu0 0.0
    %336 = vmatprep.subr.mxu0 0.0
    %337 = vmatpush1.msra.mxu0 0.0
    %338 = vmatprep.subr.mxu0 0.0
    %339 = vmatpush1.msra.mxu0 0.0
    %340 = vmatprep.subr.mxu0 0.0
    %341 = vmatpush1.msra.mxu0 0.0
    %342 = vmatprep.subr.mxu0 0.0
    %343 = vmatpush1.msra.mxu0 0.0
    %344 = vmatprep.subr.mxu0 0.0
    %345 = vmatpush1.msra.mxu0 0.0
    %346 = vmatprep.subr.mxu0 0.0
    %347 = vmatpush1.msra.mxu0 0.0
    %348 = vmatprep.subr.mxu0 0.0
    %349 = vmatpush1.msra.mxu0 0.0
    %350 = vmatprep.subr.mxu0 0.0
    %351 = vmatpush1.msra.mxu0 0.0
    %352 = vmatprep.mubr.f32.mxu0 0.0
    %353 = vmatmul.mubr.f32.gmra.mrb[0].mxu0 %v286
    %v354 = vpop.f32.mrb[0].mxu0
    %v355 = vadd.f32 0.0, %v354
    %v356 = vpop.f32.mrb[0].mxu0
    %357 = vdwg.mxu0
    %v359 = vrot.slane %v355, 2
    %v361 = vadd.f32 %v283, %v359
    %v362 = vxor.u32 %v361, 2147483648
    %v363 = vmul.f32 %v362, 1.442695
    %v364 = vpow.pop %v363
    %v365 = vadd.f32 %v364, 1.0
    %v366 = vrcp.pop %v365
    %v367 = vmul.f32 1.0, %v366
    %v368 = vmul.f32 %v367, 2.0
    %v369 = vsub.f32 %v368, 1.0
    %v370 = vmul.f32 %v367, 0.0
    %372 = vrot.lane.b32.xlu0 %v369, 64
    %v373 = vpop.permute.xlu0 %372
    %v375 = vmul.f32 %v367, %v373
    %377 = vrot.lane.b32.xlu0 %v375, 32
    %v378 = vpop.permute.xlu0 %377
    %v380 = vadd.f32 %v370, %v378
    %v381 = vtanh.pop %v380
    %383 = vrot.lane.b32.xlu0 %v381, 64
    %v384 = vpop.permute.xlu0 %383
    %v386 = vmul.f32 %v367, %v384
    %388 = vrot.lane.b32.xlu0 %v386, 32
    %v389 = vpop.permute.xlu0 %388
    %v391 = vsel %vm284, %v389, 0.0
    %v393 = vlaneseq
    %v394 = vshrl.u32 %v393, 7
    %v395 = vsub.s32 0, %v394
    %v396 = vrot.slane %v269, %v395
    %v399 = vrot.slane %v391, 6
    %vm400 = vcmask 523264
    %v401 = vsel %vm400, %v399, 0
    %403 = vmatprep.subr.mxu0 0.0
    %404 = vmatpush1.msra.mxu0 %v261
    %405 = vmatprep.subr.mxu0 0.0
    %406 = vmatpush1.msra.mxu0 %v262
    %407 = vmatprep.subr.mxu0 0.0
    %408 = vmatpush1.msra.mxu0 %v263
    %409 = vmatprep.subr.mxu0 0.0
    %410 = vmatpush1.msra.mxu0 %v264
    %411 = vmatprep.subr.mxu0 0.0
    %412 = vmatpush1.msra.mxu0 %v265
    %413 = vmatprep.subr.mxu0 0.0
    %414 = vmatpush1.msra.mxu0 %v266
    %415 = vmatprep.subr.mxu0 0.0
    %416 = vmatpush1.msra.mxu0 %v267
    %417 = vmatprep.subr.mxu0 0.0
    %418 = vmatpush1.msra.mxu0 %v268
    %419 = vmatprep.subr.mxu0 0.0
    %420 = vmatpush1.msra.mxu0 0.0
    %421 = vmatprep.subr.mxu0 0.0
    %422 = vmatpush1.msra.mxu0 0.0
    %423 = vmatprep.subr.mxu0 0.0
    %424 = vmatpush1.msra.mxu0 0.0
    %425 = vmatprep.subr.mxu0 0.0
    %426 = vmatpush1.msra.mxu0 0.0
    %427 = vmatprep.subr.mxu0 0.0
    %428 = vmatpush1.msra.mxu0 0.0
    %429 = vmatprep.subr.mxu0 0.0
    %430 = vmatpush1.msra.mxu0 0.0
    %431 = vmatprep.subr.mxu0 0.0
    %432 = vmatpush1.msra.mxu0 0.0
    %433 = vmatprep.subr.mxu0 0.0
    %434 = vmatpush1.msra.mxu0 0.0
    %435 = vmatprep.subr.mxu0 0.0
    %436 = vmatpush1.msra.mxu0 0.0
    %437 = vmatprep.subr.mxu0 0.0
    %438 = vmatpush1.msra.mxu0 0.0
    %439 = vmatprep.subr.mxu0 0.0
    %440 = vmatpush1.msra.mxu0 0.0
    %441 = vmatprep.subr.mxu0 0.0
    %442 = vmatpush1.msra.mxu0 0.0
    %443 = vmatprep.subr.mxu0 0.0
    %444 = vmatpush1.msra.mxu0 0.0
    %445 = vmatprep.subr.mxu0 0.0
    %446 = vmatpush1.msra.mxu0 0.0
    %447 = vmatprep.subr.mxu0 0.0
    %448 = vmatpush1.msra.mxu0 0.0
    %449 = vmatprep.subr.mxu0 0.0
    %450 = vmatpush1.msra.mxu0 0.0
    %451 = vmatprep.subr.mxu0 0.0
    %452 = vmatpush1.msra.mxu0 0.0
    %453 = vmatprep.subr.mxu0 0.0
    %454 = vmatpush1.msra.mxu0 0.0
    %455 = vmatprep.subr.mxu0 0.0
    %456 = vmatpush1.msra.mxu0 0.0
    %457 = vmatprep.subr.mxu0 0.0
    %458 = vmatpush1.msra.mxu0 0.0
    %459 = vmatprep.subr.mxu0 0.0
    %460 = vmatpush1.msra.mxu0 0.0
    %461 = vmatprep.subr.mxu0 0.0
    %462 = vmatpush1.msra.mxu0 0.0
    %463 = vmatprep.subr.mxu0 0.0
    %464 = vmatpush1.msra.mxu0 0.0
    %465 = vmatprep.subr.mxu0 0.0
    %466 = vmatpush1.msra.mxu0 0.0
    %467 = vmatprep.mubr.f32.mxu0 0.0
    %468 = vmatmul.mubr.f32.gmra.mrb[0].mxu0 %v401
    %v469 = vpop.f32.mrb[0].mxu0
    %v470 = vadd.f32 %v396, %v469
    %v471 = vpop.f32.mrb[0].mxu0
    %472 = vdwg.mxu0
    %v473 = vxor.u32 %v470, 2147483648
    %v474 = vmul.f32 %v473, 1.442695
    %v475 = vpow.pop %v474
    %v476 = vadd.f32 %v475, 1.0
    %v477 = vrcp.pop %v476
    %v478 = vmul.f32 1.0, %v477
    %v479 = vmul.f32 %v478, 2.0
    %v480 = vsub.f32 %v479, 1.0
    %v481 = vmul.f32 %v478, 0.0
    %483 = vrot.lane.b32.xlu0 %v480, 64
    %v484 = vpop.permute.xlu0 %483
    %v486 = vmul.f32 %v478, %v484
    %488 = vrot.lane.b32.xlu0 %v486, 32
    %v489 = vpop.permute.xlu0 %488
    %v491 = vadd.f32 %v481, %v489
    %v492 = vtanh.pop %v491
    %494 = vrot.lane.b32.xlu0 %v492, 64
    %v495 = vpop.permute.xlu0 %494
    %v497 = vmul.f32 %v478, %v495
    %499 = vrot.lane.b32.xlu0 %v497, 32
    %v500 = vpop.permute.xlu0 %499
    %vm502 = vcmask 254976
    %503 = vst.msk [vmem:[#allocation3 + $0xe] sm:$0x3] %vm502, %v500
    %v504 = vld [vmem:[#allocation2 + $0x8] sm:$0x3]
    %505 = vmatprep.subr.mxu0 0.0
    %506 = vmatpush1.msra.mxu0 %v270
    %507 = vmatprep.subr.mxu0 0.0
    %508 = vmatpush1.msra.mxu0 %v271
    %509 = vmatprep.subr.mxu0 0.0
    %510 = vmatpush1.msra.mxu0 %v272
    %511 = vmatprep.subr.mxu0 0.0
    %512 = vmatpush1.msra.mxu0 %v273
    %513 = vmatprep.subr.mxu0 0.0
    %514 = vmatpush1.msra.mxu0 0.0
    %515 = vmatprep.subr.mxu0 0.0
    %516 = vmatpush1.msra.mxu0 0.0
    %517 = vmatprep.subr.mxu0 0.0
    %518 = vmatpush1.msra.mxu0 0.0
    %519 = vmatprep.subr.mxu0 0.0
    %520 = vmatpush1.msra.mxu0 0.0
    %521 = vmatprep.subr.mxu0 0.0
    %522 = vmatpush1.msra.mxu0 0.0
    %523 = vmatprep.subr.mxu0 0.0
    %524 = vmatpush1.msra.mxu0 0.0
    %525 = vmatprep.subr.mxu0 0.0
    %526 = vmatpush1.msra.mxu0 0.0
    %527 = vmatprep.subr.mxu0 0.0
    %528 = vmatpush1.msra.mxu0 0.0
    %529 = vmatprep.subr.mxu0 0.0
    %530 = vmatpush1.msra.mxu0 0.0
    %531 = vmatprep.subr.mxu0 0.0
    %532 = vmatpush1.msra.mxu0 0.0
    %533 = vmatprep.subr.mxu0 0.0
    %534 = vmatpush1.msra.mxu0 0.0
    %535 = vmatprep.subr.mxu0 0.0
    %536 = vmatpush1.msra.mxu0 0.0
    %537 = vmatprep.subr.mxu0 0.0
    %538 = vmatpush1.msra.mxu0 0.0
    %539 = vmatprep.subr.mxu0 0.0
    %540 = vmatpush1.msra.mxu0 0.0
    %541 = vmatprep.subr.mxu0 0.0
    %542 = vmatpush1.msra.mxu0 0.0
    %543 = vmatprep.subr.mxu0 0.0
    %544 = vmatpush1.msra.mxu0 0.0
    %545 = vmatprep.subr.mxu0 0.0
    %546 = vmatpush1.msra.mxu0 0.0
    %547 = vmatprep.subr.mxu0 0.0
    %548 = vmatpush1.msra.mxu0 0.0
    %549 = vmatprep.subr.mxu0 0.0
    %550 = vmatpush1.msra.mxu0 0.0
    %551 = vmatprep.subr.mxu0 0.0
    %552 = vmatpush1.msra.mxu0 0.0
    %553 = vmatprep.subr.mxu0 0.0
    %554 = vmatpush1.msra.mxu0 0.0
    %555 = vmatprep.subr.mxu0 0.0
    %556 = vmatpush1.msra.mxu0 0.0
    %557 = vmatprep.subr.mxu0 0.0
    %558 = vmatpush1.msra.mxu0 0.0
    %559 = vmatprep.subr.mxu0 0.0
    %560 = vmatpush1.msra.mxu0 0.0
    %561 = vmatprep.subr.mxu0 0.0
    %562 = vmatpush1.msra.mxu0 0.0
    %563 = vmatprep.subr.mxu0 0.0
    %564 = vmatpush1.msra.mxu0 0.0
    %565 = vmatprep.subr.mxu0 0.0
    %566 = vmatpush1.msra.mxu0 0.0
    %567 = vmatprep.subr.mxu0 0.0
    %568 = vmatpush1.msra.mxu0 0.0
    %569 = vmatprep.mubr.f32.mxu0 0.0
    %570 = vmatmul.mubr.f32.gmra.mrb[0].mxu0 %v286
    %v571 = vpop.f32.mrb[0].mxu0
    %v572 = vadd.f32 0.0, %v571
    %v573 = vpop.f32.mrb[0].mxu0
    %574 = vdwg.mxu0
    %v575 = vadd.f32 %v504, %v572
    %v576 = vxor.u32 %v575, 2147483648
    %v577 = vmul.f32 %v576, 1.442695
    %v578 = vpow.pop %v577
    %v579 = vadd.f32 %v578, 1.0
    %v580 = vrcp.pop %v579
    %v581 = vmul.f32 1.0, %v580
    %v582 = vmul.f32 %v581, 2.0
    %v583 = vsub.f32 %v582, 1.0
    %v584 = vmul.f32 %v581, 0.0
    %586 = vrot.lane.b32.xlu0 %v583, 64
    %v587 = vpop.permute.xlu0 %586
    %v589 = vmul.f32 %v581, %v587
    %591 = vrot.lane.b32.xlu0 %v589, 32
    %v592 = vpop.permute.xlu0 %591
    %v594 = vadd.f32 %v584, %v592
    %v595 = vtanh.pop %v594
    %597 = vrot.lane.b32.xlu0 %v595, 64
    %v598 = vpop.permute.xlu0 %597
    %v600 = vmul.f32 %v581, %v598
    %602 = vrot.lane.b32.xlu0 %v600, 32
    %v603 = vpop.permute.xlu0 %602
    %v605 = vsel %vm284, %v603, 0.0
    %v607 = vlaneseq
    %v608 = vshrl.u32 %v607, 7
    %v609 = vsub.s32 0, %v608
    %v610 = vrot.slane %v282, %v609
    %v613 = vsel %vm400, %v605, 0
    %615 = vmatprep.subr.mxu0 0.0
    %616 = vmatpush1.msra.mxu0 %v274
    %617 = vmatprep.subr.mxu0 0.0
    %618 = vmatpush1.msra.mxu0 %v275
    %619 = vmatprep.subr.mxu0 0.0
    %620 = vmatpush1.msra.mxu0 %v276
    %621 = vmatprep.subr.mxu0 0.0
    %622 = vmatpush1.msra.mxu0 %v277
    %623 = vmatprep.subr.mxu0 0.0
    %624 = vmatpush1.msra.mxu0 %v278
    %625 = vmatprep.subr.mxu0 0.0
    %626 = vmatpush1.msra.mxu0 %v279
    %627 = vmatprep.subr.mxu0 0.0
    %628 = vmatpush1.msra.mxu0 %v280
    %629 = vmatprep.subr.mxu0 0.0
    %630 = vmatpush1.msra.mxu0 %v281
    %631 = vmatprep.subr.mxu0 0.0
    %632 = vmatpush1.msra.mxu0 0.0
    %633 = vmatprep.subr.mxu0 0.0
    %634 = vmatpush1.msra.mxu0 0.0
    %635 = vmatprep.subr.mxu0 0.0
    %636 = vmatpush1.msra.mxu0 0.0
    %637 = vmatprep.subr.mxu0 0.0
    %638 = vmatpush1.msra.mxu0 0.0
    %639 = vmatprep.subr.mxu0 0.0
    %640 = vmatpush1.msra.mxu0 0.0
    %641 = vmatprep.subr.mxu0 0.0
    %642 = vmatpush1.msra.mxu0 0.0
    %643 = vmatprep.subr.mxu0 0.0
    %644 = vmatpush1.msra.mxu0 0.0
    %645 = vmatprep.subr.mxu0 0.0
    %646 = vmatpush1.msra.mxu0 0.0
    %647 = vmatprep.subr.mxu0 0.0
    %648 = vmatpush1.msra.mxu0 0.0
    %649 = vmatprep.subr.mxu0 0.0
    %650 = vmatpush1.msra.mxu0 0.0
    %651 = vmatprep.subr.mxu0 0.0
    %652 = vmatpush1.msra.mxu0 0.0
    %653 = vmatprep.subr.mxu0 0.0
    %654 = vmatpush1.msra.mxu0 0.0
    %655 = vmatprep.subr.mxu0 0.0
    %656 = vmatpush1.msra.mxu0 0.0
    %657 = vmatprep.subr.mxu0 0.0
    %658 = vmatpush1.msra.mxu0 0.0
    %659 = vmatprep.subr.mxu0 0.0
    %660 = vmatpush1.msra.mxu0 0.0
    %661 = vmatprep.subr.mxu0 0.0
    %662 = vmatpush1.msra.mxu0 0.0
    %663 = vmatprep.subr.mxu0 0.0
    %664 = vmatpush1.msra.mxu0 0.0
    %665 = vmatprep.subr.mxu0 0.0
    %666 = vmatpush1.msra.mxu0 0.0
    %667 = vmatprep.subr.mxu0 0.0
    %668 = vmatpush1.msra.mxu0 0.0
    %669 = vmatprep.subr.mxu0 0.0
    %670 = vmatpush1.msra.mxu0 0.0
    %671 = vmatprep.subr.mxu0 0.0
    %672 = vmatpush1.msra.mxu0 0.0
    %673 = vmatprep.subr.mxu0 0.0
    %674 = vmatpush1.msra.mxu0 0.0
    %675 = vmatprep.subr.mxu0 0.0
    %676 = vmatpush1.msra.mxu0 0.0
    %677 = vmatprep.subr.mxu0 0.0
    %678 = vmatpush1.msra.mxu0 0.0
    %679 = vmatprep.mubr.f32.mxu0 0.0
    %680 = vmatmul.mubr.f32.gmra.mrb[0].mxu0 %v613
    %v681 = vpop.f32.mrb[0].mxu0
    %v682 = vadd.f32 %v610, %v681
    %v683 = vpop.f32.mrb[0].mxu0
    %684 = vdwg.mxu0
    %v685 = vxor.u32 %v682, 2147483648
    %v686 = vmul.f32 %v685, 1.442695
    %v687 = vpow.pop %v686
    %v688 = vadd.f32 %v687, 1.0
    %v689 = vrcp.pop %v688
    %v690 = vmul.f32 1.0, %v689
    %v691 = vmul.f32 %v690, 2.0
    %v692 = vsub.f32 %v691, 1.0
    %v693 = vmul.f32 %v690, 0.0
    %695 = vrot.lane.b32.xlu0 %v692, 64
    %v696 = vpop.permute.xlu0 %695
    %v698 = vmul.f32 %v690, %v696
    %700 = vrot.lane.b32.xlu0 %v698, 32
    %v701 = vpop.permute.xlu0 %700
    %v703 = vadd.f32 %v693, %v701
    %v704 = vtanh.pop %v703
    %706 = vrot.lane.b32.xlu0 %v704, 64
    %v707 = vpop.permute.xlu0 %706
    %v709 = vmul.f32 %v690, %v707
    %711 = vrot.lane.b32.xlu0 %v709, 64
    %v712 = vpop.permute.xlu0 %711
    %vm714 = vcmask 517376
    %715 = vst.msk [vmem:[#allocation3] sm:$0x3] %vm714, %v712
    %v716 = vld [vmem:[#allocation2 + $0x10] sm:$0x30]
    %v717 = vrot.slane %v386, 6
    %718 = vrot.lane.b32.xlu0 %v717, 32
    %v719 = vpop.permute.xlu0 %718
    %v720 = vsel %vm284, %v719, 0
    %722 = vmatprep.subr.mxu0 0.0
    %723 = vmatpush1.msra.mxu0 %v257
    %724 = vmatprep.subr.mxu0 0.0
    %725 = vmatpush1.msra.mxu0 %v258
    %726 = vmatprep.subr.mxu0 0.0
    %727 = vmatpush1.msra.mxu0 %v259
    %728 = vmatprep.subr.mxu0 0.0
    %729 = vmatpush1.msra.mxu0 %v260
    %730 = vmatprep.subr.mxu0 0.0
    %731 = vmatpush1.msra.mxu0 0.0
    %732 = vmatprep.subr.mxu0 0.0
    %733 = vmatpush1.msra.mxu0 0.0
    %734 = vmatprep.subr.mxu0 0.0
    %735 = vmatpush1.msra.mxu0 0.0
    %736 = vmatprep.subr.mxu0 0.0
    %737 = vmatpush1.msra.mxu0 0.0
    %738 = vmatprep.subr.mxu0 0.0
    %739 = vmatpush1.msra.mxu0 0.0
    %740 = vmatprep.subr.mxu0 0.0
    %741 = vmatpush1.msra.mxu0 0.0
    %742 = vmatprep.subr.mxu0 0.0
    %743 = vmatpush1.msra.mxu0 0.0
    %744 = vmatprep.subr.mxu0 0.0
    %745 = vmatpush1.msra.mxu0 0.0
    %746 = vmatprep.subr.mxu0 0.0
    %747 = vmatpush1.msra.mxu0 0.0
    %748 = vmatprep.subr.mxu0 0.0
    %749 = vmatpush1.msra.mxu0 0.0
    %750 = vmatprep.subr.mxu0 0.0
    %751 = vmatpush1.msra.mxu0 0.0
    %752 = vmatprep.subr.mxu0 0.0
    %753 = vmatpush1.msra.mxu0 0.0
    %754 = vmatprep.subr.mxu0 0.0
    %755 = vmatpush1.msra.mxu0 0.0
    %756 = vmatprep.subr.mxu0 0.0
    %757 = vmatpush1.msra.mxu0 0.0
    %758 = vmatprep.subr.mxu0 0.0
    %759 = vmatpush1.msra.mxu0 0.0
    %760 = vmatprep.subr.mxu0 0.0
    %761 = vmatpush1.msra.mxu0 0.0
    %762 = vmatprep.subr.mxu0 0.0
    %763 = vmatpush1.msra.mxu0 0.0
    %764 = vmatprep.subr.mxu0 0.0
    %765 = vmatpush1.msra.mxu0 0.0
    %766 = vmatprep.subr.mxu0 0.0
    %767 = vmatpush1.msra.mxu0 0.0
    %768 = vmatprep.subr.mxu0 0.0
    %769 = vmatpush1.msra.mxu0 0.0
    %770 = vmatprep.subr.mxu0 0.0
    %771 = vmatpush1.msra.mxu0 0.0
    %772 = vmatprep.subr.mxu0 0.0
    %773 = vmatpush1.msra.mxu0 0.0
    %774 = vmatprep.subr.mxu0 0.0
    %775 = vmatpush1.msra.mxu0 0.0
    %776 = vmatprep.subr.mxu0 0.0
    %777 = vmatpush1.msra.mxu0 0.0
    %778 = vmatprep.subr.mxu0 0.0
    %779 = vmatpush1.msra.mxu0 0.0
    %780 = vmatprep.subr.mxu0 0.0
    %781 = vmatpush1.msra.mxu0 0.0
    %782 = vmatprep.subr.mxu0 0.0
    %783 = vmatpush1.msra.mxu0 0.0
    %784 = vmatprep.subr.mxu0 0.0
    %785 = vmatpush1.msra.mxu0 0.0
    %786 = vmatprep.mubr.f32.mxu0 0.0
    %787 = vmatmul.mubr.f32.gmra.mrb[0].mxu0 %v720
    %v788 = vpop.f32.mrb[0].mxu0
    %v789 = vadd.f32 0.0, %v788
    %v790 = vpop.f32.mrb[0].mxu0
    %791 = vdwg.mxu0
    %v793 = vrot.slane %v789, 4
    %v795 = vadd.f32 %v716, %v793
    %v796 = vxor.u32 %v795, 2147483648
    %v797 = vmul.f32 %v796, 1.442695
    %v798 = vpow.pop %v797
    %v799 = vadd.f32 %v798, 1.0
    %v800 = vrcp.pop %v799
    %v801 = vmul.f32 1.0, %v800
    %v802 = vmul.f32 %v801, 2.0
    %v803 = vsub.f32 %v802, 1.0
    %v805 = vrot.slane %v380, 2
    %v807 = vmul.f32 %v801, %v805
    %809 = vrot.lane.b32.xlu0 %v803, 64
    %v810 = vpop.permute.xlu0 %809
    %v812 = vmul.f32 %v801, %v810
    %814 = vrot.lane.b32.xlu0 %v812, 32
    %v815 = vpop.permute.xlu0 %814
    %v817 = vadd.f32 %v807, %v815
    %v818 = vtanh.pop %v817
    %820 = vrot.lane.b32.xlu0 %v818, 64
    %v821 = vpop.permute.xlu0 %820
    %v823 = vmul.f32 %v801, %v821
    %825 = vrot.lane.b32.xlu0 %v823, 32
    %v826 = vpop.permute.xlu0 %825
    %v828 = vrot.slane %v497, 4
    %829 = vrot.lane.b32.xlu0 %v828, 64
    %v830 = vpop.permute.xlu0 %829
    %v832 = vsel %vm284, %v826, %v830
    %v834 = vrot.slane %v832, 4
    %v835 = vsel %vm400, %v834, 0
    %837 = vmatprep.subr.mxu0 0.0
    %838 = vmatpush1.msra.mxu0 %v261
    %839 = vmatprep.subr.mxu0 0.0
    %840 = vmatpush1.msra.mxu0 %v262
    %841 = vmatprep.subr.mxu0 0.0
    %842 = vmatpush1.msra.mxu0 %v263
    %843 = vmatprep.subr.mxu0 0.0
    %844 = vmatpush1.msra.mxu0 %v264
    %845 = vmatprep.subr.mxu0 0.0
    %846 = vmatpush1.msra.mxu0 %v265
    %847 = vmatprep.subr.mxu0 0.0
    %848 = vmatpush1.msra.mxu0 %v266
    %849 = vmatprep.subr.mxu0 0.0
    %850 = vmatpush1.msra.mxu0 %v267
    %851 = vmatprep.subr.mxu0 0.0
    %852 = vmatpush1.msra.mxu0 %v268
    %853 = vmatprep.subr.mxu0 0.0
    %854 = vmatpush1.msra.mxu0 0.0
    %855 = vmatprep.subr.mxu0 0.0
    %856 = vmatpush1.msra.mxu0 0.0
    %857 = vmatprep.subr.mxu0 0.0
    %858 = vmatpush1.msra.mxu0 0.0
    %859 = vmatprep.subr.mxu0 0.0
    %860 = vmatpush1.msra.mxu0 0.0
    %861 = vmatprep.subr.mxu0 0.0
    %862 = vmatpush1.msra.mxu0 0.0
    %863 = vmatprep.subr.mxu0 0.0
    %864 = vmatpush1.msra.mxu0 0.0
    %865 = vmatprep.subr.mxu0 0.0
    %866 = vmatpush1.msra.mxu0 0.0
    %867 = vmatprep.subr.mxu0 0.0
    %868 = vmatpush1.msra.mxu0 0.0
    %869 = vmatprep.subr.mxu0 0.0
    %870 = vmatpush1.msra.mxu0 0.0
    %871 = vmatprep.subr.mxu0 0.0
    %872 = vmatpush1.msra.mxu0 0.0
    %873 = vmatprep.subr.mxu0 0.0
    %874 = vmatpush1.msra.mxu0 0.0
    %875 = vmatprep.subr.mxu0 0.0
    %876 = vmatpush1.msra.mxu0 0.0
    %877 = vmatprep.subr.mxu0 0.0
    %878 = vmatpush1.msra.mxu0 0.0
    %879 = vmatprep.subr.mxu0 0.0
    %880 = vmatpush1.msra.mxu0 0.0
    %881 = vmatprep.subr.mxu0 0.0
    %882 = vmatpush1.msra.mxu0 0.0
    %883 = vmatprep.subr.mxu0 0.0
    %884 = vmatpush1.msra.mxu0 0.0
    %885 = vmatprep.subr.mxu0 0.0
    %886 = vmatpush1.msra.mxu0 0.0
    %887 = vmatprep.subr.mxu0 0.0
    %888 = vmatpush1.msra.mxu0 0.0
    %889 = vmatprep.subr.mxu0 0.0
    %890 = vmatpush1.msra.mxu0 0.0
    %891 = vmatprep.subr.mxu0 0.0
    %892 = vmatpush1.msra.mxu0 0.0
    %893 = vmatprep.subr.mxu0 0.0
    %894 = vmatpush1.msra.mxu0 0.0
    %895 = vmatprep.subr.mxu0 0.0
    %896 = vmatpush1.msra.mxu0 0.0
    %897 = vmatprep.subr.mxu0 0.0
    %898 = vmatpush1.msra.mxu0 0.0
    %899 = vmatprep.subr.mxu0 0.0
    %900 = vmatpush1.msra.mxu0 0.0
    %901 = vmatprep.mubr.f32.mxu0 0.0
    %902 = vmatmul.mubr.f32.gmra.mrb[0].mxu0 %v835
    %v903 = vpop.f32.mrb[0].mxu0
    %v904 = vadd.f32 %v396, %v903
    %v905 = vpop.f32.mrb[0].mxu0
    %906 = vdwg.mxu0
    %v907 = vxor.u32 %v904, 2147483648
    %v908 = vmul.f32 %v907, 1.442695
    %v909 = vpow.pop %v908
    %v910 = vadd.f32 %v909, 1.0
    %v911 = vrcp.pop %v910
    %v912 = vmul.f32 1.0, %v911
    %v913 = vmul.f32 %v912, 2.0
    %v914 = vsub.f32 %v913, 1.0
    %v915 = vmul.f32 %v912, %v491
    %917 = vrot.lane.b32.xlu0 %v914, 64
    %v918 = vpop.permute.xlu0 %917
    %v920 = vmul.f32 %v912, %v918
    %922 = vrot.lane.b32.xlu0 %v920, 32
    %v923 = vpop.permute.xlu0 %922
    %v925 = vadd.f32 %v915, %v923
    %v926 = vtanh.pop %v925
    %928 = vrot.lane.b32.xlu0 %v926, 64
    %v929 = vpop.permute.xlu0 %928
    %v931 = vmul.f32 %v912, %v929
    %933 = vrot.lane.b32.xlu0 %v931, 32
    %v934 = vpop.permute.xlu0 %933
    %936 = vst.msk [vmem:[#allocation3 + $0xc] sm:$0x3] %vm502, %v934
    %v937 = vld [vmem:[#allocation2 + $0x8] sm:$0xc]
    %v938 = vsel %vm284, %v603, 0
    %940 = vmatprep.subr.mxu0 0.0
    %941 = vmatpush1.msra.mxu0 %v270
    %942 = vmatprep.subr.mxu0 0.0
    %943 = vmatpush1.msra.mxu0 %v271
    %944 = vmatprep.subr.mxu0 0.0
    %945 = vmatpush1.msra.mxu0 %v272
    %946 = vmatprep.subr.mxu0 0.0
    %947 = vmatpush1.msra.mxu0 %v273
    %948 = vmatprep.subr.mxu0 0.0
    %949 = vmatpush1.msra.mxu0 0.0
    %950 = vmatprep.subr.mxu0 0.0
    %951 = vmatpush1.msra.mxu0 0.0
    %952 = vmatprep.subr.mxu0 0.0
    %953 = vmatpush1.msra.mxu0 0.0
    %954 = vmatprep.subr.mxu0 0.0
    %955 = vmatpush1.msra.mxu0 0.0
    %956 = vmatprep.subr.mxu0 0.0
    %957 = vmatpush1.msra.mxu0 0.0
    %958 = vmatprep.subr.mxu0 0.0
    %959 = vmatpush1.msra.mxu0 0.0
    %960 = vmatprep.subr.mxu0 0.0
    %961 = vmatpush1.msra.mxu0 0.0
    %962 = vmatprep.subr.mxu0 0.0
    %963 = vmatpush1.msra.mxu0 0.0
    %964 = vmatprep.subr.mxu0 0.0
    %965 = vmatpush1.msra.mxu0 0.0
    %966 = vmatprep.subr.mxu0 0.0
    %967 = vmatpush1.msra.mxu0 0.0
    %968 = vmatprep.subr.mxu0 0.0
    %969 = vmatpush1.msra.mxu0 0.0
    %970 = vmatprep.subr.mxu0 0.0
    %971 = vmatpush1.msra.mxu0 0.0
    %972 = vmatprep.subr.mxu0 0.0
    %973 = vmatpush1.msra.mxu0 0.0
    %974 = vmatprep.subr.mxu0 0.0
    %975 = vmatpush1.msra.mxu0 0.0
    %976 = vmatprep.subr.mxu0 0.0
    %977 = vmatpush1.msra.mxu0 0.0
    %978 = vmatprep.subr.mxu0 0.0
    %979 = vmatpush1.msra.mxu0 0.0
    %980 = vmatprep.subr.mxu0 0.0
    %981 = vmatpush1.msra.mxu0 0.0
    %982 = vmatprep.subr.mxu0 0.0
    %983 = vmatpush1.msra.mxu0 0.0
    %984 = vmatprep.subr.mxu0 0.0
    %985 = vmatpush1.msra.mxu0 0.0
    %986 = vmatprep.subr.mxu0 0.0
    %987 = vmatpush1.msra.mxu0 0.0
    %988 = vmatprep.subr.mxu0 0.0
    %989 = vmatpush1.msra.mxu0 0.0
    %990 = vmatprep.subr.mxu0 0.0
    %991 = vmatpush1.msra.mxu0 0.0
    %992 = vmatprep.subr.mxu0 0.0
    %993 = vmatpush1.msra.mxu0 0.0
    %994 = vmatprep.subr.mxu0 0.0
    %995 = vmatpush1.msra.mxu0 0.0
    %996 = vmatprep.subr.mxu0 0.0
    %997 = vmatpush1.msra.mxu0 0.0
    %998 = vmatprep.subr.mxu0 0.0
    %999 = vmatpush1.msra.mxu0 0.0
    %1000 = vmatprep.subr.mxu0 0.0
    %1001 = vmatpush1.msra.mxu0 0.0
    %1002 = vmatprep.subr.mxu0 0.0
    %1003 = vmatpush1.msra.mxu0 0.0
    %1004 = vmatprep.mubr.f32.mxu0 0.0
    %1005 = vmatmul.mubr.f32.gmra.mrb[0].mxu0 %v938
    %v1006 = vpop.f32.mrb[0].mxu0
    %v1007 = vadd.f32 0.0, %v1006
    %v1008 = vpop.f32.mrb[0].mxu0
    %1009 = vdwg.mxu0
    %v1011 = vrot.slane %v1007, 6
    %v1013 = vadd.f32 %v937, %v1011
    %v1014 = vxor.u32 %v1013, 2147483648
    %v1015 = vmul.f32 %v1014, 1.442695
    %v1016 = vpow.pop %v1015
    %v1017 = vadd.f32 %v1016, 1.0
    %v1018 = vrcp.pop %v1017
    %v1019 = vmul.f32 1.0, %v1018
    %v1020 = vmul.f32 %v1019, 2.0
    %v1021 = vsub.f32 %v1020, 1.0
    %v1023 = vrot.slane %v594, 6
    %v1025 = vmul.f32 %v1019, %v1023
    %1027 = vrot.lane.b32.xlu0 %v1021, 64
    %v1028 = vpop.permute.xlu0 %1027
    %v1030 = vmul.f32 %v1019, %v1028
    %1032 = vrot.lane.b32.xlu0 %v1030, 32
    %v1033 = vpop.permute.xlu0 %1032
    %v1035 = vadd.f32 %v1025, %v1033
    %v1036 = vtanh.pop %v1035
    %1038 = vrot.lane.b32.xlu0 %v1036, 64
    %v1039 = vpop.permute.xlu0 %1038
    %v1041 = vmul.f32 %v1019, %v1039
    %1043 = vrot.lane.b32.xlu0 %v1041, 32
    %v1044 = vpop.permute.xlu0 %1043
    %v1046 = vrot.slane %v709, 6
    %1047 = vrot.lane.b32.xlu0 %v1046, 64
    %v1048 = vpop.permute.xlu0 %1047
    %v1050 = vsel %vm284, %v1044, %v1048
    %v1052 = vrot.slane %v1050, 2
    %v1053 = vsel %vm400, %v1052, 0
    %1055 = vmatprep.subr.mxu0 0.0
    %1056 = vmatpush1.msra.mxu0 %v274
    %1057 = vmatprep.subr.mxu0 0.0
    %1058 = vmatpush1.msra.mxu0 %v275
    %1059 = vmatprep.subr.mxu0 0.0
    %1060 = vmatpush1.msra.mxu0 %v276
    %1061 = vmatprep.subr.mxu0 0.0
    %1062 = vmatpush1.msra.mxu0 %v277
    %1063 = vmatprep.subr.mxu0 0.0
    %1064 = vmatpush1.msra.mxu0 %v278
    %1065 = vmatprep.subr.mxu0 0.0
    %1066 = vmatpush1.msra.mxu0 %v279
    %1067 = vmatprep.subr.mxu0 0.0
    %1068 = vmatpush1.msra.mxu0 %v280
    %1069 = vmatprep.subr.mxu0 0.0
    %1070 = vmatpush1.msra.mxu0 %v281
    %1071 = vmatprep.subr.mxu0 0.0
    %1072 = vmatpush1.msra.mxu0 0.0
    %1073 = vmatprep.subr.mxu0 0.0
    %1074 = vmatpush1.msra.mxu0 0.0
    %1075 = vmatprep.subr.mxu0 0.0
    %1076 = vmatpush1.msra.mxu0 0.0
    %1077 = vmatprep.subr.mxu0 0.0
    %1078 = vmatpush1.msra.mxu0 0.0
    %1079 = vmatprep.subr.mxu0 0.0
    %1080 = vmatpush1.msra.mxu0 0.0
    %1081 = vmatprep.subr.mxu0 0.0
    %1082 = vmatpush1.msra.mxu0 0.0
    %1083 = vmatprep.subr.mxu0 0.0
    %1084 = vmatpush1.msra.mxu0 0.0
    %1085 = vmatprep.subr.mxu0 0.0
    %1086 = vmatpush1.msra.mxu0 0.0
    %1087 = vmatprep.subr.mxu0 0.0
    %1088 = vmatpush1.msra.mxu0 0.0
    %1089 = vmatprep.subr.mxu0 0.0
    %1090 = vmatpush1.msra.mxu0 0.0
    %1091 = vmatprep.subr.mxu0 0.0
    %1092 = vmatpush1.msra.mxu0 0.0
    %1093 = vmatprep.subr.mxu0 0.0
    %1094 = vmatpush1.msra.mxu0 0.0
    %1095 = vmatprep.subr.mxu0 0.0
    %1096 = vmatpush1.msra.mxu0 0.0
    %1097 = vmatprep.subr.mxu0 0.0
    %1098 = vmatpush1.msra.mxu0 0.0
    %1099 = vmatprep.subr.mxu0 0.0
    %1100 = vmatpush1.msra.mxu0 0.0
    %1101 = vmatprep.subr.mxu0 0.0
    %1102 = vmatpush1.msra.mxu0 0.0
    %1103 = vmatprep.subr.mxu0 0.0
    %1104 = vmatpush1.msra.mxu0 0.0
    %1105 = vmatprep.subr.mxu0 0.0
    %1106 = vmatpush1.msra.mxu0 0.0
    %1107 = vmatprep.subr.mxu0 0.0
    %1108 = vmatpush1.msra.mxu0 0.0
    %1109 = vmatprep.subr.mxu0 0.0
    %1110 = vmatpush1.msra.mxu0 0.0
    %1111 = vmatprep.subr.mxu0 0.0
    %1112 = vmatpush1.msra.mxu0 0.0
    %1113 = vmatprep.subr.mxu0 0.0
    %1114 = vmatpush1.msra.mxu0 0.0
    %1115 = vmatprep.subr.mxu0 0.0
    %1116 = vmatpush1.msra.mxu0 0.0
    %1117 = vmatprep.subr.mxu0 0.0
    %1118 = vmatpush1.msra.mxu0 0.0
    %1119 = vmatprep.mubr.f32.mxu0 0.0
    %1120 = vmatmul.mubr.f32.gmra.mrb[0].mxu0 %v1053
    %v1121 = vpop.f32.mrb[0].mxu0
    %v1122 = vadd.f32 %v610, %v1121
    %v1123 = vpop.f32.mrb[0].mxu0
    %1124 = vdwg.mxu0
    %v1125 = vxor.u32 %v1122, 2147483648
    %v1126 = vmul.f32 %v1125, 1.442695
    %v1127 = vpow.pop %v1126
    %v1128 = vadd.f32 %v1127, 1.0
    %v1129 = vrcp.pop %v1128
    %v1130 = vmul.f32 1.0, %v1129
    %v1131 = vmul.f32 %v1130, 2.0
    %v1132 = vsub.f32 %v1131, 1.0
    %v1133 = vmul.f32 %v1130, %v703
    %1135 = vrot.lane.b32.xlu0 %v1132, 64
    %v1136 = vpop.permute.xlu0 %1135
    %v1138 = vmul.f32 %v1130, %v1136
    %1140 = vrot.lane.b32.xlu0 %v1138, 32
    %v1141 = vpop.permute.xlu0 %1140
    %v1143 = vadd.f32 %v1133, %v1141
    %v1144 = vtanh.pop %v1143
    %1146 = vrot.lane.b32.xlu0 %v1144, 64
    %v1147 = vpop.permute.xlu0 %1146
    %v1149 = vmul.f32 %v1130, %v1147
    %1151 = vrot.lane.b32.xlu0 %v1149, 64
    %v1152 = vpop.permute.xlu0 %1151
    %1154 = vst.msk [vmem:[#allocation3 + $0x2] sm:$0x3] %vm714, %v1152
    %v1155 = vld [vmem:[#allocation2 + $0x10] sm:$0xc]
    %v1156 = vrot.slane %v823, 4
    %1157 = vrot.lane.b32.xlu0 %v1156, 32
    %v1158 = vpop.permute.xlu0 %1157
    %v1159 = vsel %vm284, %v1158, 0
    %1161 = vmatprep.subr.mxu0 0.0
    %1162 = vmatpush1.msra.mxu0 %v257
    %1163 = vmatprep.subr.mxu0 0.0
    %1164 = vmatpush1.msra.mxu0 %v258
    %1165 = vmatprep.subr.mxu0 0.0
    %1166 = vmatpush1.msra.mxu0 %v259
    %1167 = vmatprep.subr.mxu0 0.0
    %1168 = vmatpush1.msra.mxu0 %v260
    %1169 = vmatprep.subr.mxu0 0.0
    %1170 = vmatpush1.msra.mxu0 0.0
    %1171 = vmatprep.subr.mxu0 0.0
    %1172 = vmatpush1.msra.mxu0 0.0
    %1173 = vmatprep.subr.mxu0 0.0
    %1174 = vmatpush1.msra.mxu0 0.0
    %1175 = vmatprep.subr.mxu0 0.0
    %1176 = vmatpush1.msra.mxu0 0.0
    %1177 = vmatprep.subr.mxu0 0.0
    %1178 = vmatpush1.msra.mxu0 0.0
    %1179 = vmatprep.subr.mxu0 0.0
    %1180 = vmatpush1.msra.mxu0 0.0
    %1181 = vmatprep.subr.mxu0 0.0
    %1182 = vmatpush1.msra.mxu0 0.0
    %1183 = vmatprep.subr.mxu0 0.0
    %1184 = vmatpush1.msra.mxu0 0.0
    %1185 = vmatprep.subr.mxu0 0.0
    %1186 = vmatpush1.msra.mxu0 0.0
    %1187 = vmatprep.subr.mxu0 0.0
    %1188 = vmatpush1.msra.mxu0 0.0
    %1189 = vmatprep.subr.mxu0 0.0
    %1190 = vmatpush1.msra.mxu0 0.0
    %1191 = vmatprep.subr.mxu0 0.0
    %1192 = vmatpush1.msra.mxu0 0.0
    %1193 = vmatprep.subr.mxu0 0.0
    %1194 = vmatpush1.msra.mxu0 0.0
    %1195 = vmatprep.subr.mxu0 0.0
    %1196 = vmatpush1.msra.mxu0 0.0
    %1197 = vmatprep.subr.mxu0 0.0
    %1198 = vmatpush1.msra.mxu0 0.0
    %1199 = vmatprep.subr.mxu0 0.0
    %1200 = vmatpush1.msra.mxu0 0.0
    %1201 = vmatprep.subr.mxu0 0.0
    %1202 = vmatpush1.msra.mxu0 0.0
    %1203 = vmatprep.subr.mxu0 0.0
    %1204 = vmatpush1.msra.mxu0 0.0
    %1205 = vmatprep.subr.mxu0 0.0
    %1206 = vmatpush1.msra.mxu0 0.0
    %1207 = vmatprep.subr.mxu0 0.0
    %1208 = vmatpush1.msra.mxu0 0.0
    %1209 = vmatprep.subr.mxu0 0.0
    %1210 = vmatpush1.msra.mxu0 0.0
    %1211 = vmatprep.subr.mxu0 0.0
    %1212 = vmatpush1.msra.mxu0 0.0
    %1213 = vmatprep.subr.mxu0 0.0
    %1214 = vmatpush1.msra.mxu0 0.0
    %1215 = vmatprep.subr.mxu0 0.0
    %1216 = vmatpush1.msra.mxu0 0.0
    %1217 = vmatprep.subr.mxu0 0.0
    %1218 = vmatpush1.msra.mxu0 0.0
    %1219 = vmatprep.subr.mxu0 0.0
    %1220 = vmatpush1.msra.mxu0 0.0
    %1221 = vmatprep.subr.mxu0 0.0
    %1222 = vmatpush1.msra.mxu0 0.0
    %1223 = vmatprep.subr.mxu0 0.0
    %1224 = vmatpush1.msra.mxu0 0.0
    %1225 = vmatprep.mubr.f32.mxu0 0.0
    %1226 = vmatmul.mubr.f32.gmra.mrb[0].mxu0 %v1159
    %v1227 = vpop.f32.mrb[0].mxu0
    %v1228 = vadd.f32 0.0, %v1227
    %v1229 = vpop.f32.mrb[0].mxu0
    %1230 = vdwg.mxu0
    %v1232 = vrot.slane %v1228, 6
    %v1234 = vadd.f32 %v1155, %v1232
    %v1235 = vxor.u32 %v1234, 2147483648
    %v1236 = vmul.f32 %v1235, 1.442695
    %v1237 = vpow.pop %v1236
    %v1238 = vadd.f32 %v1237, 1.0
    %v1239 = vrcp.pop %v1238
    %v1240 = vmul.f32 1.0, %v1239
    %v1241 = vmul.f32 %v1240, 2.0
    %v1242 = vsub.f32 %v1241, 1.0
    %v1244 = vrot.slane %v817, 2
    %v1246 = vmul.f32 %v1240, %v1244
    %1248 = vrot.lane.b32.xlu0 %v1242, 64
    %v1249 = vpop.permute.xlu0 %1248
    %v1251 = vmul.f32 %v1240, %v1249
    %1253 = vrot.lane.b32.xlu0 %v1251, 32
    %v1254 = vpop.permute.xlu0 %1253
    %v1256 = vadd.f32 %v1246, %v1254
    %v1257 = vtanh.pop %v1256
    %1259 = vrot.lane.b32.xlu0 %v1257, 64
    %v1260 = vpop.permute.xlu0 %1259
    %v1262 = vmul.f32 %v1240, %v1260
    %1264 = vrot.lane.b32.xlu0 %v1262, 32
    %v1265 = vpop.permute.xlu0 %1264
    %v1267 = vrot.slane %v931, 6
    %1268 = vrot.lane.b32.xlu0 %v1267, 64
    %v1269 = vpop.permute.xlu0 %1268
    %v1271 = vsel %vm284, %v1265, %v1269
    %v1273 = vrot.slane %v1271, 2
    %v1274 = vsel %vm400, %v1273, 0
    %1276 = vmatprep.subr.mxu0 0.0
    %1277 = vmatpush1.msra.mxu0 %v261
    %1278 = vmatprep.subr.mxu0 0.0
    %1279 = vmatpush1.msra.mxu0 %v262
    %1280 = vmatprep.subr.mxu0 0.0
    %1281 = vmatpush1.msra.mxu0 %v263
    %1282 = vmatprep.subr.mxu0 0.0
    %1283 = vmatpush1.msra.mxu0 %v264
    %1284 = vmatprep.subr.mxu0 0.0
    %1285 = vmatpush1.msra.mxu0 %v265
    %1286 = vmatprep.subr.mxu0 0.0
    %1287 = vmatpush1.msra.mxu0 %v266
    %1288 = vmatprep.subr.mxu0 0.0
    %1289 = vmatpush1.msra.mxu0 %v267
    %1290 = vmatprep.subr.mxu0 0.0
    %1291 = vmatpush1.msra.mxu0 %v268
    %1292 = vmatprep.subr.mxu0 0.0
    %1293 = vmatpush1.msra.mxu0 0.0
    %1294 = vmatprep.subr.mxu0 0.0
    %1295 = vmatpush1.msra.mxu0 0.0
    %1296 = vmatprep.subr.mxu0 0.0
    %1297 = vmatpush1.msra.mxu0 0.0
    %1298 = vmatprep.subr.mxu0 0.0
    %1299 = vmatpush1.msra.mxu0 0.0
    %1300 = vmatprep.subr.mxu0 0.0
    %1301 = vmatpush1.msra.mxu0 0.0
    %1302 = vmatprep.subr.mxu0 0.0
    %1303 = vmatpush1.msra.mxu0 0.0
    %1304 = vmatprep.subr.mxu0 0.0
    %1305 = vmatpush1.msra.mxu0 0.0
    %1306 = vmatprep.subr.mxu0 0.0
    %1307 = vmatpush1.msra.mxu0 0.0
    %1308 = vmatprep.subr.mxu0 0.0
    %1309 = vmatpush1.msra.mxu0 0.0
    %1310 = vmatprep.subr.mxu0 0.0
    %1311 = vmatpush1.msra.mxu0 0.0
    %1312 = vmatprep.subr.mxu0 0.0
    %1313 = vmatpush1.msra.mxu0 0.0
    %1314 = vmatprep.subr.mxu0 0.0
    %1315 = vmatpush1.msra.mxu0 0.0
    %1316 = vmatprep.subr.mxu0 0.0
    %1317 = vmatpush1.msra.mxu0 0.0
    %1318 = vmatprep.subr.mxu0 0.0
    %1319 = vmatpush1.msra.mxu0 0.0
    %1320 = vmatprep.subr.mxu0 0.0
    %1321 = vmatpush1.msra.mxu0 0.0
    %1322 = vmatprep.subr.mxu0 0.0
    %1323 = vmatpush1.msra.mxu0 0.0
    %1324 = vmatprep.subr.mxu0 0.0
    %1325 = vmatpush1.msra.mxu0 0.0
    %1326 = vmatprep.subr.mxu0 0.0
    %1327 = vmatpush1.msra.mxu0 0.0
    %1328 = vmatprep.subr.mxu0 0.0
    %1329 = vmatpush1.msra.mxu0 0.0
    %1330 = vmatprep.subr.mxu0 0.0
    %1331 = vmatpush1.msra.mxu0 0.0
    %1332 = vmatprep.subr.mxu0 0.0
    %1333 = vmatpush1.msra.mxu0 0.0
    %1334 = vmatprep.subr.mxu0 0.0
    %1335 = vmatpush1.msra.mxu0 0.0
    %1336 = vmatprep.subr.mxu0 0.0
    %1337 = vmatpush1.msra.mxu0 0.0
    %1338 = vmatprep.subr.mxu0 0.0
    %1339 = vmatpush1.msra.mxu0 0.0
    %1340 = vmatprep.mubr.f32.mxu0 0.0
    %1341 = vmatmul.mubr.f32.gmra.mrb[0].mxu0 %v1274
    %v1342 = vpop.f32.mrb[0].mxu0
    %v1343 = vadd.f32 %v396, %v1342
    %v1344 = vpop.f32.mrb[0].mxu0
    %1345 = vdwg.mxu0
    %v1346 = vxor.u32 %v1343, 2147483648
    %v1347 = vmul.f32 %v1346, 1.442695
    %v1348 = vpow.pop %v1347
    %v1349 = vadd.f32 %v1348, 1.0
    %v1350 = vrcp.pop %v1349
    %v1351 = vmul.f32 1.0, %v1350
    %v1352 = vmul.f32 %v1351, 2.0
    %v1353 = vsub.f32 %v1352, 1.0
    %v1354 = vmul.f32 %v1351, %v925
    %1356 = vrot.lane.b32.xlu0 %v1353, 64
    %v1357 = vpop.permute.xlu0 %1356
    %v1359 = vmul.f32 %v1351, %v1357
    %1361 = vrot.lane.b32.xlu0 %v1359, 32
    %v1362 = vpop.permute.xlu0 %1361
    %v1364 = vadd.f32 %v1354, %v1362
    %v1365 = vtanh.pop %v1364
    %1367 = vrot.lane.b32.xlu0 %v1365, 64
    %v1368 = vpop.permute.xlu0 %1367
    %v1370 = vmul.f32 %v1351, %v1368
    %1372 = vrot.lane.b32.xlu0 %v1370, 32
    %v1373 = vpop.permute.xlu0 %1372
    %1375 = vst.msk [vmem:[#allocation3 + $0xa] sm:$0x3] %vm502, %v1373
    %v1376 = vld [vmem:[#allocation2 + $0x8] sm:$0x30]
    %v1377 = vrot.slane %v1041, 2
    %1378 = vrot.lane.b32.xlu0 %v1377, 32
    %v1379 = vpop.permute.xlu0 %1378
    %v1380 = vsel %vm284, %v1379, 0
    %1382 = vmatprep.subr.mxu0 0.0
    %1383 = vmatpush1.msra.mxu0 %v270
    %1384 = vmatprep.subr.mxu0 0.0
    %1385 = vmatpush1.msra.mxu0 %v271
    %1386 = vmatprep.subr.mxu0 0.0
    %1387 = vmatpush1.msra.mxu0 %v272
    %1388 = vmatprep.subr.mxu0 0.0
    %1389 = vmatpush1.msra.mxu0 %v273
    %1390 = vmatprep.subr.mxu0 0.0
    %1391 = vmatpush1.msra.mxu0 0.0
    %1392 = vmatprep.subr.mxu0 0.0
    %1393 = vmatpush1.msra.mxu0 0.0
    %1394 = vmatprep.subr.mxu0 0.0
    %1395 = vmatpush1.msra.mxu0 0.0
    %1396 = vmatprep.subr.mxu0 0.0
    %1397 = vmatpush1.msra.mxu0 0.0
    %1398 = vmatprep.subr.mxu0 0.0
    %1399 = vmatpush1.msra.mxu0 0.0
    %1400 = vmatprep.subr.mxu0 0.0
    %1401 = vmatpush1.msra.mxu0 0.0
    %1402 = vmatprep.subr.mxu0 0.0
    %1403 = vmatpush1.msra.mxu0 0.0
    %1404 = vmatprep.subr.mxu0 0.0
    %1405 = vmatpush1.msra.mxu0 0.0
    %1406 = vmatprep.subr.mxu0 0.0
    %1407 = vmatpush1.msra.mxu0 0.0
    %1408 = vmatprep.subr.mxu0 0.0
    %1409 = vmatpush1.msra.mxu0 0.0
    %1410 = vmatprep.subr.mxu0 0.0
    %1411 = vmatpush1.msra.mxu0 0.0
    %1412 = vmatprep.subr.mxu0 0.0
    %1413 = vmatpush1.msra.mxu0 0.0
    %1414 = vmatprep.subr.mxu0 0.0
    %1415 = vmatpush1.msra.mxu0 0.0
    %1416 = vmatprep.subr.mxu0 0.0
    %1417 = vmatpush1.msra.mxu0 0.0
    %1418 = vmatprep.subr.mxu0 0.0
    %1419 = vmatpush1.msra.mxu0 0.0
    %1420 = vmatprep.subr.mxu0 0.0
    %1421 = vmatpush1.msra.mxu0 0.0
    %1422 = vmatprep.subr.mxu0 0.0
    %1423 = vmatpush1.msra.mxu0 0.0
    %1424 = vmatprep.subr.mxu0 0.0
    %1425 = vmatpush1.msra.mxu0 0.0
    %1426 = vmatprep.subr.mxu0 0.0
    %1427 = vmatpush1.msra.mxu0 0.0
    %1428 = vmatprep.subr.mxu0 0.0
    %1429 = vmatpush1.msra.mxu0 0.0
    %1430 = vmatprep.subr.mxu0 0.0
    %1431 = vmatpush1.msra.mxu0 0.0
    %1432 = vmatprep.subr.mxu0 0.0
    %1433 = vmatpush1.msra.mxu0 0.0
    %1434 = vmatprep.subr.mxu0 0.0
    %1435 = vmatpush1.msra.mxu0 0.0
    %1436 = vmatprep.subr.mxu0 0.0
    %1437 = vmatpush1.msra.mxu0 0.0
    %1438 = vmatprep.subr.mxu0 0.0
    %1439 = vmatpush1.msra.mxu0 0.0
    %1440 = vmatprep.subr.mxu0 0.0
    %1441 = vmatpush1.msra.mxu0 0.0
    %1442 = vmatprep.subr.mxu0 0.0
    %1443 = vmatpush1.msra.mxu0 0.0
    %1444 = vmatprep.subr.mxu0 0.0
    %1445 = vmatpush1.msra.mxu0 0.0
    %1446 = vmatprep.mubr.f32.mxu0 0.0
    %1447 = vmatmul.mubr.f32.gmra.mrb[0].mxu0 %v1380
    %v1448 = vpop.f32.mrb[0].mxu0
    %v1449 = vadd.f32 0.0, %v1448
    %v1450 = vpop.f32.mrb[0].mxu0
    %1451 = vdwg.mxu0
    %v1453 = vrot.slane %v1449, 4
    %v1455 = vadd.f32 %v1376, %v1453
    %v1456 = vxor.u32 %v1455, 2147483648
    %v1457 = vmul.f32 %v1456, 1.442695
    %v1458 = vpow.pop %v1457
    %v1459 = vadd.f32 %v1458, 1.0
    %v1460 = vrcp.pop %v1459
    %v1461 = vmul.f32 1.0, %v1460
    %v1462 = vmul.f32 %v1461, 2.0
    %v1463 = vsub.f32 %v1462, 1.0
    %v1465 = vrot.slane %v1035, 6
    %v1467 = vmul.f32 %v1461, %v1465
    %1469 = vrot.lane.b32.xlu0 %v1463, 64
    %v1470 = vpop.permute.xlu0 %1469
    %v1472 = vmul.f32 %v1461, %v1470
    %1474 = vrot.lane.b32.xlu0 %v1472, 32
    %v1475 = vpop.permute.xlu0 %1474
    %v1477 = vadd.f32 %v1467, %v1475
    %v1478 = vtanh.pop %v1477
    %1480 = vrot.lane.b32.xlu0 %v1478, 64
    %v1481 = vpop.permute.xlu0 %1480
    %v1483 = vmul.f32 %v1461, %v1481
    %1485 = vrot.lane.b32.xlu0 %v1483, 32
    %v1486 = vpop.permute.xlu0 %1485
    %v1488 = vrot.slane %v1149, 4
    %1489 = vrot.lane.b32.xlu0 %v1488, 64
    %v1490 = vpop.permute.xlu0 %1489
    %v1492 = vsel %vm284, %v1486, %v1490
    %v1494 = vrot.slane %v1492, 4
    %v1495 = vsel %vm400, %v1494, 0
    %1497 = vmatprep.subr.mxu0 0.0
    %1498 = vmatpush1.msra.mxu0 %v274
    %1499 = vmatprep.subr.mxu0 0.0
    %1500 = vmatpush1.msra.mxu0 %v275
    %1501 = vmatprep.subr.mxu0 0.0
    %1502 = vmatpush1.msra.mxu0 %v276
    %1503 = vmatprep.subr.mxu0 0.0
    %1504 = vmatpush1.msra.mxu0 %v277
    %1505 = vmatprep.subr.mxu0 0.0
    %1506 = vmatpush1.msra.mxu0 %v278
    %1507 = vmatprep.subr.mxu0 0.0
    %1508 = vmatpush1.msra.mxu0 %v279
    %1509 = vmatprep.subr.mxu0 0.0
    %1510 = vmatpush1.msra.mxu0 %v280
    %1511 = vmatprep.subr.mxu0 0.0
    %1512 = vmatpush1.msra.mxu0 %v281
    %1513 = vmatprep.subr.mxu0 0.0
    %1514 = vmatpush1.msra.mxu0 0.0
    %1515 = vmatprep.subr.mxu0 0.0
    %1516 = vmatpush1.msra.mxu0 0.0
    %1517 = vmatprep.subr.mxu0 0.0
    %1518 = vmatpush1.msra.mxu0 0.0
    %1519 = vmatprep.subr.mxu0 0.0
    %1520 = vmatpush1.msra.mxu0 0.0
    %1521 = vmatprep.subr.mxu0 0.0
    %1522 = vmatpush1.msra.mxu0 0.0
    %1523 = vmatprep.subr.mxu0 0.0
    %1524 = vmatpush1.msra.mxu0 0.0
    %1525 = vmatprep.subr.mxu0 0.0
    %1526 = vmatpush1.msra.mxu0 0.0
    %1527 = vmatprep.subr.mxu0 0.0
    %1528 = vmatpush1.msra.mxu0 0.0
    %1529 = vmatprep.subr.mxu0 0.0
    %1530 = vmatpush1.msra.mxu0 0.0
    %1531 = vmatprep.subr.mxu0 0.0
    %1532 = vmatpush1.msra.mxu0 0.0
    %1533 = vmatprep.subr.mxu0 0.0
    %1534 = vmatpush1.msra.mxu0 0.0
    %1535 = vmatprep.subr.mxu0 0.0
    %1536 = vmatpush1.msra.mxu0 0.0
    %1537 = vmatprep.subr.mxu0 0.0
    %1538 = vmatpush1.msra.mxu0 0.0
    %1539 = vmatprep.subr.mxu0 0.0
    %1540 = vmatpush1.msra.mxu0 0.0
    %1541 = vmatprep.subr.mxu0 0.0
    %1542 = vmatpush1.msra.mxu0 0.0
    %1543 = vmatprep.subr.mxu0 0.0
    %1544 = vmatpush1.msra.mxu0 0.0
    %1545 = vmatprep.subr.mxu0 0.0
    %1546 = vmatpush1.msra.mxu0 0.0
    %1547 = vmatprep.subr.mxu0 0.0
    %1548 = vmatpush1.msra.mxu0 0.0
    %1549 = vmatprep.subr.mxu0 0.0
    %1550 = vmatpush1.msra.mxu0 0.0
    %1551 = vmatprep.subr.mxu0 0.0
    %1552 = vmatpush1.msra.mxu0 0.0
    %1553 = vmatprep.subr.mxu0 0.0
    %1554 = vmatpush1.msra.mxu0 0.0
    %1555 = vmatprep.subr.mxu0 0.0
    %1556 = vmatpush1.msra.mxu0 0.0
    %1557 = vmatprep.subr.mxu0 0.0
    %1558 = vmatpush1.msra.mxu0 0.0
    %1559 = vmatprep.subr.mxu0 0.0
    %1560 = vmatpush1.msra.mxu0 0.0
    %1561 = vmatprep.mubr.f32.mxu0 0.0
    %1562 = vmatmul.mubr.f32.gmra.mrb[0].mxu0 %v1495
    %v1563 = vpop.f32.mrb[0].mxu0
    %v1564 = vadd.f32 %v610, %v1563
    %v1565 = vpop.f32.mrb[0].mxu0
    %1566 = vdwg.mxu0
    %v1567 = vxor.u32 %v1564, 2147483648
    %v1568 = vmul.f32 %v1567, 1.442695
    %v1569 = vpow.pop %v1568
    %v1570 = vadd.f32 %v1569, 1.0
    %v1571 = vrcp.pop %v1570
    %v1572 = vmul.f32 1.0, %v1571
    %v1573 = vmul.f32 %v1572, 2.0
    %v1574 = vsub.f32 %v1573, 1.0
    %v1575 = vmul.f32 %v1572, %v1143
    %1577 = vrot.lane.b32.xlu0 %v1574, 64
    %v1578 = vpop.permute.xlu0 %1577
    %v1580 = vmul.f32 %v1572, %v1578
    %1582 = vrot.lane.b32.xlu0 %v1580, 32
    %v1583 = vpop.permute.xlu0 %1582
    %v1585 = vadd.f32 %v1575, %v1583
    %v1586 = vtanh.pop %v1585
    %1588 = vrot.lane.b32.xlu0 %v1586, 64
    %v1589 = vpop.permute.xlu0 %1588
    %v1591 = vmul.f32 %v1572, %v1589
    %1593 = vrot.lane.b32.xlu0 %v1591, 64
    %v1594 = vpop.permute.xlu0 %1593
    %1596 = vst.msk [vmem:[#allocation3 + $0x4] sm:$0x3] %vm714, %v1594
    %v1597 = vld [vmem:[#allocation2 + $0x10] sm:$0x3]
    %v1598 = vrot.slane %v1262, 2
    %1599 = vrot.lane.b32.xlu0 %v1598, 32
    %v1600 = vpop.permute.xlu0 %1599
    %v1601 = vsel %vm284, %v1600, 0
    %1603 = vmatprep.subr.mxu0 0.0
    %1604 = vmatpush1.msra.mxu0 %v257
    %1605 = vmatprep.subr.mxu0 0.0
    %1606 = vmatpush1.msra.mxu0 %v258
    %1607 = vmatprep.subr.mxu0 0.0
    %1608 = vmatpush1.msra.mxu0 %v259
    %1609 = vmatprep.subr.mxu0 0.0
    %1610 = vmatpush1.msra.mxu0 %v260
    %1611 = vmatprep.subr.mxu0 0.0
    %1612 = vmatpush1.msra.mxu0 0.0
    %1613 = vmatprep.subr.mxu0 0.0
    %1614 = vmatpush1.msra.mxu0 0.0
    %1615 = vmatprep.subr.mxu0 0.0
    %1616 = vmatpush1.msra.mxu0 0.0
    %1617 = vmatprep.subr.mxu0 0.0
    %1618 = vmatpush1.msra.mxu0 0.0
    %1619 = vmatprep.subr.mxu0 0.0
    %1620 = vmatpush1.msra.mxu0 0.0
    %1621 = vmatprep.subr.mxu0 0.0
    %1622 = vmatpush1.msra.mxu0 0.0
    %1623 = vmatprep.subr.mxu0 0.0
    %1624 = vmatpush1.msra.mxu0 0.0
    %1625 = vmatprep.subr.mxu0 0.0
    %1626 = vmatpush1.msra.mxu0 0.0
    %1627 = vmatprep.subr.mxu0 0.0
    %1628 = vmatpush1.msra.mxu0 0.0
    %1629 = vmatprep.subr.mxu0 0.0
    %1630 = vmatpush1.msra.mxu0 0.0
    %1631 = vmatprep.subr.mxu0 0.0
    %1632 = vmatpush1.msra.mxu0 0.0
    %1633 = vmatprep.subr.mxu0 0.0
    %1634 = vmatpush1.msra.mxu0 0.0
    %1635 = vmatprep.subr.mxu0 0.0
    %1636 = vmatpush1.msra.mxu0 0.0
    %1637 = vmatprep.subr.mxu0 0.0
    %1638 = vmatpush1.msra.mxu0 0.0
    %1639 = vmatprep.subr.mxu0 0.0
    %1640 = vmatpush1.msra.mxu0 0.0
    %1641 = vmatprep.subr.mxu0 0.0
    %1642 = vmatpush1.msra.mxu0 0.0
    %1643 = vmatprep.subr.mxu0 0.0
    %1644 = vmatpush1.msra.mxu0 0.0
    %1645 = vmatprep.subr.mxu0 0.0
    %1646 = vmatpush1.msra.mxu0 0.0
    %1647 = vmatprep.subr.mxu0 0.0
    %1648 = vmatpush1.msra.mxu0 0.0
    %1649 = vmatprep.subr.mxu0 0.0
    %1650 = vmatpush1.msra.mxu0 0.0
    %1651 = vmatprep.subr.mxu0 0.0
    %1652 = vmatpush1.msra.mxu0 0.0
    %1653 = vmatprep.subr.mxu0 0.0
    %1654 = vmatpush1.msra.mxu0 0.0
    %1655 = vmatprep.subr.mxu0 0.0
    %1656 = vmatpush1.msra.mxu0 0.0
    %1657 = vmatprep.subr.mxu0 0.0
    %1658 = vmatpush1.msra.mxu0 0.0
    %1659 = vmatprep.subr.mxu0 0.0
    %1660 = vmatpush1.msra.mxu0 0.0
    %1661 = vmatprep.subr.mxu0 0.0
    %1662 = vmatpush1.msra.mxu0 0.0
    %1663 = vmatprep.subr.mxu0 0.0
    %1664 = vmatpush1.msra.mxu0 0.0
    %1665 = vmatprep.subr.mxu0 0.0
    %1666 = vmatpush1.msra.mxu0 0.0
    %1667 = vmatprep.mubr.f32.mxu0 0.0
    %1668 = vmatmul.mubr.f32.gmra.mrb[0].mxu0 %v1601
    %v1669 = vpop.f32.mrb[0].mxu0
    %v1670 = vadd.f32 0.0, %v1669
    %v1671 = vpop.f32.mrb[0].mxu0
    %1672 = vdwg.mxu0
    %v1673 = vadd.f32 %v1597, %v1670
    %v1674 = vxor.u32 %v1673, 2147483648
    %v1675 = vmul.f32 %v1674, 1.442695
    %v1676 = vpow.pop %v1675
    %v1677 = vadd.f32 %v1676, 1.0
    %v1678 = vrcp.pop %v1677
    %v1679 = vmul.f32 1.0, %v1678
    %v1680 = vmul.f32 %v1679, 2.0
    %v1681 = vsub.f32 %v1680, 1.0
    %v1683 = vrot.slane %v1256, 2
    %v1685 = vmul.f32 %v1679, %v1683
    %1687 = vrot.lane.b32.xlu0 %v1681, 64
    %v1688 = vpop.permute.xlu0 %1687
    %v1690 = vmul.f32 %v1679, %v1688
    %1692 = vrot.lane.b32.xlu0 %v1690, 32
    %v1693 = vpop.permute.xlu0 %1692
    %v1695 = vadd.f32 %v1685, %v1693
    %v1696 = vtanh.pop %v1695
    %1698 = vrot.lane.b32.xlu0 %v1696, 64
    %v1699 = vpop.permute.xlu0 %1698
    %v1701 = vmul.f32 %v1679, %v1699
    %1703 = vrot.lane.b32.xlu0 %v1701, 32
    %v1704 = vpop.permute.xlu0 %1703
    %1706 = vrot.lane.b32.xlu0 %v1370, 64
    %v1707 = vpop.permute.xlu0 %1706
    %v1709 = vsel %vm284, %v1704, %v1707
    %v1711 = vsel %vm400, %v1709, 0
    %1713 = vmatprep.subr.mxu0 0.0
    %1714 = vmatpush1.msra.mxu0 %v261
    %1715 = vmatprep.subr.mxu0 0.0
    %1716 = vmatpush1.msra.mxu0 %v262
    %1717 = vmatprep.subr.mxu0 0.0
    %1718 = vmatpush1.msra.mxu0 %v263
    %1719 = vmatprep.subr.mxu0 0.0
    %1720 = vmatpush1.msra.mxu0 %v264
    %1721 = vmatprep.subr.mxu0 0.0
    %1722 = vmatpush1.msra.mxu0 %v265
    %1723 = vmatprep.subr.mxu0 0.0
    %1724 = vmatpush1.msra.mxu0 %v266
    %1725 = vmatprep.subr.mxu0 0.0
    %1726 = vmatpush1.msra.mxu0 %v267
    %1727 = vmatprep.subr.mxu0 0.0
    %1728 = vmatpush1.msra.mxu0 %v268
    %1729 = vmatprep.subr.mxu0 0.0
    %1730 = vmatpush1.msra.mxu0 0.0
    %1731 = vmatprep.subr.mxu0 0.0
    %1732 = vmatpush1.msra.mxu0 0.0
    %1733 = vmatprep.subr.mxu0 0.0
    %1734 = vmatpush1.msra.mxu0 0.0
    %1735 = vmatprep.subr.mxu0 0.0
    %1736 = vmatpush1.msra.mxu0 0.0
    %1737 = vmatprep.subr.mxu0 0.0
    %1738 = vmatpush1.msra.mxu0 0.0
    %1739 = vmatprep.subr.mxu0 0.0
    %1740 = vmatpush1.msra.mxu0 0.0
    %1741 = vmatprep.subr.mxu0 0.0
    %1742 = vmatpush1.msra.mxu0 0.0
    %1743 = vmatprep.subr.mxu0 0.0
    %1744 = vmatpush1.msra.mxu0 0.0
    %1745 = vmatprep.subr.mxu0 0.0
    %1746 = vmatpush1.msra.mxu0 0.0
    %1747 = vmatprep.subr.mxu0 0.0
    %1748 = vmatpush1.msra.mxu0 0.0
    %1749 = vmatprep.subr.mxu0 0.0
    %1750 = vmatpush1.msra.mxu0 0.0
    %1751 = vmatprep.subr.mxu0 0.0
    %1752 = vmatpush1.msra.mxu0 0.0
    %1753 = vmatprep.subr.mxu0 0.0
    %1754 = vmatpush1.msra.mxu0 0.0
    %1755 = vmatprep.subr.mxu0 0.0
    %1756 = vmatpush1.msra.mxu0 0.0
    %1757 = vmatprep.subr.mxu0 0.0
    %1758 = vmatpush1.msra.mxu0 0.0
    %1759 = vmatprep.subr.mxu0 0.0
    %1760 = vmatpush1.msra.mxu0 0.0
    %1761 = vmatprep.subr.mxu0 0.0
    %1762 = vmatpush1.msra.mxu0 0.0
    %1763 = vmatprep.subr.mxu0 0.0
    %1764 = vmatpush1.msra.mxu0 0.0
    %1765 = vmatprep.subr.mxu0 0.0
    %1766 = vmatpush1.msra.mxu0 0.0
    %1767 = vmatprep.subr.mxu0 0.0
    %1768 = vmatpush1.msra.mxu0 0.0
    %1769 = vmatprep.subr.mxu0 0.0
    %1770 = vmatpush1.msra.mxu0 0.0
    %1771 = vmatprep.subr.mxu0 0.0
    %1772 = vmatpush1.msra.mxu0 0.0
    %1773 = vmatprep.subr.mxu0 0.0
    %1774 = vmatpush1.msra.mxu0 0.0
    %1775 = vmatprep.subr.mxu0 0.0
    %1776 = vmatpush1.msra.mxu0 0.0
    %1777 = vmatprep.mubr.f32.mxu0 0.0
    %1778 = vmatmul.mubr.f32.gmra.mrb[0].mxu0 %v1711
    %v1779 = vpop.f32.mrb[0].mxu0
    %v1780 = vadd.f32 %v396, %v1779
    %v1781 = vpop.f32.mrb[0].mxu0
    %1782 = vdwg.mxu0
    %v1783 = vxor.u32 %v1780, 2147483648
    %v1784 = vmul.f32 %v1783, 1.442695
    %v1785 = vpow.pop %v1784
    %v1786 = vadd.f32 %v1785, 1.0
    %v1787 = vrcp.pop %v1786
    %v1788 = vmul.f32 1.0, %v1787
    %v1789 = vmul.f32 %v1788, 2.0
    %v1790 = vsub.f32 %v1789, 1.0
    %v1791 = vmul.f32 %v1788, %v1364
    %1793 = vrot.lane.b32.xlu0 %v1790, 64
    %v1794 = vpop.permute.xlu0 %1793
    %v1796 = vmul.f32 %v1788, %v1794
    %1798 = vrot.lane.b32.xlu0 %v1796, 32
    %v1799 = vpop.permute.xlu0 %1798
    %v1801 = vadd.f32 %v1791, %v1799
    %v1802 = vtanh.pop %v1801
    %1804 = vrot.lane.b32.xlu0 %v1802, 64
    %v1805 = vpop.permute.xlu0 %1804
    %v1807 = vmul.f32 %v1788, %v1805
    %1809 = vrot.lane.b32.xlu0 %v1807, 32
    %v1810 = vpop.permute.xlu0 %1809
    %1812 = vst.msk [vmem:[#allocation3 + $0x8] sm:$0x3] %vm502, %v1810
    %v1813 = vld [vmem:[#allocation2 + $0x8] sm:$0xc0]
    %v1814 = vrot.slane %v1483, 4
    %1815 = vrot.lane.b32.xlu0 %v1814, 32
    %v1816 = vpop.permute.xlu0 %1815
    %v1817 = vsel %vm284, %v1816, 0
    %1819 = vmatprep.subr.mxu0 0.0
    %1820 = vmatpush1.msra.mxu0 %v270
    %1821 = vmatprep.subr.mxu0 0.0
    %1822 = vmatpush1.msra.mxu0 %v271
    %1823 = vmatprep.subr.mxu0 0.0
    %1824 = vmatpush1.msra.mxu0 %v272
    %1825 = vmatprep.subr.mxu0 0.0
    %1826 = vmatpush1.msra.mxu0 %v273
    %1827 = vmatprep.subr.mxu0 0.0
    %1828 = vmatpush1.msra.mxu0 0.0
    %1829 = vmatprep.subr.mxu0 0.0
    %1830 = vmatpush1.msra.mxu0 0.0
    %1831 = vmatprep.subr.mxu0 0.0
    %1832 = vmatpush1.msra.mxu0 0.0
    %1833 = vmatprep.subr.mxu0 0.0
    %1834 = vmatpush1.msra.mxu0 0.0
    %1835 = vmatprep.subr.mxu0 0.0
    %1836 = vmatpush1.msra.mxu0 0.0
    %1837 = vmatprep.subr.mxu0 0.0
    %1838 = vmatpush1.msra.mxu0 0.0
    %1839 = vmatprep.subr.mxu0 0.0
    %1840 = vmatpush1.msra.mxu0 0.0
    %1841 = vmatprep.subr.mxu0 0.0
    %1842 = vmatpush1.msra.mxu0 0.0
    %1843 = vmatprep.subr.mxu0 0.0
    %1844 = vmatpush1.msra.mxu0 0.0
    %1845 = vmatprep.subr.mxu0 0.0
    %1846 = vmatpush1.msra.mxu0 0.0
    %1847 = vmatprep.subr.mxu0 0.0
    %1848 = vmatpush1.msra.mxu0 0.0
    %1849 = vmatprep.subr.mxu0 0.0
    %1850 = vmatpush1.msra.mxu0 0.0
    %1851 = vmatprep.subr.mxu0 0.0
    %1852 = vmatpush1.msra.mxu0 0.0
    %1853 = vmatprep.subr.mxu0 0.0
    %1854 = vmatpush1.msra.mxu0 0.0
    %1855 = vmatprep.subr.mxu0 0.0
    %1856 = vmatpush1.msra.mxu0 0.0
    %1857 = vmatprep.subr.mxu0 0.0
    %1858 = vmatpush1.msra.mxu0 0.0
    %1859 = vmatprep.subr.mxu0 0.0
    %1860 = vmatpush1.msra.mxu0 0.0
    %1861 = vmatprep.subr.mxu0 0.0
    %1862 = vmatpush1.msra.mxu0 0.0
    %1863 = vmatprep.subr.mxu0 0.0
    %1864 = vmatpush1.msra.mxu0 0.0
    %1865 = vmatprep.subr.mxu0 0.0
    %1866 = vmatpush1.msra.mxu0 0.0
    %1867 = vmatprep.subr.mxu0 0.0
    %1868 = vmatpush1.msra.mxu0 0.0
    %1869 = vmatprep.subr.mxu0 0.0
    %1870 = vmatpush1.msra.mxu0 0.0
    %1871 = vmatprep.subr.mxu0 0.0
    %1872 = vmatpush1.msra.mxu0 0.0
    %1873 = vmatprep.subr.mxu0 0.0
    %1874 = vmatpush1.msra.mxu0 0.0
    %1875 = vmatprep.subr.mxu0 0.0
    %1876 = vmatpush1.msra.mxu0 0.0
    %1877 = vmatprep.subr.mxu0 0.0
    %1878 = vmatpush1.msra.mxu0 0.0
    %1879 = vmatprep.subr.mxu0 0.0
    %1880 = vmatpush1.msra.mxu0 0.0
    %1881 = vmatprep.subr.mxu0 0.0
    %1882 = vmatpush1.msra.mxu0 0.0
    %1883 = vmatprep.mubr.f32.mxu0 0.0
    %1884 = vmatmul.mubr.f32.gmra.mrb[0].mxu0 %v1817
    %v1885 = vpop.f32.mrb[0].mxu0
    %v1886 = vadd.f32 0.0, %v1885
    %v1887 = vpop.f32.mrb[0].mxu0
    %1888 = vdwg.mxu0
    %v1890 = vrot.slane %v1886, 2
    %v1892 = vadd.f32 %v1813, %v1890
    %v1893 = vxor.u32 %v1892, 2147483648
    %v1894 = vmul.f32 %v1893, 1.442695
    %v1895 = vpow.pop %v1894
    %v1896 = vadd.f32 %v1895, 1.0
    %v1897 = vrcp.pop %v1896
    %v1898 = vmul.f32 1.0, %v1897
    %v1899 = vmul.f32 %v1898, 2.0
    %v1900 = vsub.f32 %v1899, 1.0
    %v1902 = vrot.slane %v1477, 6
    %v1904 = vmul.f32 %v1898, %v1902
    %1906 = vrot.lane.b32.xlu0 %v1900, 64
    %v1907 = vpop.permute.xlu0 %1906
    %v1909 = vmul.f32 %v1898, %v1907
    %1911 = vrot.lane.b32.xlu0 %v1909, 32
    %v1912 = vpop.permute.xlu0 %1911
    %v1914 = vadd.f32 %v1904, %v1912
    %v1915 = vtanh.pop %v1914
    %1917 = vrot.lane.b32.xlu0 %v1915, 64
    %v1918 = vpop.permute.xlu0 %1917
    %v1920 = vmul.f32 %v1898, %v1918
    %1922 = vrot.lane.b32.xlu0 %v1920, 32
    %v1923 = vpop.permute.xlu0 %1922
    %v1925 = vrot.slane %v1591, 2
    %1926 = vrot.lane.b32.xlu0 %v1925, 64
    %v1927 = vpop.permute.xlu0 %1926
    %v1929 = vsel %vm284, %v1923, %v1927
    %v1931 = vrot.slane %v1929, 6
    %v1932 = vsel %vm400, %v1931, 0
    %1934 = vmatprep.subr.mxu0 0.0
    %1935 = vmatpush1.msra.mxu0 %v274
    %1936 = vmatprep.subr.mxu0 0.0
    %1937 = vmatpush1.msra.mxu0 %v275
    %1938 = vmatprep.subr.mxu0 0.0
    %1939 = vmatpush1.msra.mxu0 %v276
    %1940 = vmatprep.subr.mxu0 0.0
    %1941 = vmatpush1.msra.mxu0 %v277
    %1942 = vmatprep.subr.mxu0 0.0
    %1943 = vmatpush1.msra.mxu0 %v278
    %1944 = vmatprep.subr.mxu0 0.0
    %1945 = vmatpush1.msra.mxu0 %v279
    %1946 = vmatprep.subr.mxu0 0.0
    %1947 = vmatpush1.msra.mxu0 %v280
    %1948 = vmatprep.subr.mxu0 0.0
    %1949 = vmatpush1.msra.mxu0 %v281
    %1950 = vmatprep.subr.mxu0 0.0
    %1951 = vmatpush1.msra.mxu0 0.0
    %1952 = vmatprep.subr.mxu0 0.0
    %1953 = vmatpush1.msra.mxu0 0.0
    %1954 = vmatprep.subr.mxu0 0.0
    %1955 = vmatpush1.msra.mxu0 0.0
    %1956 = vmatprep.subr.mxu0 0.0
    %1957 = vmatpush1.msra.mxu0 0.0
    %1958 = vmatprep.subr.mxu0 0.0
    %1959 = vmatpush1.msra.mxu0 0.0
    %1960 = vmatprep.subr.mxu0 0.0
    %1961 = vmatpush1.msra.mxu0 0.0
    %1962 = vmatprep.subr.mxu0 0.0
    %1963 = vmatpush1.msra.mxu0 0.0
    %1964 = vmatprep.subr.mxu0 0.0
    %1965 = vmatpush1.msra.mxu0 0.0
    %1966 = vmatprep.subr.mxu0 0.0
    %1967 = vmatpush1.msra.mxu0 0.0
    %1968 = vmatprep.subr.mxu0 0.0
    %1969 = vmatpush1.msra.mxu0 0.0
    %1970 = vmatprep.subr.mxu0 0.0
    %1971 = vmatpush1.msra.mxu0 0.0
    %1972 = vmatprep.subr.mxu0 0.0
    %1973 = vmatpush1.msra.mxu0 0.0
    %1974 = vmatprep.subr.mxu0 0.0
    %1975 = vmatpush1.msra.mxu0 0.0
    %1976 = vmatprep.subr.mxu0 0.0
    %1977 = vmatpush1.msra.mxu0 0.0
    %1978 = vmatprep.subr.mxu0 0.0
    %1979 = vmatpush1.msra.mxu0 0.0
    %1980 = vmatprep.subr.mxu0 0.0
    %1981 = vmatpush1.msra.mxu0 0.0
    %1982 = vmatprep.subr.mxu0 0.0
    %1983 = vmatpush1.msra.mxu0 0.0
    %1984 = vmatprep.subr.mxu0 0.0
    %1985 = vmatpush1.msra.mxu0 0.0
    %1986 = vmatprep.subr.mxu0 0.0
    %1987 = vmatpush1.msra.mxu0 0.0
    %1988 = vmatprep.subr.mxu0 0.0
    %1989 = vmatpush1.msra.mxu0 0.0
    %1990 = vmatprep.subr.mxu0 0.0
    %1991 = vmatpush1.msra.mxu0 0.0
    %1992 = vmatprep.subr.mxu0 0.0
    %1993 = vmatpush1.msra.mxu0 0.0
    %1994 = vmatprep.subr.mxu0 0.0
    %1995 = vmatpush1.msra.mxu0 0.0
    %1996 = vmatprep.subr.mxu0 0.0
    %1997 = vmatpush1.msra.mxu0 0.0
    %1998 = vmatprep.mubr.f32.mxu0 0.0
    %1999 = vmatmul.mubr.f32.gmra.mrb[0].mxu0 %v1932
    %v2000 = vpop.f32.mrb[0].mxu0
    %v2001 = vadd.f32 %v610, %v2000
    %v2002 = vpop.f32.mrb[0].mxu0
    %2003 = vdwg.mxu0
    %v2004 = vxor.u32 %v2001, 2147483648
    %v2005 = vmul.f32 %v2004, 1.442695
    %v2006 = vpow.pop %v2005
    %v2007 = vadd.f32 %v2006, 1.0
    %v2008 = vrcp.pop %v2007
    %v2009 = vmul.f32 1.0, %v2008
    %v2010 = vmul.f32 %v2009, 2.0
    %v2011 = vsub.f32 %v2010, 1.0
    %v2012 = vmul.f32 %v2009, %v1585
    %2014 = vrot.lane.b32.xlu0 %v2011, 64
    %v2015 = vpop.permute.xlu0 %2014
    %v2017 = vmul.f32 %v2009, %v2015
    %2019 = vrot.lane.b32.xlu0 %v2017, 32
    %v2020 = vpop.permute.xlu0 %2019
    %v2022 = vadd.f32 %v2012, %v2020
    %v2023 = vtanh.pop %v2022
    %2025 = vrot.lane.b32.xlu0 %v2023, 64
    %v2026 = vpop.permute.xlu0 %2025
    %v2028 = vmul.f32 %v2009, %v2026
    %2030 = vrot.lane.b32.xlu0 %v2028, 64
    %v2031 = vpop.permute.xlu0 %2030
    %2033 = vst.msk [vmem:[#allocation3 + $0x6] sm:$0x3] %vm714, %v2031
    %v2034 = vld [vmem:[#allocation2] sm:$0xc0]
    %v2035 = vsel %vm284, %v1704, 0
    %2037 = vmatprep.subr.mxu0 0.0
    %2038 = vmatpush1.msra.mxu0 %v257
    %2039 = vmatprep.subr.mxu0 0.0
    %2040 = vmatpush1.msra.mxu0 %v258
    %2041 = vmatprep.subr.mxu0 0.0
    %2042 = vmatpush1.msra.mxu0 %v259
    %2043 = vmatprep.subr.mxu0 0.0
    %2044 = vmatpush1.msra.mxu0 %v260
    %2045 = vmatprep.subr.mxu0 0.0
    %2046 = vmatpush1.msra.mxu0 0.0
    %2047 = vmatprep.subr.mxu0 0.0
    %2048 = vmatpush1.msra.mxu0 0.0
    %2049 = vmatprep.subr.mxu0 0.0
    %2050 = vmatpush1.msra.mxu0 0.0
    %2051 = vmatprep.subr.mxu0 0.0
    %2052 = vmatpush1.msra.mxu0 0.0
    %2053 = vmatprep.subr.mxu0 0.0
    %2054 = vmatpush1.msra.mxu0 0.0
    %2055 = vmatprep.subr.mxu0 0.0
    %2056 = vmatpush1.msra.mxu0 0.0
    %2057 = vmatprep.subr.mxu0 0.0
    %2058 = vmatpush1.msra.mxu0 0.0
    %2059 = vmatprep.subr.mxu0 0.0
    %2060 = vmatpush1.msra.mxu0 0.0
    %2061 = vmatprep.subr.mxu0 0.0
    %2062 = vmatpush1.msra.mxu0 0.0
    %2063 = vmatprep.subr.mxu0 0.0
    %2064 = vmatpush1.msra.mxu0 0.0
    %2065 = vmatprep.subr.mxu0 0.0
    %2066 = vmatpush1.msra.mxu0 0.0
    %2067 = vmatprep.subr.mxu0 0.0
    %2068 = vmatpush1.msra.mxu0 0.0
    %2069 = vmatprep.subr.mxu0 0.0
    %2070 = vmatpush1.msra.mxu0 0.0
    %2071 = vmatprep.subr.mxu0 0.0
    %2072 = vmatpush1.msra.mxu0 0.0
    %2073 = vmatprep.subr.mxu0 0.0
    %2074 = vmatpush1.msra.mxu0 0.0
    %2075 = vmatprep.subr.mxu0 0.0
    %2076 = vmatpush1.msra.mxu0 0.0
    %2077 = vmatprep.subr.mxu0 0.0
    %2078 = vmatpush1.msra.mxu0 0.0
    %2079 = vmatprep.subr.mxu0 0.0
    %2080 = vmatpush1.msra.mxu0 0.0
    %2081 = vmatprep.subr.mxu0 0.0
    %2082 = vmatpush1.msra.mxu0 0.0
    %2083 = vmatprep.subr.mxu0 0.0
    %2084 = vmatpush1.msra.mxu0 0.0
    %2085 = vmatprep.subr.mxu0 0.0
    %2086 = vmatpush1.msra.mxu0 0.0
    %2087 = vmatprep.subr.mxu0 0.0
    %2088 = vmatpush1.msra.mxu0 0.0
    %2089 = vmatprep.subr.mxu0 0.0
    %2090 = vmatpush1.msra.mxu0 0.0
    %2091 = vmatprep.subr.mxu0 0.0
    %2092 = vmatpush1.msra.mxu0 0.0
    %2093 = vmatprep.subr.mxu0 0.0
    %2094 = vmatpush1.msra.mxu0 0.0
    %2095 = vmatprep.subr.mxu0 0.0
    %2096 = vmatpush1.msra.mxu0 0.0
    %2097 = vmatprep.subr.mxu0 0.0
    %2098 = vmatpush1.msra.mxu0 0.0
    %2099 = vmatprep.subr.mxu0 0.0
    %2100 = vmatpush1.msra.mxu0 0.0
    %2101 = vmatprep.mubr.f32.mxu0 0.0
    %2102 = vmatmul.mubr.f32.gmra.mrb[0].mxu0 %v2035
    %v2103 = vpop.f32.mrb[0].mxu0
    %v2104 = vadd.f32 0.0, %v2103
    %v2105 = vpop.f32.mrb[0].mxu0
    %2106 = vdwg.mxu0
    %v2108 = vrot.slane %v2104, 2
    %v2110 = vadd.f32 %v2034, %v2108
    %v2111 = vxor.u32 %v2110, 2147483648
    %v2112 = vmul.f32 %v2111, 1.442695
    %v2113 = vpow.pop %v2112
    %v2114 = vadd.f32 %v2113, 1.0
    %v2115 = vrcp.pop %v2114
    %v2116 = vmul.f32 1.0, %v2115
    %v2117 = vmul.f32 %v2116, 2.0
    %v2118 = vsub.f32 %v2117, 1.0
    %v2120 = vrot.slane %v1695, 2
    %v2122 = vmul.f32 %v2116, %v2120
    %2124 = vrot.lane.b32.xlu0 %v2118, 64
    %v2125 = vpop.permute.xlu0 %2124
    %v2127 = vmul.f32 %v2116, %v2125
    %2129 = vrot.lane.b32.xlu0 %v2127, 32
    %v2130 = vpop.permute.xlu0 %2129
    %v2132 = vadd.f32 %v2122, %v2130
    %v2133 = vtanh.pop %v2132
    %2135 = vrot.lane.b32.xlu0 %v2133, 64
    %v2136 = vpop.permute.xlu0 %2135
    %v2138 = vmul.f32 %v2116, %v2136
    %2140 = vrot.lane.b32.xlu0 %v2138, 32
    %v2141 = vpop.permute.xlu0 %2140
    %v2143 = vrot.slane %v1807, 2
    %2144 = vrot.lane.b32.xlu0 %v2143, 64
    %v2145 = vpop.permute.xlu0 %2144
    %v2147 = vsel %vm284, %v2141, %v2145
    %v2149 = vrot.slane %v2147, 6
    %v2150 = vsel %vm400, %v2149, 0
    %2152 = vmatprep.subr.mxu0 0.0
    %2153 = vmatpush1.msra.mxu0 %v261
    %2154 = vmatprep.subr.mxu0 0.0
    %2155 = vmatpush1.msra.mxu0 %v262
    %2156 = vmatprep.subr.mxu0 0.0
    %2157 = vmatpush1.msra.mxu0 %v263
    %2158 = vmatprep.subr.mxu0 0.0
    %2159 = vmatpush1.msra.mxu0 %v264
    %2160 = vmatprep.subr.mxu0 0.0
    %2161 = vmatpush1.msra.mxu0 %v265
    %2162 = vmatprep.subr.mxu0 0.0
    %2163 = vmatpush1.msra.mxu0 %v266
    %2164 = vmatprep.subr.mxu0 0.0
    %2165 = vmatpush1.msra.mxu0 %v267
    %2166 = vmatprep.subr.mxu0 0.0
    %2167 = vmatpush1.msra.mxu0 %v268
    %2168 = vmatprep.subr.mxu0 0.0
    %2169 = vmatpush1.msra.mxu0 0.0
    %2170 = vmatprep.subr.mxu0 0.0
    %2171 = vmatpush1.msra.mxu0 0.0
    %2172 = vmatprep.subr.mxu0 0.0
    %2173 = vmatpush1.msra.mxu0 0.0
    %2174 = vmatprep.subr.mxu0 0.0
    %2175 = vmatpush1.msra.mxu0 0.0
    %2176 = vmatprep.subr.mxu0 0.0
    %2177 = vmatpush1.msra.mxu0 0.0
    %2178 = vmatprep.subr.mxu0 0.0
    %2179 = vmatpush1.msra.mxu0 0.0
    %2180 = vmatprep.subr.mxu0 0.0
    %2181 = vmatpush1.msra.mxu0 0.0
    %2182 = vmatprep.subr.mxu0 0.0
    %2183 = vmatpush1.msra.mxu0 0.0
    %2184 = vmatprep.subr.mxu0 0.0
    %2185 = vmatpush1.msra.mxu0 0.0
    %2186 = vmatprep.subr.mxu0 0.0
    %2187 = vmatpush1.msra.mxu0 0.0
    %2188 = vmatprep.subr.mxu0 0.0
    %2189 = vmatpush1.msra.mxu0 0.0
    %2190 = vmatprep.subr.mxu0 0.0
    %2191 = vmatpush1.msra.mxu0 0.0
    %2192 = vmatprep.subr.mxu0 0.0
    %2193 = vmatpush1.msra.mxu0 0.0
    %2194 = vmatprep.subr.mxu0 0.0
    %2195 = vmatpush1.msra.mxu0 0.0
    %2196 = vmatprep.subr.mxu0 0.0
    %2197 = vmatpush1.msra.mxu0 0.0
    %2198 = vmatprep.subr.mxu0 0.0
    %2199 = vmatpush1.msra.mxu0 0.0
    %2200 = vmatprep.subr.mxu0 0.0
    %2201 = vmatpush1.msra.mxu0 0.0
    %2202 = vmatprep.subr.mxu0 0.0
    %2203 = vmatpush1.msra.mxu0 0.0
    %2204 = vmatprep.subr.mxu0 0.0
    %2205 = vmatpush1.msra.mxu0 0.0
    %2206 = vmatprep.subr.mxu0 0.0
    %2207 = vmatpush1.msra.mxu0 0.0
    %2208 = vmatprep.subr.mxu0 0.0
    %2209 = vmatpush1.msra.mxu0 0.0
    %2210 = vmatprep.subr.mxu0 0.0
    %2211 = vmatpush1.msra.mxu0 0.0
    %2212 = vmatprep.subr.mxu0 0.0
    %2213 = vmatpush1.msra.mxu0 0.0
    %2214 = vmatprep.subr.mxu0 0.0
    %2215 = vmatpush1.msra.mxu0 0.0
    %2216 = vmatprep.mubr.f32.mxu0 0.0
    %2217 = vmatmul.mubr.f32.gmra.mrb[0].mxu0 %v2150
    %v2218 = vpop.f32.mrb[0].mxu0
    %v2219 = vadd.f32 %v396, %v2218
    %v2220 = vpop.f32.mrb[0].mxu0
    %2221 = vdwg.mxu0
    %v2222 = vxor.u32 %v2219, 2147483648
    %v2223 = vmul.f32 %v2222, 1.442695
    %v2224 = vpow.pop %v2223
    %v2225 = vadd.f32 %v2224, 1.0
    %v2226 = vrcp.pop %v2225
    %v2227 = vmul.f32 1.0, %v2226
    %v2228 = vmul.f32 %v2227, 2.0
    %v2229 = vsub.f32 %v2228, 1.0
    %v2230 = vmul.f32 %v2227, %v1801
    %2232 = vrot.lane.b32.xlu0 %v2229, 64
    %v2233 = vpop.permute.xlu0 %2232
    %v2235 = vmul.f32 %v2227, %v2233
    %2237 = vrot.lane.b32.xlu0 %v2235, 32
    %v2238 = vpop.permute.xlu0 %2237
    %v2240 = vadd.f32 %v2230, %v2238
    %v2241 = vtanh.pop %v2240
    %2243 = vrot.lane.b32.xlu0 %v2241, 64
    %v2244 = vpop.permute.xlu0 %2243
    %v2246 = vmul.f32 %v2227, %v2244
    %2248 = vrot.lane.b32.xlu0 %v2246, 32
    %v2249 = vpop.permute.xlu0 %2248
    %2251 = vst.msk [vmem:[#allocation3 + $0x6] sm:$0x3] %vm502, %v2249
    %v2252 = vld [vmem:[#allocation2 + $0x18] sm:$0x3]
    %v2253 = vrot.slane %v1920, 6
    %2254 = vrot.lane.b32.xlu0 %v2253, 32
    %v2255 = vpop.permute.xlu0 %2254
    %v2256 = vsel %vm284, %v2255, 0
    %2258 = vmatprep.subr.mxu0 0.0
    %2259 = vmatpush1.msra.mxu0 %v270
    %2260 = vmatprep.subr.mxu0 0.0
    %2261 = vmatpush1.msra.mxu0 %v271
    %2262 = vmatprep.subr.mxu0 0.0
    %2263 = vmatpush1.msra.mxu0 %v272
    %2264 = vmatprep.subr.mxu0 0.0
    %2265 = vmatpush1.msra.mxu0 %v273
    %2266 = vmatprep.subr.mxu0 0.0
    %2267 = vmatpush1.msra.mxu0 0.0
    %2268 = vmatprep.subr.mxu0 0.0
    %2269 = vmatpush1.msra.mxu0 0.0
    %2270 = vmatprep.subr.mxu0 0.0
    %2271 = vmatpush1.msra.mxu0 0.0
    %2272 = vmatprep.subr.mxu0 0.0
    %2273 = vmatpush1.msra.mxu0 0.0
    %2274 = vmatprep.subr.mxu0 0.0
    %2275 = vmatpush1.msra.mxu0 0.0
    %2276 = vmatprep.subr.mxu0 0.0
    %2277 = vmatpush1.msra.mxu0 0.0
    %2278 = vmatprep.subr.mxu0 0.0
    %2279 = vmatpush1.msra.mxu0 0.0
    %2280 = vmatprep.subr.mxu0 0.0
    %2281 = vmatpush1.msra.mxu0 0.0
    %2282 = vmatprep.subr.mxu0 0.0
    %2283 = vmatpush1.msra.mxu0 0.0
    %2284 = vmatprep.subr.mxu0 0.0
    %2285 = vmatpush1.msra.mxu0 0.0
    %2286 = vmatprep.subr.mxu0 0.0
    %2287 = vmatpush1.msra.mxu0 0.0
    %2288 = vmatprep.subr.mxu0 0.0
    %2289 = vmatpush1.msra.mxu0 0.0
    %2290 = vmatprep.subr.mxu0 0.0
    %2291 = vmatpush1.msra.mxu0 0.0
    %2292 = vmatprep.subr.mxu0 0.0
    %2293 = vmatpush1.msra.mxu0 0.0
    %2294 = vmatprep.subr.mxu0 0.0
    %2295 = vmatpush1.msra.mxu0 0.0
    %2296 = vmatprep.subr.mxu0 0.0
    %2297 = vmatpush1.msra.mxu0 0.0
    %2298 = vmatprep.subr.mxu0 0.0
    %2299 = vmatpush1.msra.mxu0 0.0
    %2300 = vmatprep.subr.mxu0 0.0
    %2301 = vmatpush1.msra.mxu0 0.0
    %2302 = vmatprep.subr.mxu0 0.0
    %2303 = vmatpush1.msra.mxu0 0.0
    %2304 = vmatprep.subr.mxu0 0.0
    %2305 = vmatpush1.msra.mxu0 0.0
    %2306 = vmatprep.subr.mxu0 0.0
    %2307 = vmatpush1.msra.mxu0 0.0
    %2308 = vmatprep.subr.mxu0 0.0
    %2309 = vmatpush1.msra.mxu0 0.0
    %2310 = vmatprep.subr.mxu0 0.0
    %2311 = vmatpush1.msra.mxu0 0.0
    %2312 = vmatprep.subr.mxu0 0.0
    %2313 = vmatpush1.msra.mxu0 0.0
    %2314 = vmatprep.subr.mxu0 0.0
    %2315 = vmatpush1.msra.mxu0 0.0
    %2316 = vmatprep.subr.mxu0 0.0
    %2317 = vmatpush1.msra.mxu0 0.0
    %2318 = vmatprep.subr.mxu0 0.0
    %2319 = vmatpush1.msra.mxu0 0.0
    %2320 = vmatprep.subr.mxu0 0.0
    %2321 = vmatpush1.msra.mxu0 0.0
    %2322 = vmatprep.mubr.f32.mxu0 0.0
    %2323 = vmatmul.mubr.f32.gmra.mrb[0].mxu0 %v2256
    %v2324 = vpop.f32.mrb[0].mxu0
    %v2325 = vadd.f32 0.0, %v2324
    %v2326 = vpop.f32.mrb[0].mxu0
    %2327 = vdwg.mxu0
    %v2328 = vadd.f32 %v2252, %v2325
    %v2329 = vxor.u32 %v2328, 2147483648
    %v2330 = vmul.f32 %v2329, 1.442695
    %v2331 = vpow.pop %v2330
    %v2332 = vadd.f32 %v2331, 1.0
    %v2333 = vrcp.pop %v2332
    %v2334 = vmul.f32 1.0, %v2333
    %v2335 = vmul.f32 %v2334, 2.0
    %v2336 = vsub.f32 %v2335, 1.0
    %v2338 = vrot.slane %v1914, 6
    %v2340 = vmul.f32 %v2334, %v2338
    %2342 = vrot.lane.b32.xlu0 %v2336, 64
    %v2343 = vpop.permute.xlu0 %2342
    %v2345 = vmul.f32 %v2334, %v2343
    %2347 = vrot.lane.b32.xlu0 %v2345, 32
    %v2348 = vpop.permute.xlu0 %2347
    %v2350 = vadd.f32 %v2340, %v2348
    %v2351 = vtanh.pop %v2350
    %2353 = vrot.lane.b32.xlu0 %v2351, 64
    %v2354 = vpop.permute.xlu0 %2353
    %v2356 = vmul.f32 %v2334, %v2354
    %2358 = vrot.lane.b32.xlu0 %v2356, 32
    %v2359 = vpop.permute.xlu0 %2358
    %v2361 = vsel %vm284, %v2359, %v2031
    %v2363 = vsel %vm400, %v2361, 0
    %2365 = vmatprep.subr.mxu0 0.0
    %2366 = vmatpush1.msra.mxu0 %v274
    %2367 = vmatprep.subr.mxu0 0.0
    %2368 = vmatpush1.msra.mxu0 %v275
    %2369 = vmatprep.subr.mxu0 0.0
    %2370 = vmatpush1.msra.mxu0 %v276
    %2371 = vmatprep.subr.mxu0 0.0
    %2372 = vmatpush1.msra.mxu0 %v277
    %2373 = vmatprep.subr.mxu0 0.0
    %2374 = vmatpush1.msra.mxu0 %v278
    %2375 = vmatprep.subr.mxu0 0.0
    %2376 = vmatpush1.msra.mxu0 %v279
    %2377 = vmatprep.subr.mxu0 0.0
    %2378 = vmatpush1.msra.mxu0 %v280
    %2379 = vmatprep.subr.mxu0 0.0
    %2380 = vmatpush1.msra.mxu0 %v281
    %2381 = vmatprep.subr.mxu0 0.0
    %2382 = vmatpush1.msra.mxu0 0.0
    %2383 = vmatprep.subr.mxu0 0.0
    %2384 = vmatpush1.msra.mxu0 0.0
    %2385 = vmatprep.subr.mxu0 0.0
    %2386 = vmatpush1.msra.mxu0 0.0
    %2387 = vmatprep.subr.mxu0 0.0
    %2388 = vmatpush1.msra.mxu0 0.0
    %2389 = vmatprep.subr.mxu0 0.0
    %2390 = vmatpush1.msra.mxu0 0.0
    %2391 = vmatprep.subr.mxu0 0.0
    %2392 = vmatpush1.msra.mxu0 0.0
    %2393 = vmatprep.subr.mxu0 0.0
    %2394 = vmatpush1.msra.mxu0 0.0
    %2395 = vmatprep.subr.mxu0 0.0
    %2396 = vmatpush1.msra.mxu0 0.0
    %2397 = vmatprep.subr.mxu0 0.0
    %2398 = vmatpush1.msra.mxu0 0.0
    %2399 = vmatprep.subr.mxu0 0.0
    %2400 = vmatpush1.msra.mxu0 0.0
    %2401 = vmatprep.subr.mxu0 0.0
    %2402 = vmatpush1.msra.mxu0 0.0
    %2403 = vmatprep.subr.mxu0 0.0
    %2404 = vmatpush1.msra.mxu0 0.0
    %2405 = vmatprep.subr.mxu0 0.0
    %2406 = vmatpush1.msra.mxu0 0.0
    %2407 = vmatprep.subr.mxu0 0.0
    %2408 = vmatpush1.msra.mxu0 0.0
    %2409 = vmatprep.subr.mxu0 0.0
    %2410 = vmatpush1.msra.mxu0 0.0
    %2411 = vmatprep.subr.mxu0 0.0
    %2412 = vmatpush1.msra.mxu0 0.0
    %2413 = vmatprep.subr.mxu0 0.0
    %2414 = vmatpush1.msra.mxu0 0.0
    %2415 = vmatprep.subr.mxu0 0.0
    %2416 = vmatpush1.msra.mxu0 0.0
    %2417 = vmatprep.subr.mxu0 0.0
    %2418 = vmatpush1.msra.mxu0 0.0
    %2419 = vmatprep.subr.mxu0 0.0
    %2420 = vmatpush1.msra.mxu0 0.0
    %2421 = vmatprep.subr.mxu0 0.0
    %2422 = vmatpush1.msra.mxu0 0.0
    %2423 = vmatprep.subr.mxu0 0.0
    %2424 = vmatpush1.msra.mxu0 0.0
    %2425 = vmatprep.subr.mxu0 0.0
    %2426 = vmatpush1.msra.mxu0 0.0
    %2427 = vmatprep.subr.mxu0 0.0
    %2428 = vmatpush1.msra.mxu0 0.0
    %2429 = vmatprep.mubr.f32.mxu0 0.0
    %2430 = vmatmul.mubr.f32.gmra.mrb[0].mxu0 %v2363
    %v2431 = vpop.f32.mrb[0].mxu0
    %v2432 = vadd.f32 %v610, %v2431
    %v2433 = vpop.f32.mrb[0].mxu0
    %2434 = vdwg.mxu0
    %v2435 = vxor.u32 %v2432, 2147483648
    %v2436 = vmul.f32 %v2435, 1.442695
    %v2437 = vpow.pop %v2436
    %v2438 = vadd.f32 %v2437, 1.0
    %v2439 = vrcp.pop %v2438
    %v2440 = vmul.f32 1.0, %v2439
    %v2441 = vmul.f32 %v2440, 2.0
    %v2442 = vsub.f32 %v2441, 1.0
    %v2443 = vmul.f32 %v2440, %v2022
    %2445 = vrot.lane.b32.xlu0 %v2442, 64
    %v2446 = vpop.permute.xlu0 %2445
    %v2448 = vmul.f32 %v2440, %v2446
    %2450 = vrot.lane.b32.xlu0 %v2448, 32
    %v2451 = vpop.permute.xlu0 %2450
    %v2453 = vadd.f32 %v2443, %v2451
    %v2454 = vtanh.pop %v2453
    %2456 = vrot.lane.b32.xlu0 %v2454, 64
    %v2457 = vpop.permute.xlu0 %2456
    %v2459 = vmul.f32 %v2440, %v2457
    %2461 = vrot.lane.b32.xlu0 %v2459, 64
    %v2462 = vpop.permute.xlu0 %2461
    %2464 = vst.msk [vmem:[#allocation3 + $0x8] sm:$0x3] %vm714, %v2462
    %v2465 = vld [vmem:[#allocation2] sm:$0x30]
    %v2466 = vrot.slane %v2138, 6
    %2467 = vrot.lane.b32.xlu0 %v2466, 32
    %v2468 = vpop.permute.xlu0 %2467
    %v2469 = vsel %vm284, %v2468, 0
    %2471 = vmatprep.subr.mxu0 0.0
    %2472 = vmatpush1.msra.mxu0 %v257
    %2473 = vmatprep.subr.mxu0 0.0
    %2474 = vmatpush1.msra.mxu0 %v258
    %2475 = vmatprep.subr.mxu0 0.0
    %2476 = vmatpush1.msra.mxu0 %v259
    %2477 = vmatprep.subr.mxu0 0.0
    %2478 = vmatpush1.msra.mxu0 %v260
    %2479 = vmatprep.subr.mxu0 0.0
    %2480 = vmatpush1.msra.mxu0 0.0
    %2481 = vmatprep.subr.mxu0 0.0
    %2482 = vmatpush1.msra.mxu0 0.0
    %2483 = vmatprep.subr.mxu0 0.0
    %2484 = vmatpush1.msra.mxu0 0.0
    %2485 = vmatprep.subr.mxu0 0.0
    %2486 = vmatpush1.msra.mxu0 0.0
    %2487 = vmatprep.subr.mxu0 0.0
    %2488 = vmatpush1.msra.mxu0 0.0
    %2489 = vmatprep.subr.mxu0 0.0
    %2490 = vmatpush1.msra.mxu0 0.0
    %2491 = vmatprep.subr.mxu0 0.0
    %2492 = vmatpush1.msra.mxu0 0.0
    %2493 = vmatprep.subr.mxu0 0.0
    %2494 = vmatpush1.msra.mxu0 0.0
    %2495 = vmatprep.subr.mxu0 0.0
    %2496 = vmatpush1.msra.mxu0 0.0
    %2497 = vmatprep.subr.mxu0 0.0
    %2498 = vmatpush1.msra.mxu0 0.0
    %2499 = vmatprep.subr.mxu0 0.0
    %2500 = vmatpush1.msra.mxu0 0.0
    %2501 = vmatprep.subr.mxu0 0.0
    %2502 = vmatpush1.msra.mxu0 0.0
    %2503 = vmatprep.subr.mxu0 0.0
    %2504 = vmatpush1.msra.mxu0 0.0
    %2505 = vmatprep.subr.mxu0 0.0
    %2506 = vmatpush1.msra.mxu0 0.0
    %2507 = vmatprep.subr.mxu0 0.0
    %2508 = vmatpush1.msra.mxu0 0.0
    %2509 = vmatprep.subr.mxu0 0.0
    %2510 = vmatpush1.msra.mxu0 0.0
    %2511 = vmatprep.subr.mxu0 0.0
    %2512 = vmatpush1.msra.mxu0 0.0
    %2513 = vmatprep.subr.mxu0 0.0
    %2514 = vmatpush1.msra.mxu0 0.0
    %2515 = vmatprep.subr.mxu0 0.0
    %2516 = vmatpush1.msra.mxu0 0.0
    %2517 = vmatprep.subr.mxu0 0.0
    %2518 = vmatpush1.msra.mxu0 0.0
    %2519 = vmatprep.subr.mxu0 0.0
    %2520 = vmatpush1.msra.mxu0 0.0
    %2521 = vmatprep.subr.mxu0 0.0
    %2522 = vmatpush1.msra.mxu0 0.0
    %2523 = vmatprep.subr.mxu0 0.0
    %2524 = vmatpush1.msra.mxu0 0.0
    %2525 = vmatprep.subr.mxu0 0.0
    %2526 = vmatpush1.msra.mxu0 0.0
    %2527 = vmatprep.subr.mxu0 0.0
    %2528 = vmatpush1.msra.mxu0 0.0
    %2529 = vmatprep.subr.mxu0 0.0
    %2530 = vmatpush1.msra.mxu0 0.0
    %2531 = vmatprep.subr.mxu0 0.0
    %2532 = vmatpush1.msra.mxu0 0.0
    %2533 = vmatprep.subr.mxu0 0.0
    %2534 = vmatpush1.msra.mxu0 0.0
    %2535 = vmatprep.mubr.f32.mxu0 0.0
    %2536 = vmatmul.mubr.f32.gmra.mrb[0].mxu0 %v2469
    %v2537 = vpop.f32.mrb[0].mxu0
    %v2538 = vadd.f32 0.0, %v2537
    %v2539 = vpop.f32.mrb[0].mxu0
    %2540 = vdwg.mxu0
    %v2542 = vrot.slane %v2538, 4
    %v2544 = vadd.f32 %v2465, %v2542
    %v2545 = vxor.u32 %v2544, 2147483648
    %v2546 = vmul.f32 %v2545, 1.442695
    %v2547 = vpow.pop %v2546
    %v2548 = vadd.f32 %v2547, 1.0
    %v2549 = vrcp.pop %v2548
    %v2550 = vmul.f32 1.0, %v2549
    %v2551 = vmul.f32 %v2550, 2.0
    %v2552 = vsub.f32 %v2551, 1.0
    %v2554 = vrot.slane %v2132, 2
    %v2556 = vmul.f32 %v2550, %v2554
    %2558 = vrot.lane.b32.xlu0 %v2552, 64
    %v2559 = vpop.permute.xlu0 %2558
    %v2561 = vmul.f32 %v2550, %v2559
    %2563 = vrot.lane.b32.xlu0 %v2561, 32
    %v2564 = vpop.permute.xlu0 %2563
    %v2566 = vadd.f32 %v2556, %v2564
    %v2567 = vtanh.pop %v2566
    %2569 = vrot.lane.b32.xlu0 %v2567, 64
    %v2570 = vpop.permute.xlu0 %2569
    %v2572 = vmul.f32 %v2550, %v2570
    %2574 = vrot.lane.b32.xlu0 %v2572, 32
    %v2575 = vpop.permute.xlu0 %2574
    %v2577 = vrot.slane %v2246, 4
    %2578 = vrot.lane.b32.xlu0 %v2577, 64
    %v2579 = vpop.permute.xlu0 %2578
    %v2581 = vsel %vm284, %v2575, %v2579
    %v2583 = vrot.slane %v2581, 4
    %v2584 = vsel %vm400, %v2583, 0
    %2586 = vmatprep.subr.mxu0 0.0
    %2587 = vmatpush1.msra.mxu0 %v261
    %2588 = vmatprep.subr.mxu0 0.0
    %2589 = vmatpush1.msra.mxu0 %v262
    %2590 = vmatprep.subr.mxu0 0.0
    %2591 = vmatpush1.msra.mxu0 %v263
    %2592 = vmatprep.subr.mxu0 0.0
    %2593 = vmatpush1.msra.mxu0 %v264
    %2594 = vmatprep.subr.mxu0 0.0
    %2595 = vmatpush1.msra.mxu0 %v265
    %2596 = vmatprep.subr.mxu0 0.0
    %2597 = vmatpush1.msra.mxu0 %v266
    %2598 = vmatprep.subr.mxu0 0.0
    %2599 = vmatpush1.msra.mxu0 %v267
    %2600 = vmatprep.subr.mxu0 0.0
    %2601 = vmatpush1.msra.mxu0 %v268
    %2602 = vmatprep.subr.mxu0 0.0
    %2603 = vmatpush1.msra.mxu0 0.0
    %2604 = vmatprep.subr.mxu0 0.0
    %2605 = vmatpush1.msra.mxu0 0.0
    %2606 = vmatprep.subr.mxu0 0.0
    %2607 = vmatpush1.msra.mxu0 0.0
    %2608 = vmatprep.subr.mxu0 0.0
    %2609 = vmatpush1.msra.mxu0 0.0
    %2610 = vmatprep.subr.mxu0 0.0
    %2611 = vmatpush1.msra.mxu0 0.0
    %2612 = vmatprep.subr.mxu0 0.0
    %2613 = vmatpush1.msra.mxu0 0.0
    %2614 = vmatprep.subr.mxu0 0.0
    %2615 = vmatpush1.msra.mxu0 0.0
    %2616 = vmatprep.subr.mxu0 0.0
    %2617 = vmatpush1.msra.mxu0 0.0
    %2618 = vmatprep.subr.mxu0 0.0
    %2619 = vmatpush1.msra.mxu0 0.0
    %2620 = vmatprep.subr.mxu0 0.0
    %2621 = vmatpush1.msra.mxu0 0.0
    %2622 = vmatprep.subr.mxu0 0.0
    %2623 = vmatpush1.msra.mxu0 0.0
    %2624 = vmatprep.subr.mxu0 0.0
    %2625 = vmatpush1.msra.mxu0 0.0
    %2626 = vmatprep.subr.mxu0 0.0
    %2627 = vmatpush1.msra.mxu0 0.0
    %2628 = vmatprep.subr.mxu0 0.0
    %2629 = vmatpush1.msra.mxu0 0.0
    %2630 = vmatprep.subr.mxu0 0.0
    %2631 = vmatpush1.msra.mxu0 0.0
    %2632 = vmatprep.subr.mxu0 0.0
    %2633 = vmatpush1.msra.mxu0 0.0
    %2634 = vmatprep.subr.mxu0 0.0
    %2635 = vmatpush1.msra.mxu0 0.0
    %2636 = vmatprep.subr.mxu0 0.0
    %2637 = vmatpush1.msra.mxu0 0.0
    %2638 = vmatprep.subr.mxu0 0.0
    %2639 = vmatpush1.msra.mxu0 0.0
    %2640 = vmatprep.subr.mxu0 0.0
    %2641 = vmatpush1.msra.mxu0 0.0
    %2642 = vmatprep.subr.mxu0 0.0
    %2643 = vmatpush1.msra.mxu0 0.0
    %2644 = vmatprep.subr.mxu0 0.0
    %2645 = vmatpush1.msra.mxu0 0.0
    %2646 = vmatprep.subr.mxu0 0.0
    %2647 = vmatpush1.msra.mxu0 0.0
    %2648 = vmatprep.subr.mxu0 0.0
    %2649 = vmatpush1.msra.mxu0 0.0
    %2650 = vmatprep.mubr.f32.mxu0 0.0
    %2651 = vmatmul.mubr.f32.gmra.mrb[0].mxu0 %v2584
    %v2652 = vpop.f32.mrb[0].mxu0
    %v2653 = vadd.f32 %v396, %v2652
    %v2654 = vpop.f32.mrb[0].mxu0
    %2655 = vdwg.mxu0
    %v2656 = vxor.u32 %v2653, 2147483648
    %v2657 = vmul.f32 %v2656, 1.442695
    %v2658 = vpow.pop %v2657
    %v2659 = vadd.f32 %v2658, 1.0
    %v2660 = vrcp.pop %v2659
    %v2661 = vmul.f32 1.0, %v2660
    %v2662 = vmul.f32 %v2661, 2.0
    %v2663 = vsub.f32 %v2662, 1.0
    %v2664 = vmul.f32 %v2661, %v2240
    %2666 = vrot.lane.b32.xlu0 %v2663, 64
    %v2667 = vpop.permute.xlu0 %2666
    %v2669 = vmul.f32 %v2661, %v2667
    %2671 = vrot.lane.b32.xlu0 %v2669, 32
    %v2672 = vpop.permute.xlu0 %2671
    %v2674 = vadd.f32 %v2664, %v2672
    %v2675 = vtanh.pop %v2674
    %2677 = vrot.lane.b32.xlu0 %v2675, 64
    %v2678 = vpop.permute.xlu0 %2677
    %v2680 = vmul.f32 %v2661, %v2678
    %2682 = vrot.lane.b32.xlu0 %v2680, 32
    %v2683 = vpop.permute.xlu0 %2682
    %2685 = vst.msk [vmem:[#allocation3 + $0x4] sm:$0x3] %vm502, %v2683
    %v2686 = vld [vmem:[#allocation2 + $0x18] sm:$0xc]
    %v2687 = vsel %vm284, %v2359, 0
    %2689 = vmatprep.subr.mxu0 0.0
    %2690 = vmatpush1.msra.mxu0 %v270
    %2691 = vmatprep.subr.mxu0 0.0
    %2692 = vmatpush1.msra.mxu0 %v271
    %2693 = vmatprep.subr.mxu0 0.0
    %2694 = vmatpush1.msra.mxu0 %v272
    %2695 = vmatprep.subr.mxu0 0.0
    %2696 = vmatpush1.msra.mxu0 %v273
    %2697 = vmatprep.subr.mxu0 0.0
    %2698 = vmatpush1.msra.mxu0 0.0
    %2699 = vmatprep.subr.mxu0 0.0
    %2700 = vmatpush1.msra.mxu0 0.0
    %2701 = vmatprep.subr.mxu0 0.0
    %2702 = vmatpush1.msra.mxu0 0.0
    %2703 = vmatprep.subr.mxu0 0.0
    %2704 = vmatpush1.msra.mxu0 0.0
    %2705 = vmatprep.subr.mxu0 0.0
    %2706 = vmatpush1.msra.mxu0 0.0
    %2707 = vmatprep.subr.mxu0 0.0
    %2708 = vmatpush1.msra.mxu0 0.0
    %2709 = vmatprep.subr.mxu0 0.0
    %2710 = vmatpush1.msra.mxu0 0.0
    %2711 = vmatprep.subr.mxu0 0.0
    %2712 = vmatpush1.msra.mxu0 0.0
    %2713 = vmatprep.subr.mxu0 0.0
    %2714 = vmatpush1.msra.mxu0 0.0
    %2715 = vmatprep.subr.mxu0 0.0
    %2716 = vmatpush1.msra.mxu0 0.0
    %2717 = vmatprep.subr.mxu0 0.0
    %2718 = vmatpush1.msra.mxu0 0.0
    %2719 = vmatprep.subr.mxu0 0.0
    %2720 = vmatpush1.msra.mxu0 0.0
    %2721 = vmatprep.subr.mxu0 0.0
    %2722 = vmatpush1.msra.mxu0 0.0
    %2723 = vmatprep.subr.mxu0 0.0
    %2724 = vmatpush1.msra.mxu0 0.0
    %2725 = vmatprep.subr.mxu0 0.0
    %2726 = vmatpush1.msra.mxu0 0.0
    %2727 = vmatprep.subr.mxu0 0.0
    %2728 = vmatpush1.msra.mxu0 0.0
    %2729 = vmatprep.subr.mxu0 0.0
    %2730 = vmatpush1.msra.mxu0 0.0
    %2731 = vmatprep.subr.mxu0 0.0
    %2732 = vmatpush1.msra.mxu0 0.0
    %2733 = vmatprep.subr.mxu0 0.0
    %2734 = vmatpush1.msra.mxu0 0.0
    %2735 = vmatprep.subr.mxu0 0.0
    %2736 = vmatpush1.msra.mxu0 0.0
    %2737 = vmatprep.subr.mxu0 0.0
    %2738 = vmatpush1.msra.mxu0 0.0
    %2739 = vmatprep.subr.mxu0 0.0
    %2740 = vmatpush1.msra.mxu0 0.0
    %2741 = vmatprep.subr.mxu0 0.0
    %2742 = vmatpush1.msra.mxu0 0.0
    %2743 = vmatprep.subr.mxu0 0.0
    %2744 = vmatpush1.msra.mxu0 0.0
    %2745 = vmatprep.subr.mxu0 0.0
    %2746 = vmatpush1.msra.mxu0 0.0
    %2747 = vmatprep.subr.mxu0 0.0
    %2748 = vmatpush1.msra.mxu0 0.0
    %2749 = vmatprep.subr.mxu0 0.0
    %2750 = vmatpush1.msra.mxu0 0.0
    %2751 = vmatprep.subr.mxu0 0.0
    %2752 = vmatpush1.msra.mxu0 0.0
    %2753 = vmatprep.mubr.f32.mxu0 0.0
    %2754 = vmatmul.mubr.f32.gmra.mrb[0].mxu0 %v2687
    %v2755 = vpop.f32.mrb[0].mxu0
    %v2756 = vadd.f32 0.0, %v2755
    %v2757 = vpop.f32.mrb[0].mxu0
    %2758 = vdwg.mxu0
    %v2760 = vrot.slane %v2756, 6
    %v2762 = vadd.f32 %v2686, %v2760
    %v2763 = vxor.u32 %v2762, 2147483648
    %v2764 = vmul.f32 %v2763, 1.442695
    %v2765 = vpow.pop %v2764
    %v2766 = vadd.f32 %v2765, 1.0
    %v2767 = vrcp.pop %v2766
    %v2768 = vmul.f32 1.0, %v2767
    %v2769 = vmul.f32 %v2768, 2.0
    %v2770 = vsub.f32 %v2769, 1.0
    %v2772 = vrot.slane %v2350, 6
    %v2774 = vmul.f32 %v2768, %v2772
    %2776 = vrot.lane.b32.xlu0 %v2770, 64
    %v2777 = vpop.permute.xlu0 %2776
    %v2779 = vmul.f32 %v2768, %v2777
    %2781 = vrot.lane.b32.xlu0 %v2779, 32
    %v2782 = vpop.permute.xlu0 %2781
    %v2784 = vadd.f32 %v2774, %v2782
    %v2785 = vtanh.pop %v2784
    %2787 = vrot.lane.b32.xlu0 %v2785, 64
    %v2788 = vpop.permute.xlu0 %2787
    %v2790 = vmul.f32 %v2768, %v2788
    %2792 = vrot.lane.b32.xlu0 %v2790, 32
    %v2793 = vpop.permute.xlu0 %2792
    %v2795 = vrot.slane %v2459, 6
    %2796 = vrot.lane.b32.xlu0 %v2795, 64
    %v2797 = vpop.permute.xlu0 %2796
    %v2799 = vsel %vm284, %v2793, %v2797
    %v2801 = vrot.slane %v2799, 2
    %v2802 = vsel %vm400, %v2801, 0
    %2804 = vmatprep.subr.mxu0 0.0
    %2805 = vmatpush1.msra.mxu0 %v274
    %2806 = vmatprep.subr.mxu0 0.0
    %2807 = vmatpush1.msra.mxu0 %v275
    %2808 = vmatprep.subr.mxu0 0.0
    %2809 = vmatpush1.msra.mxu0 %v276
    %2810 = vmatprep.subr.mxu0 0.0
    %2811 = vmatpush1.msra.mxu0 %v277
    %2812 = vmatprep.subr.mxu0 0.0
    %2813 = vmatpush1.msra.mxu0 %v278
    %2814 = vmatprep.subr.mxu0 0.0
    %2815 = vmatpush1.msra.mxu0 %v279
    %2816 = vmatprep.subr.mxu0 0.0
    %2817 = vmatpush1.msra.mxu0 %v280
    %2818 = vmatprep.subr.mxu0 0.0
    %2819 = vmatpush1.msra.mxu0 %v281
    %2820 = vmatprep.subr.mxu0 0.0
    %2821 = vmatpush1.msra.mxu0 0.0
    %2822 = vmatprep.subr.mxu0 0.0
    %2823 = vmatpush1.msra.mxu0 0.0
    %2824 = vmatprep.subr.mxu0 0.0
    %2825 = vmatpush1.msra.mxu0 0.0
    %2826 = vmatprep.subr.mxu0 0.0
    %2827 = vmatpush1.msra.mxu0 0.0
    %2828 = vmatprep.subr.mxu0 0.0
    %2829 = vmatpush1.msra.mxu0 0.0
    %2830 = vmatprep.subr.mxu0 0.0
    %2831 = vmatpush1.msra.mxu0 0.0
    %2832 = vmatprep.subr.mxu0 0.0
    %2833 = vmatpush1.msra.mxu0 0.0
    %2834 = vmatprep.subr.mxu0 0.0
    %2835 = vmatpush1.msra.mxu0 0.0
    %2836 = vmatprep.subr.mxu0 0.0
    %2837 = vmatpush1.msra.mxu0 0.0
    %2838 = vmatprep.subr.mxu0 0.0
    %2839 = vmatpush1.msra.mxu0 0.0
    %2840 = vmatprep.subr.mxu0 0.0
    %2841 = vmatpush1.msra.mxu0 0.0
    %2842 = vmatprep.subr.mxu0 0.0
    %2843 = vmatpush1.msra.mxu0 0.0
    %2844 = vmatprep.subr.mxu0 0.0
    %2845 = vmatpush1.msra.mxu0 0.0
    %2846 = vmatprep.subr.mxu0 0.0
    %2847 = vmatpush1.msra.mxu0 0.0
    %2848 = vmatprep.subr.mxu0 0.0
    %2849 = vmatpush1.msra.mxu0 0.0
    %2850 = vmatprep.subr.mxu0 0.0
    %2851 = vmatpush1.msra.mxu0 0.0
    %2852 = vmatprep.subr.mxu0 0.0
    %2853 = vmatpush1.msra.mxu0 0.0
    %2854 = vmatprep.subr.mxu0 0.0
    %2855 = vmatpush1.msra.mxu0 0.0
    %2856 = vmatprep.subr.mxu0 0.0
    %2857 = vmatpush1.msra.mxu0 0.0
    %2858 = vmatprep.subr.mxu0 0.0
    %2859 = vmatpush1.msra.mxu0 0.0
    %2860 = vmatprep.subr.mxu0 0.0
    %2861 = vmatpush1.msra.mxu0 0.0
    %2862 = vmatprep.subr.mxu0 0.0
    %2863 = vmatpush1.msra.mxu0 0.0
    %2864 = vmatprep.subr.mxu0 0.0
    %2865 = vmatpush1.msra.mxu0 0.0
    %2866 = vmatprep.subr.mxu0 0.0
    %2867 = vmatpush1.msra.mxu0 0.0
    %2868 = vmatprep.mubr.f32.mxu0 0.0
    %2869 = vmatmul.mubr.f32.gmra.mrb[0].mxu0 %v2802
    %v2870 = vpop.f32.mrb[0].mxu0
    %v2871 = vadd.f32 %v610, %v2870
    %v2872 = vpop.f32.mrb[0].mxu0
    %2873 = vdwg.mxu0
    %v2874 = vxor.u32 %v2871, 2147483648
    %v2875 = vmul.f32 %v2874, 1.442695
    %v2876 = vpow.pop %v2875
    %v2877 = vadd.f32 %v2876, 1.0
    %v2878 = vrcp.pop %v2877
    %v2879 = vmul.f32 1.0, %v2878
    %v2880 = vmul.f32 %v2879, 2.0
    %v2881 = vsub.f32 %v2880, 1.0
    %v2882 = vmul.f32 %v2879, %v2453
    %2884 = vrot.lane.b32.xlu0 %v2881, 64
    %v2885 = vpop.permute.xlu0 %2884
    %v2887 = vmul.f32 %v2879, %v2885
    %2889 = vrot.lane.b32.xlu0 %v2887, 32
    %v2890 = vpop.permute.xlu0 %2889
    %v2892 = vadd.f32 %v2882, %v2890
    %v2893 = vtanh.pop %v2892
    %2895 = vrot.lane.b32.xlu0 %v2893, 64
    %v2896 = vpop.permute.xlu0 %2895
    %v2898 = vmul.f32 %v2879, %v2896
    %2900 = vrot.lane.b32.xlu0 %v2898, 64
    %v2901 = vpop.permute.xlu0 %2900
    %2903 = vst.msk [vmem:[#allocation3 + $0xa] sm:$0x3] %vm714, %v2901
    %v2904 = vld [vmem:[#allocation2] sm:$0xc]
    %v2905 = vrot.slane %v2572, 4
    %2906 = vrot.lane.b32.xlu0 %v2905, 32
    %v2907 = vpop.permute.xlu0 %2906
    %v2908 = vsel %vm284, %v2907, 0
    %2910 = vmatprep.subr.mxu0 0.0
    %2911 = vmatpush1.msra.mxu0 %v257
    %2912 = vmatprep.subr.mxu0 0.0
    %2913 = vmatpush1.msra.mxu0 %v258
    %2914 = vmatprep.subr.mxu0 0.0
    %2915 = vmatpush1.msra.mxu0 %v259
    %2916 = vmatprep.subr.mxu0 0.0
    %2917 = vmatpush1.msra.mxu0 %v260
    %2918 = vmatprep.subr.mxu0 0.0
    %2919 = vmatpush1.msra.mxu0 0.0
    %2920 = vmatprep.subr.mxu0 0.0
    %2921 = vmatpush1.msra.mxu0 0.0
    %2922 = vmatprep.subr.mxu0 0.0
    %2923 = vmatpush1.msra.mxu0 0.0
    %2924 = vmatprep.subr.mxu0 0.0
    %2925 = vmatpush1.msra.mxu0 0.0
    %2926 = vmatprep.subr.mxu0 0.0
    %2927 = vmatpush1.msra.mxu0 0.0
    %2928 = vmatprep.subr.mxu0 0.0
    %2929 = vmatpush1.msra.mxu0 0.0
    %2930 = vmatprep.subr.mxu0 0.0
    %2931 = vmatpush1.msra.mxu0 0.0
    %2932 = vmatprep.subr.mxu0 0.0
    %2933 = vmatpush1.msra.mxu0 0.0
    %2934 = vmatprep.subr.mxu0 0.0
    %2935 = vmatpush1.msra.mxu0 0.0
    %2936 = vmatprep.subr.mxu0 0.0
    %2937 = vmatpush1.msra.mxu0 0.0
    %2938 = vmatprep.subr.mxu0 0.0
    %2939 = vmatpush1.msra.mxu0 0.0
    %2940 = vmatprep.subr.mxu0 0.0
    %2941 = vmatpush1.msra.mxu0 0.0
    %2942 = vmatprep.subr.mxu0 0.0
    %2943 = vmatpush1.msra.mxu0 0.0
    %2944 = vmatprep.subr.mxu0 0.0
    %2945 = vmatpush1.msra.mxu0 0.0
    %2946 = vmatprep.subr.mxu0 0.0
    %2947 = vmatpush1.msra.mxu0 0.0
    %2948 = vmatprep.subr.mxu0 0.0
    %2949 = vmatpush1.msra.mxu0 0.0
    %2950 = vmatprep.subr.mxu0 0.0
    %2951 = vmatpush1.msra.mxu0 0.0
    %2952 = vmatprep.subr.mxu0 0.0
    %2953 = vmatpush1.msra.mxu0 0.0
    %2954 = vmatprep.subr.mxu0 0.0
    %2955 = vmatpush1.msra.mxu0 0.0
    %2956 = vmatprep.subr.mxu0 0.0
    %2957 = vmatpush1.msra.mxu0 0.0
    %2958 = vmatprep.subr.mxu0 0.0
    %2959 = vmatpush1.msra.mxu0 0.0
    %2960 = vmatprep.subr.mxu0 0.0
    %2961 = vmatpush1.msra.mxu0 0.0
    %2962 = vmatprep.subr.mxu0 0.0
    %2963 = vmatpush1.msra.mxu0 0.0
    %2964 = vmatprep.subr.mxu0 0.0
    %2965 = vmatpush1.msra.mxu0 0.0
    %2966 = vmatprep.subr.mxu0 0.0
    %2967 = vmatpush1.msra.mxu0 0.0
    %2968 = vmatprep.subr.mxu0 0.0
    %2969 = vmatpush1.msra.mxu0 0.0
    %2970 = vmatprep.subr.mxu0 0.0
    %2971 = vmatpush1.msra.mxu0 0.0
    %2972 = vmatprep.subr.mxu0 0.0
    %2973 = vmatpush1.msra.mxu0 0.0
    %2974 = vmatprep.mubr.f32.mxu0 0.0
    %2975 = vmatmul.mubr.f32.gmra.mrb[0].mxu0 %v2908
    %v2976 = vpop.f32.mrb[0].mxu0
    %v2977 = vadd.f32 0.0, %v2976
    %v2978 = vpop.f32.mrb[0].mxu0
    %2979 = vdwg.mxu0
    %v2981 = vrot.slane %v2977, 6
    %v2983 = vadd.f32 %v2904, %v2981
    %v2984 = vxor.u32 %v2983, 2147483648
    %v2985 = vmul.f32 %v2984, 1.442695
    %v2986 = vpow.pop %v2985
    %v2987 = vadd.f32 %v2986, 1.0
    %v2988 = vrcp.pop %v2987
    %v2989 = vmul.f32 1.0, %v2988
    %v2990 = vmul.f32 %v2989, 2.0
    %v2991 = vsub.f32 %v2990, 1.0
    %v2993 = vrot.slane %v2566, 2
    %v2995 = vmul.f32 %v2989, %v2993
    %2997 = vrot.lane.b32.xlu0 %v2991, 64
    %v2998 = vpop.permute.xlu0 %2997
    %v3000 = vmul.f32 %v2989, %v2998
    %3002 = vrot.lane.b32.xlu0 %v3000, 32
    %v3003 = vpop.permute.xlu0 %3002
    %v3005 = vadd.f32 %v2995, %v3003
    %v3006 = vtanh.pop %v3005
    %3008 = vrot.lane.b32.xlu0 %v3006, 64
    %v3009 = vpop.permute.xlu0 %3008
    %v3011 = vmul.f32 %v2989, %v3009
    %3013 = vrot.lane.b32.xlu0 %v3011, 32
    %v3014 = vpop.permute.xlu0 %3013
    %v3016 = vrot.slane %v2680, 6
    %3017 = vrot.lane.b32.xlu0 %v3016, 64
    %v3018 = vpop.permute.xlu0 %3017
    %v3020 = vsel %vm284, %v3014, %v3018
    %v3022 = vrot.slane %v3020, 2
    %v3023 = vsel %vm400, %v3022, 0
    %3025 = vmatprep.subr.mxu0 0.0
    %3026 = vmatpush1.msra.mxu0 %v261
    %3027 = vmatprep.subr.mxu0 0.0
    %3028 = vmatpush1.msra.mxu0 %v262
    %3029 = vmatprep.subr.mxu0 0.0
    %3030 = vmatpush1.msra.mxu0 %v263
    %3031 = vmatprep.subr.mxu0 0.0
    %3032 = vmatpush1.msra.mxu0 %v264
    %3033 = vmatprep.subr.mxu0 0.0
    %3034 = vmatpush1.msra.mxu0 %v265
    %3035 = vmatprep.subr.mxu0 0.0
    %3036 = vmatpush1.msra.mxu0 %v266
    %3037 = vmatprep.subr.mxu0 0.0
    %3038 = vmatpush1.msra.mxu0 %v267
    %3039 = vmatprep.subr.mxu0 0.0
    %3040 = vmatpush1.msra.mxu0 %v268
    %3041 = vmatprep.subr.mxu0 0.0
    %3042 = vmatpush1.msra.mxu0 0.0
    %3043 = vmatprep.subr.mxu0 0.0
    %3044 = vmatpush1.msra.mxu0 0.0
    %3045 = vmatprep.subr.mxu0 0.0
    %3046 = vmatpush1.msra.mxu0 0.0
    %3047 = vmatprep.subr.mxu0 0.0
    %3048 = vmatpush1.msra.mxu0 0.0
    %3049 = vmatprep.subr.mxu0 0.0
    %3050 = vmatpush1.msra.mxu0 0.0
    %3051 = vmatprep.subr.mxu0 0.0
    %3052 = vmatpush1.msra.mxu0 0.0
    %3053 = vmatprep.subr.mxu0 0.0
    %3054 = vmatpush1.msra.mxu0 0.0
    %3055 = vmatprep.subr.mxu0 0.0
    %3056 = vmatpush1.msra.mxu0 0.0
    %3057 = vmatprep.subr.mxu0 0.0
    %3058 = vmatpush1.msra.mxu0 0.0
    %3059 = vmatprep.subr.mxu0 0.0
    %3060 = vmatpush1.msra.mxu0 0.0
    %3061 = vmatprep.subr.mxu0 0.0
    %3062 = vmatpush1.msra.mxu0 0.0
    %3063 = vmatprep.subr.mxu0 0.0
    %3064 = vmatpush1.msra.mxu0 0.0
    %3065 = vmatprep.subr.mxu0 0.0
    %3066 = vmatpush1.msra.mxu0 0.0
    %3067 = vmatprep.subr.mxu0 0.0
    %3068 = vmatpush1.msra.mxu0 0.0
    %3069 = vmatprep.subr.mxu0 0.0
    %3070 = vmatpush1.msra.mxu0 0.0
    %3071 = vmatprep.subr.mxu0 0.0
    %3072 = vmatpush1.msra.mxu0 0.0
    %3073 = vmatprep.subr.mxu0 0.0
    %3074 = vmatpush1.msra.mxu0 0.0
    %3075 = vmatprep.subr.mxu0 0.0
    %3076 = vmatpush1.msra.mxu0 0.0
    %3077 = vmatprep.subr.mxu0 0.0
    %3078 = vmatpush1.msra.mxu0 0.0
    %3079 = vmatprep.subr.mxu0 0.0
    %3080 = vmatpush1.msra.mxu0 0.0
    %3081 = vmatprep.subr.mxu0 0.0
    %3082 = vmatpush1.msra.mxu0 0.0
    %3083 = vmatprep.subr.mxu0 0.0
    %3084 = vmatpush1.msra.mxu0 0.0
    %3085 = vmatprep.subr.mxu0 0.0
    %3086 = vmatpush1.msra.mxu0 0.0
    %3087 = vmatprep.subr.mxu0 0.0
    %3088 = vmatpush1.msra.mxu0 0.0
    %3089 = vmatprep.mubr.f32.mxu0 0.0
    %3090 = vmatmul.mubr.f32.gmra.mrb[0].mxu0 %v3023
    %v3091 = vpop.f32.mrb[0].mxu0
    %v3092 = vadd.f32 %v396, %v3091
    %v3093 = vpop.f32.mrb[0].mxu0
    %3094 = vdwg.mxu0
    %v3095 = vxor.u32 %v3092, 2147483648
    %v3096 = vmul.f32 %v3095, 1.442695
    %v3097 = vpow.pop %v3096
    %v3098 = vadd.f32 %v3097, 1.0
    %v3099 = vrcp.pop %v3098
    %v3100 = vmul.f32 1.0, %v3099
    %v3101 = vmul.f32 %v3100, 2.0
    %v3102 = vsub.f32 %v3101, 1.0
    %v3103 = vmul.f32 %v3100, %v2674
    %3105 = vrot.lane.b32.xlu0 %v3102, 64
    %v3106 = vpop.permute.xlu0 %3105
    %v3108 = vmul.f32 %v3100, %v3106
    %3110 = vrot.lane.b32.xlu0 %v3108, 32
    %v3111 = vpop.permute.xlu0 %3110
    %v3113 = vadd.f32 %v3103, %v3111
    %v3114 = vtanh.pop %v3113
    %3116 = vrot.lane.b32.xlu0 %v3114, 64
    %v3117 = vpop.permute.xlu0 %3116
    %v3119 = vmul.f32 %v3100, %v3117
    %3121 = vrot.lane.b32.xlu0 %v3119, 32
    %v3122 = vpop.permute.xlu0 %3121
    %3124 = vst.msk [vmem:[#allocation3 + $0x2] sm:$0x3] %vm502, %v3122
    %v3125 = vld [vmem:[#allocation2 + $0x18] sm:$0x30]
    %v3126 = vrot.slane %v2790, 2
    %3127 = vrot.lane.b32.xlu0 %v3126, 32
    %v3128 = vpop.permute.xlu0 %3127
    %v3129 = vsel %vm284, %v3128, 0
    %3131 = vmatprep.subr.mxu0 0.0
    %3132 = vmatpush1.msra.mxu0 %v270
    %3133 = vmatprep.subr.mxu0 0.0
    %3134 = vmatpush1.msra.mxu0 %v271
    %3135 = vmatprep.subr.mxu0 0.0
    %3136 = vmatpush1.msra.mxu0 %v272
    %3137 = vmatprep.subr.mxu0 0.0
    %3138 = vmatpush1.msra.mxu0 %v273
    %3139 = vmatprep.subr.mxu0 0.0
    %3140 = vmatpush1.msra.mxu0 0.0
    %3141 = vmatprep.subr.mxu0 0.0
    %3142 = vmatpush1.msra.mxu0 0.0
    %3143 = vmatprep.subr.mxu0 0.0
    %3144 = vmatpush1.msra.mxu0 0.0
    %3145 = vmatprep.subr.mxu0 0.0
    %3146 = vmatpush1.msra.mxu0 0.0
    %3147 = vmatprep.subr.mxu0 0.0
    %3148 = vmatpush1.msra.mxu0 0.0
    %3149 = vmatprep.subr.mxu0 0.0
    %3150 = vmatpush1.msra.mxu0 0.0
    %3151 = vmatprep.subr.mxu0 0.0
    %3152 = vmatpush1.msra.mxu0 0.0
    %3153 = vmatprep.subr.mxu0 0.0
    %3154 = vmatpush1.msra.mxu0 0.0
    %3155 = vmatprep.subr.mxu0 0.0
    %3156 = vmatpush1.msra.mxu0 0.0
    %3157 = vmatprep.subr.mxu0 0.0
    %3158 = vmatpush1.msra.mxu0 0.0
    %3159 = vmatprep.subr.mxu0 0.0
    %3160 = vmatpush1.msra.mxu0 0.0
    %3161 = vmatprep.subr.mxu0 0.0
    %3162 = vmatpush1.msra.mxu0 0.0
    %3163 = vmatprep.subr.mxu0 0.0
    %3164 = vmatpush1.msra.mxu0 0.0
    %3165 = vmatprep.subr.mxu0 0.0
    %3166 = vmatpush1.msra.mxu0 0.0
    %3167 = vmatprep.subr.mxu0 0.0
    %3168 = vmatpush1.msra.mxu0 0.0
    %3169 = vmatprep.subr.mxu0 0.0
    %3170 = vmatpush1.msra.mxu0 0.0
    %3171 = vmatprep.subr.mxu0 0.0
    %3172 = vmatpush1.msra.mxu0 0.0
    %3173 = vmatprep.subr.mxu0 0.0
    %3174 = vmatpush1.msra.mxu0 0.0
    %3175 = vmatprep.subr.mxu0 0.0
    %3176 = vmatpush1.msra.mxu0 0.0
    %3177 = vmatprep.subr.mxu0 0.0
    %3178 = vmatpush1.msra.mxu0 0.0
    %3179 = vmatprep.subr.mxu0 0.0
    %3180 = vmatpush1.msra.mxu0 0.0
    %3181 = vmatprep.subr.mxu0 0.0
    %3182 = vmatpush1.msra.mxu0 0.0
    %3183 = vmatprep.subr.mxu0 0.0
    %3184 = vmatpush1.msra.mxu0 0.0
    %3185 = vmatprep.subr.mxu0 0.0
    %3186 = vmatpush1.msra.mxu0 0.0
    %3187 = vmatprep.subr.mxu0 0.0
    %3188 = vmatpush1.msra.mxu0 0.0
    %3189 = vmatprep.subr.mxu0 0.0
    %3190 = vmatpush1.msra.mxu0 0.0
    %3191 = vmatprep.subr.mxu0 0.0
    %3192 = vmatpush1.msra.mxu0 0.0
    %3193 = vmatprep.subr.mxu0 0.0
    %3194 = vmatpush1.msra.mxu0 0.0
    %3195 = vmatprep.mubr.f32.mxu0 0.0
    %3196 = vmatmul.mubr.f32.gmra.mrb[0].mxu0 %v3129
    %v3197 = vpop.f32.mrb[0].mxu0
    %v3198 = vadd.f32 0.0, %v3197
    %v3199 = vpop.f32.mrb[0].mxu0
    %3200 = vdwg.mxu0
    %v3202 = vrot.slane %v3198, 4
    %v3204 = vadd.f32 %v3125, %v3202
    %v3205 = vxor.u32 %v3204, 2147483648
    %v3206 = vmul.f32 %v3205, 1.442695
    %v3207 = vpow.pop %v3206
    %v3208 = vadd.f32 %v3207, 1.0
    %v3209 = vrcp.pop %v3208
    %v3210 = vmul.f32 1.0, %v3209
    %v3211 = vmul.f32 %v3210, 2.0
    %v3212 = vsub.f32 %v3211, 1.0
    %v3214 = vrot.slane %v2784, 6
    %v3216 = vmul.f32 %v3210, %v3214
    %3218 = vrot.lane.b32.xlu0 %v3212, 64
    %v3219 = vpop.permute.xlu0 %3218
    %v3221 = vmul.f32 %v3210, %v3219
    %3223 = vrot.lane.b32.xlu0 %v3221, 32
    %v3224 = vpop.permute.xlu0 %3223
    %v3226 = vadd.f32 %v3216, %v3224
    %v3227 = vtanh.pop %v3226
    %3229 = vrot.lane.b32.xlu0 %v3227, 64
    %v3230 = vpop.permute.xlu0 %3229
    %v3232 = vmul.f32 %v3210, %v3230
    %3234 = vrot.lane.b32.xlu0 %v3232, 32
    %v3235 = vpop.permute.xlu0 %3234
    %v3237 = vrot.slane %v2898, 4
    %3238 = vrot.lane.b32.xlu0 %v3237, 64
    %v3239 = vpop.permute.xlu0 %3238
    %v3241 = vsel %vm284, %v3235, %v3239
    %v3243 = vrot.slane %v3241, 4
    %v3244 = vsel %vm400, %v3243, 0
    %3246 = vmatprep.subr.mxu0 0.0
    %3247 = vmatpush1.msra.mxu0 %v274
    %3248 = vmatprep.subr.mxu0 0.0
    %3249 = vmatpush1.msra.mxu0 %v275
    %3250 = vmatprep.subr.mxu0 0.0
    %3251 = vmatpush1.msra.mxu0 %v276
    %3252 = vmatprep.subr.mxu0 0.0
    %3253 = vmatpush1.msra.mxu0 %v277
    %3254 = vmatprep.subr.mxu0 0.0
    %3255 = vmatpush1.msra.mxu0 %v278
    %3256 = vmatprep.subr.mxu0 0.0
    %3257 = vmatpush1.msra.mxu0 %v279
    %3258 = vmatprep.subr.mxu0 0.0
    %3259 = vmatpush1.msra.mxu0 %v280
    %3260 = vmatprep.subr.mxu0 0.0
    %3261 = vmatpush1.msra.mxu0 %v281
    %3262 = vmatprep.subr.mxu0 0.0
    %3263 = vmatpush1.msra.mxu0 0.0
    %3264 = vmatprep.subr.mxu0 0.0
    %3265 = vmatpush1.msra.mxu0 0.0
    %3266 = vmatprep.subr.mxu0 0.0
    %3267 = vmatpush1.msra.mxu0 0.0
    %3268 = vmatprep.subr.mxu0 0.0
    %3269 = vmatpush1.msra.mxu0 0.0
    %3270 = vmatprep.subr.mxu0 0.0
    %3271 = vmatpush1.msra.mxu0 0.0
    %3272 = vmatprep.subr.mxu0 0.0
    %3273 = vmatpush1.msra.mxu0 0.0
    %3274 = vmatprep.subr.mxu0 0.0
    %3275 = vmatpush1.msra.mxu0 0.0
    %3276 = vmatprep.subr.mxu0 0.0
    %3277 = vmatpush1.msra.mxu0 0.0
    %3278 = vmatprep.subr.mxu0 0.0
    %3279 = vmatpush1.msra.mxu0 0.0
    %3280 = vmatprep.subr.mxu0 0.0
    %3281 = vmatpush1.msra.mxu0 0.0
    %3282 = vmatprep.subr.mxu0 0.0
    %3283 = vmatpush1.msra.mxu0 0.0
    %3284 = vmatprep.subr.mxu0 0.0
    %3285 = vmatpush1.msra.mxu0 0.0
    %3286 = vmatprep.subr.mxu0 0.0
    %3287 = vmatpush1.msra.mxu0 0.0
    %3288 = vmatprep.subr.mxu0 0.0
    %3289 = vmatpush1.msra.mxu0 0.0
    %3290 = vmatprep.subr.mxu0 0.0
    %3291 = vmatpush1.msra.mxu0 0.0
    %3292 = vmatprep.subr.mxu0 0.0
    %3293 = vmatpush1.msra.mxu0 0.0
    %3294 = vmatprep.subr.mxu0 0.0
    %3295 = vmatpush1.msra.mxu0 0.0
    %3296 = vmatprep.subr.mxu0 0.0
    %3297 = vmatpush1.msra.mxu0 0.0
    %3298 = vmatprep.subr.mxu0 0.0
    %3299 = vmatpush1.msra.mxu0 0.0
    %3300 = vmatprep.subr.mxu0 0.0
    %3301 = vmatpush1.msra.mxu0 0.0
    %3302 = vmatprep.subr.mxu0 0.0
    %3303 = vmatpush1.msra.mxu0 0.0
    %3304 = vmatprep.subr.mxu0 0.0
    %3305 = vmatpush1.msra.mxu0 0.0
    %3306 = vmatprep.subr.mxu0 0.0
    %3307 = vmatpush1.msra.mxu0 0.0
    %3308 = vmatprep.subr.mxu0 0.0
    %3309 = vmatpush1.msra.mxu0 0.0
    %3310 = vmatprep.mubr.f32.mxu0 0.0
    %3311 = vmatmul.mubr.f32.gmra.mrb[0].mxu0 %v3244
    %v3312 = vpop.f32.mrb[0].mxu0
    %v3313 = vadd.f32 %v610, %v3312
    %v3314 = vpop.f32.mrb[0].mxu0
    %3315 = vdwg.mxu0
    %v3316 = vxor.u32 %v3313, 2147483648
    %v3317 = vmul.f32 %v3316, 1.442695
    %v3318 = vpow.pop %v3317
    %v3319 = vadd.f32 %v3318, 1.0
    %v3320 = vrcp.pop %v3319
    %v3321 = vmul.f32 1.0, %v3320
    %v3322 = vmul.f32 %v3321, 2.0
    %v3323 = vsub.f32 %v3322, 1.0
    %v3324 = vmul.f32 %v3321, %v2892
    %3326 = vrot.lane.b32.xlu0 %v3323, 64
    %v3327 = vpop.permute.xlu0 %3326
    %v3329 = vmul.f32 %v3321, %v3327
    %3331 = vrot.lane.b32.xlu0 %v3329, 32
    %v3332 = vpop.permute.xlu0 %3331
    %v3334 = vadd.f32 %v3324, %v3332
    %v3335 = vtanh.pop %v3334
    %3337 = vrot.lane.b32.xlu0 %v3335, 64
    %v3338 = vpop.permute.xlu0 %3337
    %v3340 = vmul.f32 %v3321, %v3338
    %3342 = vrot.lane.b32.xlu0 %v3340, 64
    %v3343 = vpop.permute.xlu0 %3342
    %3345 = vst.msk [vmem:[#allocation3 + $0xc] sm:$0x3] %vm714, %v3343
    %v3346 = vld [vmem:[#allocation2] sm:$0x3]
    %v3347 = vrot.slane %v3011, 2
    %3348 = vrot.lane.b32.xlu0 %v3347, 32
    %v3349 = vpop.permute.xlu0 %3348
    %v3350 = vsel %vm284, %v3349, 0
    %3352 = vmatprep.subr.mxu0 0.0
    %3353 = vmatpush1.msra.mxu0 %v257
    %3354 = vmatprep.subr.mxu0 0.0
    %3355 = vmatpush1.msra.mxu0 %v258
    %3356 = vmatprep.subr.mxu0 0.0
    %3357 = vmatpush1.msra.mxu0 %v259
    %3358 = vmatprep.subr.mxu0 0.0
    %3359 = vmatpush1.msra.mxu0 %v260
    %3360 = vmatprep.subr.mxu0 0.0
    %3361 = vmatpush1.msra.mxu0 0.0
    %3362 = vmatprep.subr.mxu0 0.0
    %3363 = vmatpush1.msra.mxu0 0.0
    %3364 = vmatprep.subr.mxu0 0.0
    %3365 = vmatpush1.msra.mxu0 0.0
    %3366 = vmatprep.subr.mxu0 0.0
    %3367 = vmatpush1.msra.mxu0 0.0
    %3368 = vmatprep.subr.mxu0 0.0
    %3369 = vmatpush1.msra.mxu0 0.0
    %3370 = vmatprep.subr.mxu0 0.0
    %3371 = vmatpush1.msra.mxu0 0.0
    %3372 = vmatprep.subr.mxu0 0.0
    %3373 = vmatpush1.msra.mxu0 0.0
    %3374 = vmatprep.subr.mxu0 0.0
    %3375 = vmatpush1.msra.mxu0 0.0
    %3376 = vmatprep.subr.mxu0 0.0
    %3377 = vmatpush1.msra.mxu0 0.0
    %3378 = vmatprep.subr.mxu0 0.0
    %3379 = vmatpush1.msra.mxu0 0.0
    %3380 = vmatprep.subr.mxu0 0.0
    %3381 = vmatpush1.msra.mxu0 0.0
    %3382 = vmatprep.subr.mxu0 0.0
    %3383 = vmatpush1.msra.mxu0 0.0
    %3384 = vmatprep.subr.mxu0 0.0
    %3385 = vmatpush1.msra.mxu0 0.0
    %3386 = vmatprep.subr.mxu0 0.0
    %3387 = vmatpush1.msra.mxu0 0.0
    %3388 = vmatprep.subr.mxu0 0.0
    %3389 = vmatpush1.msra.mxu0 0.0
    %3390 = vmatprep.subr.mxu0 0.0
    %3391 = vmatpush1.msra.mxu0 0.0
    %3392 = vmatprep.subr.mxu0 0.0
    %3393 = vmatpush1.msra.mxu0 0.0
    %3394 = vmatprep.subr.mxu0 0.0
    %3395 = vmatpush1.msra.mxu0 0.0
    %3396 = vmatprep.subr.mxu0 0.0
    %3397 = vmatpush1.msra.mxu0 0.0
    %3398 = vmatprep.subr.mxu0 0.0
    %3399 = vmatpush1.msra.mxu0 0.0
    %3400 = vmatprep.subr.mxu0 0.0
    %3401 = vmatpush1.msra.mxu0 0.0
    %3402 = vmatprep.subr.mxu0 0.0
    %3403 = vmatpush1.msra.mxu0 0.0
    %3404 = vmatprep.subr.mxu0 0.0
    %3405 = vmatpush1.msra.mxu0 0.0
    %3406 = vmatprep.subr.mxu0 0.0
    %3407 = vmatpush1.msra.mxu0 0.0
    %3408 = vmatprep.subr.mxu0 0.0
    %3409 = vmatpush1.msra.mxu0 0.0
    %3410 = vmatprep.subr.mxu0 0.0
    %3411 = vmatpush1.msra.mxu0 0.0
    %3412 = vmatprep.subr.mxu0 0.0
    %3413 = vmatpush1.msra.mxu0 0.0
    %3414 = vmatprep.subr.mxu0 0.0
    %3415 = vmatpush1.msra.mxu0 0.0
    %3416 = vmatprep.mubr.f32.mxu0 0.0
    %3417 = vmatmul.mubr.f32.gmra.mrb[0].mxu0 %v3350
    %v3418 = vpop.f32.mrb[0].mxu0
    %v3419 = vadd.f32 0.0, %v3418
    %v3420 = vpop.f32.mrb[0].mxu0
    %3421 = vdwg.mxu0
    %v3422 = vadd.f32 %v3346, %v3419
    %v3423 = vxor.u32 %v3422, 2147483648
    %v3424 = vmul.f32 %v3423, 1.442695
    %v3425 = vpow.pop %v3424
    %v3426 = vadd.f32 %v3425, 1.0
    %v3427 = vrcp.pop %v3426
    %v3428 = vmul.f32 1.0, %v3427
    %v3429 = vmul.f32 %v3428, 2.0
    %v3430 = vsub.f32 %v3429, 1.0
    %v3432 = vrot.slane %v3005, 2
    %v3434 = vmul.f32 %v3428, %v3432
    %3436 = vrot.lane.b32.xlu0 %v3430, 64
    %v3437 = vpop.permute.xlu0 %3436
    %v3439 = vmul.f32 %v3428, %v3437
    %3441 = vrot.lane.b32.xlu0 %v3439, 32
    %v3442 = vpop.permute.xlu0 %3441
    %v3444 = vadd.f32 %v3434, %v3442
    %v3445 = vtanh.pop %v3444
    %3447 = vrot.lane.b32.xlu0 %v3445, 64
    %v3448 = vpop.permute.xlu0 %3447
    %v3450 = vmul.f32 %v3428, %v3448
    %3452 = vrot.lane.b32.xlu0 %v3450, 32
    %v3453 = vpop.permute.xlu0 %3452
    %3455 = vrot.lane.b32.xlu0 %v3119, 64
    %v3456 = vpop.permute.xlu0 %3455
    %v3458 = vsel %vm284, %v3453, %v3456
    %v3460 = vsel %vm400, %v3458, 0
    %3462 = vmatprep.subr.mxu0 0.0
    %3463 = vmatpush1.msra.mxu0 %v261
    %3464 = vmatprep.subr.mxu0 0.0
    %3465 = vmatpush1.msra.mxu0 %v262
    %3466 = vmatprep.subr.mxu0 0.0
    %3467 = vmatpush1.msra.mxu0 %v263
    %3468 = vmatprep.subr.mxu0 0.0
    %3469 = vmatpush1.msra.mxu0 %v264
    %3470 = vmatprep.subr.mxu0 0.0
    %3471 = vmatpush1.msra.mxu0 %v265
    %3472 = vmatprep.subr.mxu0 0.0
    %3473 = vmatpush1.msra.mxu0 %v266
    %3474 = vmatprep.subr.mxu0 0.0
    %3475 = vmatpush1.msra.mxu0 %v267
    %3476 = vmatprep.subr.mxu0 0.0
    %3477 = vmatpush1.msra.mxu0 %v268
    %3478 = vmatprep.subr.mxu0 0.0
    %3479 = vmatpush1.msra.mxu0 0.0
    %3480 = vmatprep.subr.mxu0 0.0
    %3481 = vmatpush1.msra.mxu0 0.0
    %3482 = vmatprep.subr.mxu0 0.0
    %3483 = vmatpush1.msra.mxu0 0.0
    %3484 = vmatprep.subr.mxu0 0.0
    %3485 = vmatpush1.msra.mxu0 0.0
    %3486 = vmatprep.subr.mxu0 0.0
    %3487 = vmatpush1.msra.mxu0 0.0
    %3488 = vmatprep.subr.mxu0 0.0
    %3489 = vmatpush1.msra.mxu0 0.0
    %3490 = vmatprep.subr.mxu0 0.0
    %3491 = vmatpush1.msra.mxu0 0.0
    %3492 = vmatprep.subr.mxu0 0.0
    %3493 = vmatpush1.msra.mxu0 0.0
    %3494 = vmatprep.subr.mxu0 0.0
    %3495 = vmatpush1.msra.mxu0 0.0
    %3496 = vmatprep.subr.mxu0 0.0
    %3497 = vmatpush1.msra.mxu0 0.0
    %3498 = vmatprep.subr.mxu0 0.0
    %3499 = vmatpush1.msra.mxu0 0.0
    %3500 = vmatprep.subr.mxu0 0.0
    %3501 = vmatpush1.msra.mxu0 0.0
    %3502 = vmatprep.subr.mxu0 0.0
    %3503 = vmatpush1.msra.mxu0 0.0
    %3504 = vmatprep.subr.mxu0 0.0
    %3505 = vmatpush1.msra.mxu0 0.0
    %3506 = vmatprep.subr.mxu0 0.0
    %3507 = vmatpush1.msra.mxu0 0.0
    %3508 = vmatprep.subr.mxu0 0.0
    %3509 = vmatpush1.msra.mxu0 0.0
    %3510 = vmatprep.subr.mxu0 0.0
    %3511 = vmatpush1.msra.mxu0 0.0
    %3512 = vmatprep.subr.mxu0 0.0
    %3513 = vmatpush1.msra.mxu0 0.0
    %3514 = vmatprep.subr.mxu0 0.0
    %3515 = vmatpush1.msra.mxu0 0.0
    %3516 = vmatprep.subr.mxu0 0.0
    %3517 = vmatpush1.msra.mxu0 0.0
    %3518 = vmatprep.subr.mxu0 0.0
    %3519 = vmatpush1.msra.mxu0 0.0
    %3520 = vmatprep.subr.mxu0 0.0
    %3521 = vmatpush1.msra.mxu0 0.0
    %3522 = vmatprep.subr.mxu0 0.0
    %3523 = vmatpush1.msra.mxu0 0.0
    %3524 = vmatprep.subr.mxu0 0.0
    %3525 = vmatpush1.msra.mxu0 0.0
    %3526 = vmatprep.mubr.f32.mxu0 0.0
    %3527 = vmatmul.mubr.f32.gmra.mrb[0].mxu0 %v3460
    %v3528 = vpop.f32.mrb[0].mxu0
    %v3529 = vadd.f32 %v396, %v3528
    %v3530 = vpop.f32.mrb[0].mxu0
    %3531 = vdwg.mxu0
    %v3532 = vxor.u32 %v3529, 2147483648
    %v3533 = vmul.f32 %v3532, 1.442695
    %v3534 = vpow.pop %v3533
    %v3535 = vadd.f32 %v3534, 1.0
    %v3536 = vrcp.pop %v3535
    %v3537 = vmul.f32 1.0, %v3536
    %v3538 = vmul.f32 %v3537, 2.0
    %v3539 = vsub.f32 %v3538, 1.0
    %v3540 = vmul.f32 %v3537, %v3113
    %3542 = vrot.lane.b32.xlu0 %v3539, 64
    %v3543 = vpop.permute.xlu0 %3542
    %v3545 = vmul.f32 %v3537, %v3543
    %3547 = vrot.lane.b32.xlu0 %v3545, 32
    %v3548 = vpop.permute.xlu0 %3547
    %v3550 = vadd.f32 %v3540, %v3548
    %v3551 = vtanh.pop %v3550
    %3553 = vrot.lane.b32.xlu0 %v3551, 64
    %v3554 = vpop.permute.xlu0 %3553
    %v3556 = vmul.f32 %v3537, %v3554
    %3558 = vrot.lane.b32.xlu0 %v3556, 32
    %v3559 = vpop.permute.xlu0 %3558
    %3561 = vst.msk [vmem:[#allocation3] sm:$0x3] %vm502, %v3559
    %v3562 = vld [vmem:[#allocation2 + $0x18] sm:$0xc0]
    %v3563 = vrot.slane %v3232, 4
    %3564 = vrot.lane.b32.xlu0 %v3563, 32
    %v3565 = vpop.permute.xlu0 %3564
    %v3566 = vsel %vm284, %v3565, 0
    %3568 = vmatprep.subr.mxu0 0.0
    %3569 = vmatpush1.msra.mxu0 %v270
    %3570 = vmatprep.subr.mxu0 0.0
    %3571 = vmatpush1.msra.mxu0 %v271
    %3572 = vmatprep.subr.mxu0 0.0
    %3573 = vmatpush1.msra.mxu0 %v272
    %3574 = vmatprep.subr.mxu0 0.0
    %3575 = vmatpush1.msra.mxu0 %v273
    %3576 = vmatprep.subr.mxu0 0.0
    %3577 = vmatpush1.msra.mxu0 0.0
    %3578 = vmatprep.subr.mxu0 0.0
    %3579 = vmatpush1.msra.mxu0 0.0
    %3580 = vmatprep.subr.mxu0 0.0
    %3581 = vmatpush1.msra.mxu0 0.0
    %3582 = vmatprep.subr.mxu0 0.0
    %3583 = vmatpush1.msra.mxu0 0.0
    %3584 = vmatprep.subr.mxu0 0.0
    %3585 = vmatpush1.msra.mxu0 0.0
    %3586 = vmatprep.subr.mxu0 0.0
    %3587 = vmatpush1.msra.mxu0 0.0
    %3588 = vmatprep.subr.mxu0 0.0
    %3589 = vmatpush1.msra.mxu0 0.0
    %3590 = vmatprep.subr.mxu0 0.0
    %3591 = vmatpush1.msra.mxu0 0.0
    %3592 = vmatprep.subr.mxu0 0.0
    %3593 = vmatpush1.msra.mxu0 0.0
    %3594 = vmatprep.subr.mxu0 0.0
    %3595 = vmatpush1.msra.mxu0 0.0
    %3596 = vmatprep.subr.mxu0 0.0
    %3597 = vmatpush1.msra.mxu0 0.0
    %3598 = vmatprep.subr.mxu0 0.0
    %3599 = vmatpush1.msra.mxu0 0.0
    %3600 = vmatprep.subr.mxu0 0.0
    %3601 = vmatpush1.msra.mxu0 0.0
    %3602 = vmatprep.subr.mxu0 0.0
    %3603 = vmatpush1.msra.mxu0 0.0
    %3604 = vmatprep.subr.mxu0 0.0
    %3605 = vmatpush1.msra.mxu0 0.0
    %3606 = vmatprep.subr.mxu0 0.0
    %3607 = vmatpush1.msra.mxu0 0.0
    %3608 = vmatprep.subr.mxu0 0.0
    %3609 = vmatpush1.msra.mxu0 0.0
    %3610 = vmatprep.subr.mxu0 0.0
    %3611 = vmatpush1.msra.mxu0 0.0
    %3612 = vmatprep.subr.mxu0 0.0
    %3613 = vmatpush1.msra.mxu0 0.0
    %3614 = vmatprep.subr.mxu0 0.0
    %3615 = vmatpush1.msra.mxu0 0.0
    %3616 = vmatprep.subr.mxu0 0.0
    %3617 = vmatpush1.msra.mxu0 0.0
    %3618 = vmatprep.subr.mxu0 0.0
    %3619 = vmatpush1.msra.mxu0 0.0
    %3620 = vmatprep.subr.mxu0 0.0
    %3621 = vmatpush1.msra.mxu0 0.0
    %3622 = vmatprep.subr.mxu0 0.0
    %3623 = vmatpush1.msra.mxu0 0.0
    %3624 = vmatprep.subr.mxu0 0.0
    %3625 = vmatpush1.msra.mxu0 0.0
    %3626 = vmatprep.subr.mxu0 0.0
    %3627 = vmatpush1.msra.mxu0 0.0
    %3628 = vmatprep.subr.mxu0 0.0
    %3629 = vmatpush1.msra.mxu0 0.0
    %3630 = vmatprep.subr.mxu0 0.0
    %3631 = vmatpush1.msra.mxu0 0.0
    %3632 = vmatprep.mubr.f32.mxu0 0.0
    %3633 = vmatmul.mubr.f32.gmra.mrb[0].mxu0 %v3566
    %v3634 = vpop.f32.mrb[0].mxu0
    %v3635 = vadd.f32 0.0, %v3634
    %v3636 = vpop.f32.mrb[0].mxu0
    %3637 = vdwg.mxu0
    %v3639 = vrot.slane %v3635, 2
    %v3641 = vadd.f32 %v3562, %v3639
    %v3642 = vxor.u32 %v3641, 2147483648
    %v3643 = vmul.f32 %v3642, 1.442695
    %v3644 = vpow.pop %v3643
    %v3645 = vadd.f32 %v3644, 1.0
    %v3646 = vrcp.pop %v3645
    %v3647 = vmul.f32 1.0, %v3646
    %v3648 = vmul.f32 %v3647, 2.0
    %v3649 = vsub.f32 %v3648, 1.0
    %v3651 = vrot.slane %v3226, 6
    %v3653 = vmul.f32 %v3647, %v3651
    %3655 = vrot.lane.b32.xlu0 %v3649, 64
    %v3656 = vpop.permute.xlu0 %3655
    %v3658 = vmul.f32 %v3647, %v3656
    %3660 = vrot.lane.b32.xlu0 %v3658, 32
    %v3661 = vpop.permute.xlu0 %3660
    %v3663 = vadd.f32 %v3653, %v3661
    %v3664 = vtanh.pop %v3663
    %3666 = vrot.lane.b32.xlu0 %v3664, 64
    %v3667 = vpop.permute.xlu0 %3666
    %v3669 = vmul.f32 %v3647, %v3667
    %3671 = vrot.lane.b32.xlu0 %v3669, 32
    %v3672 = vpop.permute.xlu0 %3671
    %v3674 = vrot.slane %v3340, 2
    %3675 = vrot.lane.b32.xlu0 %v3674, 64
    %v3676 = vpop.permute.xlu0 %3675
    %v3678 = vsel %vm284, %v3672, %v3676
    %v3680 = vrot.slane %v3678, 6
    %v3681 = vsel %vm400, %v3680, 0
    %3683 = vmatprep.subr.mxu0 0.0
    %3684 = vmatpush1.msra.mxu0 %v274
    %3685 = vmatprep.subr.mxu0 0.0
    %3686 = vmatpush1.msra.mxu0 %v275
    %3687 = vmatprep.subr.mxu0 0.0
    %3688 = vmatpush1.msra.mxu0 %v276
    %3689 = vmatprep.subr.mxu0 0.0
    %3690 = vmatpush1.msra.mxu0 %v277
    %3691 = vmatprep.subr.mxu0 0.0
    %3692 = vmatpush1.msra.mxu0 %v278
    %3693 = vmatprep.subr.mxu0 0.0
    %3694 = vmatpush1.msra.mxu0 %v279
    %3695 = vmatprep.subr.mxu0 0.0
    %3696 = vmatpush1.msra.mxu0 %v280
    %3697 = vmatprep.subr.mxu0 0.0
    %3698 = vmatpush1.msra.mxu0 %v281
    %3699 = vmatprep.subr.mxu0 0.0
    %3700 = vmatpush1.msra.mxu0 0.0
    %3701 = vmatprep.subr.mxu0 0.0
    %3702 = vmatpush1.msra.mxu0 0.0
    %3703 = vmatprep.subr.mxu0 0.0
    %3704 = vmatpush1.msra.mxu0 0.0
    %3705 = vmatprep.subr.mxu0 0.0
    %3706 = vmatpush1.msra.mxu0 0.0
    %3707 = vmatprep.subr.mxu0 0.0
    %3708 = vmatpush1.msra.mxu0 0.0
    %3709 = vmatprep.subr.mxu0 0.0
    %3710 = vmatpush1.msra.mxu0 0.0
    %3711 = vmatprep.subr.mxu0 0.0
    %3712 = vmatpush1.msra.mxu0 0.0
    %3713 = vmatprep.subr.mxu0 0.0
    %3714 = vmatpush1.msra.mxu0 0.0
    %3715 = vmatprep.subr.mxu0 0.0
    %3716 = vmatpush1.msra.mxu0 0.0
    %3717 = vmatprep.subr.mxu0 0.0
    %3718 = vmatpush1.msra.mxu0 0.0
    %3719 = vmatprep.subr.mxu0 0.0
    %3720 = vmatpush1.msra.mxu0 0.0
    %3721 = vmatprep.subr.mxu0 0.0
    %3722 = vmatpush1.msra.mxu0 0.0
    %3723 = vmatprep.subr.mxu0 0.0
    %3724 = vmatpush1.msra.mxu0 0.0
    %3725 = vmatprep.subr.mxu0 0.0
    %3726 = vmatpush1.msra.mxu0 0.0
    %3727 = vmatprep.subr.mxu0 0.0
    %3728 = vmatpush1.msra.mxu0 0.0
    %3729 = vmatprep.subr.mxu0 0.0
    %3730 = vmatpush1.msra.mxu0 0.0
    %3731 = vmatprep.subr.mxu0 0.0
    %3732 = vmatpush1.msra.mxu0 0.0
    %3733 = vmatprep.subr.mxu0 0.0
    %3734 = vmatpush1.msra.mxu0 0.0
    %3735 = vmatprep.subr.mxu0 0.0
    %3736 = vmatpush1.msra.mxu0 0.0
    %3737 = vmatprep.subr.mxu0 0.0
    %3738 = vmatpush1.msra.mxu0 0.0
    %3739 = vmatprep.subr.mxu0 0.0
    %3740 = vmatpush1.msra.mxu0 0.0
    %3741 = vmatprep.subr.mxu0 0.0
    %3742 = vmatpush1.msra.mxu0 0.0
    %3743 = vmatprep.subr.mxu0 0.0
    %3744 = vmatpush1.msra.mxu0 0.0
    %3745 = vmatprep.subr.mxu0 0.0
    %3746 = vmatpush1.msra.mxu0 0.0
    %3747 = vmatprep.mubr.f32.mxu0 0.0
    %3748 = vmatmul.mubr.f32.gmra.mrb[0].mxu0 %v3681
    %v3749 = vpop.f32.mrb[0].mxu0
    %v3750 = vadd.f32 %v610, %v3749
    %v3751 = vpop.f32.mrb[0].mxu0
    %3752 = vdwg.mxu0
    %v3753 = vxor.u32 %v3750, 2147483648
    %v3754 = vmul.f32 %v3753, 1.442695
    %v3755 = vpow.pop %v3754
    %v3756 = vadd.f32 %v3755, 1.0
    %v3757 = vrcp.pop %v3756
    %v3758 = vmul.f32 1.0, %v3757
    %v3759 = vmul.f32 %v3758, 2.0
    %v3760 = vsub.f32 %v3759, 1.0
    %v3761 = vmul.f32 %v3758, %v3334
    %3763 = vrot.lane.b32.xlu0 %v3760, 64
    %v3764 = vpop.permute.xlu0 %3763
    %v3766 = vmul.f32 %v3758, %v3764
    %3768 = vrot.lane.b32.xlu0 %v3766, 32
    %v3769 = vpop.permute.xlu0 %3768
    %v3771 = vadd.f32 %v3761, %v3769
    %v3772 = vtanh.pop %v3771
    %3774 = vrot.lane.b32.xlu0 %v3772, 64
    %v3775 = vpop.permute.xlu0 %3774
    %v3777 = vmul.f32 %v3758, %v3775
    %3779 = vrot.lane.b32.xlu0 %v3777, 64
    %v3780 = vpop.permute.xlu0 %3779
    %3782 = vst.msk [vmem:[#allocation3 + $0xe] sm:$0x3] %vm714, %v3780
    %v3783 = vld [vmem:[#allocation3] sm:$0xff]
    %v3784 = vld [vmem:[#allocation3 + $0x8] sm:$0xff]
    %v3785 = vld [vmem:[%s10] sm:$0xff]
    %v3786 = vld [vmem:[%s10 + $0x8] sm:$0xff]
    %v3787 = vld [vmem:[%s10 + $0x10] sm:$0xff]
    %v3788 = vld [vmem:[%s10 + $0x18] sm:$0xff]
    %v3789 = vld [vmem:[%s10 + $0x20] sm:$0xff]
    %v3790 = vld [vmem:[%s10 + $0x28] sm:$0xff]
    %v3791 = vld [vmem:[%s10 + $0x30] sm:$0xff]
    %v3792 = vld [vmem:[%s10 + $0x38] sm:$0xff]
    %v3793 = vld [vmem:[%s11] sm:$0x1]
    %v3795 = vlaneseq
    %v3796 = vshrl.u32 %v3795, 7
    %v3797 = vsub.s32 0, %v3796
    %v3798 = vrot.slane %v3793, %v3797
    %v3801 = vsel %vm400, %v3783, 0
    %v3804 = vsel %vm400, %v3784, 0
    %3806 = vmatprep.subr.mxu0 0.0
    %3807 = vmatpush1.msra.mxu0 %v3785
    %3808 = vmatprep.subr.mxu0 0.0
    %3809 = vmatpush1.msra.mxu0 %v3786
    %3810 = vmatprep.subr.mxu0 0.0
    %3811 = vmatpush1.msra.mxu0 %v3787
    %3812 = vmatprep.subr.mxu0 0.0
    %3813 = vmatpush1.msra.mxu0 %v3788
    %3814 = vmatprep.subr.mxu0 0.0
    %3815 = vmatpush1.msra.mxu0 %v3789
    %3816 = vmatprep.subr.mxu0 0.0
    %3817 = vmatpush1.msra.mxu0 %v3790
    %3818 = vmatprep.subr.mxu0 0.0
    %3819 = vmatpush1.msra.mxu0 %v3791
    %3820 = vmatprep.subr.mxu0 0.0
    %3821 = vmatpush1.msra.mxu0 %v3792
    %3822 = vmatprep.subr.mxu0 0.0
    %3823 = vmatpush1.msra.mxu0 0.0
    %3824 = vmatprep.subr.mxu0 0.0
    %3825 = vmatpush1.msra.mxu0 0.0
    %3826 = vmatprep.subr.mxu0 0.0
    %3827 = vmatpush1.msra.mxu0 0.0
    %3828 = vmatprep.subr.mxu0 0.0
    %3829 = vmatpush1.msra.mxu0 0.0
    %3830 = vmatprep.subr.mxu0 0.0
    %3831 = vmatpush1.msra.mxu0 0.0
    %3832 = vmatprep.subr.mxu0 0.0
    %3833 = vmatpush1.msra.mxu0 0.0
    %3834 = vmatprep.subr.mxu0 0.0
    %3835 = vmatpush1.msra.mxu0 0.0
    %3836 = vmatprep.subr.mxu0 0.0
    %3837 = vmatpush1.msra.mxu0 0.0
    %3838 = vmatprep.subr.mxu0 0.0
    %3839 = vmatpush1.msra.mxu0 0.0
    %3840 = vmatprep.subr.mxu0 0.0
    %3841 = vmatpush1.msra.mxu0 0.0
    %3842 = vmatprep.subr.mxu0 0.0
    %3843 = vmatpush1.msra.mxu0 0.0
    %3844 = vmatprep.subr.mxu0 0.0
    %3845 = vmatpush1.msra.mxu0 0.0
    %3846 = vmatprep.subr.mxu0 0.0
    %3847 = vmatpush1.msra.mxu0 0.0
    %3848 = vmatprep.subr.mxu0 0.0
    %3849 = vmatpush1.msra.mxu0 0.0
    %3850 = vmatprep.subr.mxu0 0.0
    %3851 = vmatpush1.msra.mxu0 0.0
    %3852 = vmatprep.subr.mxu0 0.0
    %3853 = vmatpush1.msra.mxu0 0.0
    %3854 = vmatprep.subr.mxu0 0.0
    %3855 = vmatpush1.msra.mxu0 0.0
    %3856 = vmatprep.subr.mxu0 0.0
    %3857 = vmatpush1.msra.mxu0 0.0
    %3858 = vmatprep.subr.mxu0 0.0
    %3859 = vmatpush1.msra.mxu0 0.0
    %3860 = vmatprep.subr.mxu0 0.0
    %3861 = vmatpush1.msra.mxu0 0.0
    %3862 = vmatprep.subr.mxu0 0.0
    %3863 = vmatpush1.msra.mxu0 0.0
    %3864 = vmatprep.subr.mxu0 0.0
    %3865 = vmatpush1.msra.mxu0 0.0
    %3866 = vmatprep.subr.mxu0 0.0
    %3867 = vmatpush1.msra.mxu0 0.0
    %3868 = vmatprep.subr.mxu0 0.0
    %3869 = vmatpush1.msra.mxu0 0.0
    %3870 = vmatprep.mubr.f32.mxu0 0.0
    %3871 = vmatmul.mubr.f32.gmra.mrb[0].mxu0 %v3801
    %v3872 = vpop.f32.mrb[0].mxu0
    %v3873 = vadd.f32 %v3798, %v3872
    %v3874 = vpop.f32.mrb[0].mxu0
    %3875 = vmatprep.mubr.f32.mxu0 0.0
    %3876 = vmatmul.mubr.f32.gmra.mrb[0].mxu0 %v3804
    %v3877 = vpop.f32.mrb[0].mxu0
    %v3878 = vadd.f32 %v3798, %v3877
    %v3879 = vpop.f32.mrb[0].mxu0
    %3880 = vdwg.mxu0
    %v3881 = vxor.u32 %v3873, 2147483648
    %v3882 = vxor.u32 %v3878, 2147483648
    %v3883 = vmul.f32 %v3881, 1.442695
    %v3884 = vpow.pop %v3883
    %v3885 = vmul.f32 %v3882, 1.442695
    %v3886 = vpow.pop %v3885
    %v3887 = vadd.f32 %v3884, 1.0
    %v3888 = vadd.f32 %v3886, 1.0
    %v3889 = vrcp.pop %v3887
    %v3890 = vmul.f32 1.0, %v3889
    %v3891 = vrcp.pop %v3888
    %v3892 = vmul.f32 1.0, %v3891
    %3893 = vst.msk [vmem:[#allocation16] sm:$0xff] %vm162, %v3890
    %3894 = vst.msk [vmem:[#allocation16 + $0x8] sm:$0xff] %vm162, %v3892
    // Predicated region
    $region78: #{tpu_custom_call.1} parent=1 // pred_check
      _
    $region79: #{tpu_custom_call.1} parent=1 // pred_check_branch
      %3896 = sbr.rel (0) target = $region81
    $region80: #{tpu_custom_call.1} parent=1 // pred_region
      %s3898 = ssub.s32 256, 256
      %3899 = vsyncadd [#allocation6], %s3898
      %s3900 = sshll.u32 [#allocation16], 4
      %s3901 = int_to_ptr.vmem [resolvable:$true] %s3900
      %3906 = dma.vmem_to_hbm [thread:$0]  %s3901, 256, %s12, [#allocation6], 128, 128, 8
    $region81: #{tpu_custom_call.1} parent=1 // pred_fallthru
      _
    // Predicated region
    $region82: #{tpu_custom_call.1} parent=1 // pred_check
      _
    $region83: #{tpu_custom_call.1} parent=1 // pred_check_branch
      %3908 = sbr.rel (0) target = $region85
    $region84: #{tpu_custom_call.1} parent=1 // pred_region
      %3909 = dma.done [#allocation6], 256
    $region85: #{tpu_custom_call.1} parent=1 // pred_fallthru
      _
    %3910 = vsyncpa [#allocation5], 1
    %3911 = vsyncpa [#allocation8], 1
    %3912 = vsyncpa [#allocation11], 1
    %3913 = vsyncpa [#allocation14], 1
    %3914 = vsyncpa [#allocation6], 1

</llo_original>
